<compile_context>
chip_gen: v6e
topology: v6e:2x2x1
jax: 0.10.0
libtpu: 0.0.40
codegen_flags: <defaults>
</compile_context>

<pallas_src>
import functools

import jax
import jax.numpy as jnp
from jax.experimental import pallas as pl
from jax.experimental.pallas import tpu as pltpu


def _round_up(x, m):
    return ((x + m - 1) // m) * m


def gru_fc_kernel(ids_ref, emb_ref, wih_ref, whh_ref, bih_ref, bhh_ref,
                  fcw_ref, fcb_ref, out_ref, x_buf, gi_ref):
    # ids_ref:  (T, Bp) int32, SMEM (time-major, batch padded with id 0)
    # emb_ref:  (V, 1, Hp) bf16 embedding table, lane-padded
    # wih_ref/whh_ref: (Hp, 3*Hp) bf16, per-gate 128-lane-aligned blocks [r|z|n]
    # bih_ref/bhh_ref: (1, 3*Hp) f32
    # fcw_ref:  (1, Hp) f32, fcb_ref: (1, 1) f32
    # out_ref:  (Bp, 128) f32 lane-dense output (logit broadcast across lanes)
    # x_buf:    (T*Bp, Hp) bf16 scratch  (gathered embeddings, time-major)
    # gi_ref:   (T, Bp, 3*Hp) bf16 scratch (hoisted input projection)
    T, Bp, H3 = gi_ref.shape
    Hp = H3 // 3

    # ---- in-kernel embedding gather: SMEM ids -> VMEM rows ----
    # Leading-dim dynamic index on the (V, 1, Hp) table: pure address math,
    # no sublane shuffles. (Production: keep the table in HBM + DMA gather.)
    for t in range(T):
        for b in range(Bp):
            tok = ids_ref[t, b]
            x_buf[pl.ds(t * Bp + b, 1), :] = emb_ref[tok]

    # ---- hoisted input projection: one MXU pass over all timesteps ----
    gi_all = jnp.dot(x_buf[...], wih_ref[...],
                     preferred_element_type=jnp.float32) + bih_ref[...]
    gi_ref[...] = gi_all.astype(jnp.bfloat16).reshape(T, Bp, H3)

    # ---- serial GRU recurrence (fully unrolled, f32 gate math) ----
    def step(t, h):
        gi = gi_ref[t].astype(jnp.float32)                        # (Bp, 3Hp)
        # Re-read whh/bhh per step: lets the compiler re-load from VMEM
        # (3 vld slots) instead of pinning ~24 bf16 vregs across the unroll.
        gh = jnp.dot(h.astype(jnp.bfloat16), whh_ref[...],
                     preferred_element_type=jnp.float32) + bhh_ref[...]
        # Gate slices are 128-lane aligned -> no intra-vreg lane selects.
        r = jax.nn.sigmoid(gi[:, 0:Hp] + gh[:, 0:Hp])
        z = jax.nn.sigmoid(gi[:, Hp:2 * Hp] + gh[:, Hp:2 * Hp])
        n = jnp.tanh(gi[:, 2 * Hp:3 * Hp] + r * gh[:, 2 * Hp:3 * Hp])
        return n + z * (h - n)            # == (1-z)*n + z*h, one fewer mul

    h_final = jax.lax.fori_loop(0, T, step,
                                jnp.zeros((Bp, Hp), jnp.float32),
                                unroll=True)

    # ---- fc head: VPU multiply + lane reduction (skip the N=1 MXU pass) ----
    logit = jnp.sum(h_final * fcw_ref[...], axis=-1, keepdims=True) + fcb_ref[...]
    out_ref[...] = jnp.broadcast_to(logit, out_ref.shape)


def prepare_params(emb_matrix, w_ih, w_hh, b_ih, b_hh, fc_w, fc_b):
    """One-time (setup-time) padding / casting of the frozen parameters."""
    V, H = emb_matrix.shape
    Hp = _round_up(H, 128)    # lane-pad hidden dim

    # Embedding table as (V, 1, Hp) bf16 so the in-kernel gather is a cheap
    # leading-dim dynamic index.
    emb_tbl = jnp.zeros((V, 1, Hp), jnp.float32).at[:, 0, :H].set(emb_matrix)
    emb_tbl = emb_tbl.astype(jnp.bfloat16)

    # Per-gate 128-lane-aligned weight/bias padding (PyTorch gate order [r,z,n]).
    def pad_gate_w(w):                    # w: (3H, H) PyTorch layout
        wp = jnp.zeros((Hp, 3 * Hp), jnp.float32)
        for g in range(3):
            blk = w[g * H:(g + 1) * H, :].T                       # (H_in, H_out)
            wp = wp.at[:H, g * Hp:g * Hp + H].set(blk)
        return wp.astype(jnp.bfloat16)

    def pad_gate_b(b):                    # b: (3H,)
        bp = jnp.zeros((1, 3 * Hp), jnp.float32)
        for g in range(3):
            bp = bp.at[0, g * Hp:g * Hp + H].set(b[g * H:(g + 1) * H])
        return bp

    params = dict(
        emb_tbl=emb_tbl,
        wih=pad_gate_w(w_ih),
        whh=pad_gate_w(w_hh),
        bih=pad_gate_b(b_ih),
        bhh=pad_gate_b(b_hh),
        fcw=jnp.zeros((1, Hp), jnp.float32).at[0, :H].set(fc_w[0]),
        fcb=fc_b.reshape(1, 1).astype(jnp.float32),
    )
    return jax.tree_util.tree_map(jax.block_until_ready, params)


@jax.jit
def net_forward(x_ids, params):
    """Replicates Net.forward:
        emb = embedding(x); out, hidden = gru(emb, zeros); out = fc(hidden)
    Returns shape (num_layers=1, B, 1), float32.
    """
    B, T = x_ids.shape
    Bp = _round_up(B, 8)                                 # sublane-pad batch
    Hp = params["emb_tbl"].shape[-1]

    # Time-major ids, batch padded with token 0 (padded rows are sliced away).
    ids_tm = jnp.pad(x_ids.T.astype(jnp.int32), ((0, 0), (0, Bp - B)))

    out_pad = pl.pallas_call(
        gru_fc_kernel,
        out_shape=jax.ShapeDtypeStruct((Bp, 128), jnp.float32),
        in_specs=[
            pl.BlockSpec(memory_space=pltpu.MemorySpace.SMEM),   # ids
            pl.BlockSpec(memory_space=pltpu.MemorySpace.VMEM),   # emb table
            pl.BlockSpec(memory_space=pltpu.MemorySpace.VMEM),   # w_ih
            pl.BlockSpec(memory_space=pltpu.MemorySpace.VMEM),   # w_hh
            pl.BlockSpec(memory_space=pltpu.MemorySpace.VMEM),   # b_ih
            pl.BlockSpec(memory_space=pltpu.MemorySpace.VMEM),   # b_hh
            pl.BlockSpec(memory_space=pltpu.MemorySpace.VMEM),   # fc_w
            pl.BlockSpec(memory_space=pltpu.MemorySpace.VMEM),   # fc_b
        ],
        out_specs=pl.BlockSpec(memory_space=pltpu.MemorySpace.VMEM),
        scratch_shapes=[
            pltpu.VMEM((T * Bp, Hp), jnp.bfloat16),       # gathered embeddings
            pltpu.VMEM((T, Bp, 3 * Hp), jnp.bfloat16),    # hoisted input proj
        ],
        compiler_params=pltpu.CompilerParams(
            vmem_limit_bytes=32 * 1024 * 1024),
    )(ids_tm, params["emb_tbl"], params["wih"], params["whh"],
      params["bih"], params["bhh"], params["fcw"], params["fcb"])

    # PyTorch: fc(hidden) with hidden (1, B, H) -> (1, B, 1)
    return out_pad[:B, 0:1].reshape(1, B, 1)


def reference_forward(x_ids, emb_matrix, w_ih, w_hh, b_ih, b_hh, fc_w, fc_b):
    """Pure-JAX f32 reference matching the PyTorch module semantics."""
    emb = emb_matrix[x_ids]                               # (B, T, H)
    B, T, H = emb.shape
    h = jnp.zeros((B, H), jnp.float32)
    for t in range(T):
        gi = emb[:, t, :] @ w_ih.T + b_ih
        gh = h @ w_hh.T + b_hh
        i_r, i_z, i_n = jnp.split(gi, 3, axis=-1)
        h_r, h_z, h_n = jnp.split(gh, 3, axis=-1)
        r = jax.nn.sigmoid(i_r + h_r)
        z = jax.nn.sigmoid(i_z + h_z)
        n = jnp.tanh(i_n + r * h_n)
        h = (1.0 - z) * n + z * h
    return (h @ fc_w.T + fc_b).reshape(1, B, 1)


if __name__ == "__main__":
    # Small, deterministic synthetic setup.
    num_words = 50
    H = 32          # emb_size == hidden_size
    B = 4           # batch
    T = 8           # sen_maxlen / sequence length

    key = jax.random.PRNGKey(0)
    k_emb, k_wih, k_whh, k_bih, k_bhh, k_fcw, k_fcb, k_x = jax.random.split(key, 8)

    emb_matrix = jax.random.normal(k_emb, (num_words, H), jnp.float32) * 0.1
    w_ih = jax.random.normal(k_wih, (3 * H, H), jnp.float32) * 0.1   # GRU weight_ih_l0
    w_hh = jax.random.normal(k_whh, (3 * H, H), jnp.float32) * 0.1   # GRU weight_hh_l0
    b_ih = jax.random.normal(k_bih, (3 * H,), jnp.float32) * 0.1
    b_hh = jax.random.normal(k_bhh, (3 * H,), jnp.float32) * 0.1
    fc_w = jax.random.normal(k_fcw, (1, H), jnp.float32) * 0.1       # nn.Linear(H, 1)
    fc_b = jax.random.normal(k_fcb, (1,), jnp.float32) * 0.1

    x_ids = jax.random.randint(k_x, (B, T), 0, num_words, jnp.int32)

    params = prepare_params(emb_matrix, w_ih, w_hh, b_ih, b_hh, fc_w, fc_b)
    out = net_forward(x_ids, params)
    out = jax.block_until_ready(out)

    ref = reference_forward(x_ids, emb_matrix, w_ih, w_hh, b_ih, b_hh, fc_w, fc_b)
    assert out.shape == (1, B, 1) and out.dtype == jnp.float32
    assert jnp.allclose(out, ref, atol=5e-2, rtol=5e-2), (out, ref)
    print("KERNEL_OK")
</pallas_src>

<mosaic_0001>
module attributes {stable_mosaic.version = 11 : i64} {
  func.func @gru_fc_kernel(%arg0: memref<8x8xi32, #tpu.memory_space<smem>>, %arg1: memref<50x1x128xbf16, #tpu.memory_space<vmem>>, %arg2: memref<128x384xbf16, #tpu.memory_space<vmem>>, %arg3: memref<128x384xbf16, #tpu.memory_space<vmem>>, %arg4: memref<1x384xf32, #tpu.memory_space<vmem>>, %arg5: memref<1x384xf32, #tpu.memory_space<vmem>>, %arg6: memref<1x128xf32, #tpu.memory_space<vmem>>, %arg7: memref<1x1xf32, #tpu.memory_space<vmem>>, %arg8: memref<8x128xf32, #tpu.memory_space<vmem>>, %arg9: memref<64x128xbf16, #tpu.memory_space<vmem>>, %arg10: memref<8x8x384xbf16, #tpu.memory_space<vmem>>) attributes {dimension_semantics = [], scalar_prefetch = 0 : i64, scratch_operands = 2 : i64, tpu.core_type = #tpu.core_type<tc>} {
    %c0 = arith.constant 0 : index
    %c0_0 = arith.constant 0 : index
    %0 = memref.load %arg0[%c0, %c0_0] : memref<8x8xi32, #tpu.memory_space<smem>>
    %1 = arith.index_cast %0 : i32 to index
    %c0_1 = arith.constant 0 : index
    %c0_2 = arith.constant 0 : index
    %2 = vector.load %arg1[%1, %c0_1, %c0_2] : memref<50x1x128xbf16, #tpu.memory_space<vmem>>, vector<1x1x128xbf16>
    %3 = vector.shape_cast %2 : vector<1x1x128xbf16> to vector<1x128xbf16>
    %c0_3 = arith.constant 0 : index
    %c0_4 = arith.constant 0 : index
    %4 = vector.load %arg9[%c0_3, %c0_4] : memref<64x128xbf16, #tpu.memory_space<vmem>>, vector<1x128xbf16>
    tpu.vector_store %arg9[%c0_3, %c0_4], %3 {strides = array<i32>} : memref<64x128xbf16, #tpu.memory_space<vmem>>, vector<1x128xbf16>,
    %c0_5 = arith.constant 0 : index
    %c1 = arith.constant 1 : index
    %5 = memref.load %arg0[%c0_5, %c1] : memref<8x8xi32, #tpu.memory_space<smem>>
    %6 = arith.index_cast %5 : i32 to index
    %c0_6 = arith.constant 0 : index
    %c0_7 = arith.constant 0 : index
    %7 = vector.load %arg1[%6, %c0_6, %c0_7] : memref<50x1x128xbf16, #tpu.memory_space<vmem>>, vector<1x1x128xbf16>
    %8 = vector.shape_cast %7 : vector<1x1x128xbf16> to vector<1x128xbf16>
    %c1_8 = arith.constant 1 : index
    %c0_9 = arith.constant 0 : index
    %9 = vector.load %arg9[%c1_8, %c0_9] : memref<64x128xbf16, #tpu.memory_space<vmem>>, vector<1x128xbf16>
    tpu.vector_store %arg9[%c1_8, %c0_9], %8 {strides = array<i32>} : memref<64x128xbf16, #tpu.memory_space<vmem>>, vector<1x128xbf16>,
    %c0_10 = arith.constant 0 : index
    %c2 = arith.constant 2 : index
    %10 = memref.load %arg0[%c0_10, %c2] : memref<8x8xi32, #tpu.memory_space<smem>>
    %11 = arith.index_cast %10 : i32 to index
    %c0_11 = arith.constant 0 : index
    %c0_12 = arith.constant 0 : index
    %12 = vector.load %arg1[%11, %c0_11, %c0_12] : memref<50x1x128xbf16, #tpu.memory_space<vmem>>, vector<1x1x128xbf16>
    %13 = vector.shape_cast %12 : vector<1x1x128xbf16> to vector<1x128xbf16>
    %c2_13 = arith.constant 2 : index
    %c0_14 = arith.constant 0 : index
    %14 = vector.load %arg9[%c2_13, %c0_14] : memref<64x128xbf16, #tpu.memory_space<vmem>>, vector<1x128xbf16>
    tpu.vector_store %arg9[%c2_13, %c0_14], %13 {strides = array<i32>} : memref<64x128xbf16, #tpu.memory_space<vmem>>, vector<1x128xbf16>,
    %c0_15 = arith.constant 0 : index
    %c3 = arith.constant 3 : index
    %15 = memref.load %arg0[%c0_15, %c3] : memref<8x8xi32, #tpu.memory_space<smem>>
    %16 = arith.index_cast %15 : i32 to index
    %c0_16 = arith.constant 0 : index
    %c0_17 = arith.constant 0 : index
    %17 = vector.load %arg1[%16, %c0_16, %c0_17] : memref<50x1x128xbf16, #tpu.memory_space<vmem>>, vector<1x1x128xbf16>
    %18 = vector.shape_cast %17 : vector<1x1x128xbf16> to vector<1x128xbf16>
    %c3_18 = arith.constant 3 : index
    %c0_19 = arith.constant 0 : index
    %19 = vector.load %arg9[%c3_18, %c0_19] : memref<64x128xbf16, #tpu.memory_space<vmem>>, vector<1x128xbf16>
    tpu.vector_store %arg9[%c3_18, %c0_19], %18 {strides = array<i32>} : memref<64x128xbf16, #tpu.memory_space<vmem>>, vector<1x128xbf16>,
    %c0_20 = arith.constant 0 : index
    %c4 = arith.constant 4 : index
    %20 = memref.load %arg0[%c0_20, %c4] : memref<8x8xi32, #tpu.memory_space<smem>>
    %21 = arith.index_cast %20 : i32 to index
    %c0_21 = arith.constant 0 : index
    %c0_22 = arith.constant 0 : index
    %22 = vector.load %arg1[%21, %c0_21, %c0_22] : memref<50x1x128xbf16, #tpu.memory_space<vmem>>, vector<1x1x128xbf16>
    %23 = vector.shape_cast %22 : vector<1x1x128xbf16> to vector<1x128xbf16>
    %c4_23 = arith.constant 4 : index
    %c0_24 = arith.constant 0 : index
    %24 = vector.load %arg9[%c4_23, %c0_24] : memref<64x128xbf16, #tpu.memory_space<vmem>>, vector<1x128xbf16>
    tpu.vector_store %arg9[%c4_23, %c0_24], %23 {strides = array<i32>} : memref<64x128xbf16, #tpu.memory_space<vmem>>, vector<1x128xbf16>,
    %c0_25 = arith.constant 0 : index
    %c5 = arith.constant 5 : index
    %25 = memref.load %arg0[%c0_25, %c5] : memref<8x8xi32, #tpu.memory_space<smem>>
    %26 = arith.index_cast %25 : i32 to index
    %c0_26 = arith.constant 0 : index
    %c0_27 = arith.constant 0 : index
    %27 = vector.load %arg1[%26, %c0_26, %c0_27] : memref<50x1x128xbf16, #tpu.memory_space<vmem>>, vector<1x1x128xbf16>
    %28 = vector.shape_cast %27 : vector<1x1x128xbf16> to vector<1x128xbf16>
    %c5_28 = arith.constant 5 : index
    %c0_29 = arith.constant 0 : index
    %29 = vector.load %arg9[%c5_28, %c0_29] : memref<64x128xbf16, #tpu.memory_space<vmem>>, vector<1x128xbf16>
    tpu.vector_store %arg9[%c5_28, %c0_29], %28 {strides = array<i32>} : memref<64x128xbf16, #tpu.memory_space<vmem>>, vector<1x128xbf16>,
    %c0_30 = arith.constant 0 : index
    %c6 = arith.constant 6 : index
    %30 = memref.load %arg0[%c0_30, %c6] : memref<8x8xi32, #tpu.memory_space<smem>>
    %31 = arith.index_cast %30 : i32 to index
    %c0_31 = arith.constant 0 : index
    %c0_32 = arith.constant 0 : index
    %32 = vector.load %arg1[%31, %c0_31, %c0_32] : memref<50x1x128xbf16, #tpu.memory_space<vmem>>, vector<1x1x128xbf16>
    %33 = vector.shape_cast %32 : vector<1x1x128xbf16> to vector<1x128xbf16>
    %c6_33 = arith.constant 6 : index
    %c0_34 = arith.constant 0 : index
    %34 = vector.load %arg9[%c6_33, %c0_34] : memref<64x128xbf16, #tpu.memory_space<vmem>>, vector<1x128xbf16>
    tpu.vector_store %arg9[%c6_33, %c0_34], %33 {strides = array<i32>} : memref<64x128xbf16, #tpu.memory_space<vmem>>, vector<1x128xbf16>,
    %c0_35 = arith.constant 0 : index
    %c7 = arith.constant 7 : index
    %35 = memref.load %arg0[%c0_35, %c7] : memref<8x8xi32, #tpu.memory_space<smem>>
    %36 = arith.index_cast %35 : i32 to index
    %c0_36 = arith.constant 0 : index
    %c0_37 = arith.constant 0 : index
    %37 = vector.load %arg1[%36, %c0_36, %c0_37] : memref<50x1x128xbf16, #tpu.memory_space<vmem>>, vector<1x1x128xbf16>
    %38 = vector.shape_cast %37 : vector<1x1x128xbf16> to vector<1x128xbf16>
    %c7_38 = arith.constant 7 : index
    %c0_39 = arith.constant 0 : index
    %39 = vector.load %arg9[%c7_38, %c0_39] : memref<64x128xbf16, #tpu.memory_space<vmem>>, vector<1x128xbf16>
    tpu.vector_store %arg9[%c7_38, %c0_39], %38 {strides = array<i32>} : memref<64x128xbf16, #tpu.memory_space<vmem>>, vector<1x128xbf16>,
    %c1_40 = arith.constant 1 : index
    %c0_41 = arith.constant 0 : index
    %40 = memref.load %arg0[%c1_40, %c0_41] : memref<8x8xi32, #tpu.memory_space<smem>>
    %41 = arith.index_cast %40 : i32 to index
    %c0_42 = arith.constant 0 : index
    %c0_43 = arith.constant 0 : index
    %42 = vector.load %arg1[%41, %c0_42, %c0_43] : memref<50x1x128xbf16, #tpu.memory_space<vmem>>, vector<1x1x128xbf16>
    %43 = vector.shape_cast %42 : vector<1x1x128xbf16> to vector<1x128xbf16>
    %c8 = arith.constant 8 : index
    %c0_44 = arith.constant 0 : index
    %44 = vector.load %arg9[%c8, %c0_44] : memref<64x128xbf16, #tpu.memory_space<vmem>>, vector<1x128xbf16>
    tpu.vector_store %arg9[%c8, %c0_44], %43 {strides = array<i32>} : memref<64x128xbf16, #tpu.memory_space<vmem>>, vector<1x128xbf16>,
    %c1_45 = arith.constant 1 : index
    %c1_46 = arith.constant 1 : index
    %45 = memref.load %arg0[%c1_45, %c1_46] : memref<8x8xi32, #tpu.memory_space<smem>>
    %46 = arith.index_cast %45 : i32 to index
    %c0_47 = arith.constant 0 : index
    %c0_48 = arith.constant 0 : index
    %47 = vector.load %arg1[%46, %c0_47, %c0_48] : memref<50x1x128xbf16, #tpu.memory_space<vmem>>, vector<1x1x128xbf16>
    %48 = vector.shape_cast %47 : vector<1x1x128xbf16> to vector<1x128xbf16>
    %c9 = arith.constant 9 : index
    %c0_49 = arith.constant 0 : index
    %49 = vector.load %arg9[%c9, %c0_49] : memref<64x128xbf16, #tpu.memory_space<vmem>>, vector<1x128xbf16>
    tpu.vector_store %arg9[%c9, %c0_49], %48 {strides = array<i32>} : memref<64x128xbf16, #tpu.memory_space<vmem>>, vector<1x128xbf16>,
    %c1_50 = arith.constant 1 : index
    %c2_51 = arith.constant 2 : index
    %50 = memref.load %arg0[%c1_50, %c2_51] : memref<8x8xi32, #tpu.memory_space<smem>>
    %51 = arith.index_cast %50 : i32 to index
    %c0_52 = arith.constant 0 : index
    %c0_53 = arith.constant 0 : index
    %52 = vector.load %arg1[%51, %c0_52, %c0_53] : memref<50x1x128xbf16, #tpu.memory_space<vmem>>, vector<1x1x128xbf16>
    %53 = vector.shape_cast %52 : vector<1x1x128xbf16> to vector<1x128xbf16>
    %c10 = arith.constant 10 : index
    %c0_54 = arith.constant 0 : index
    %54 = vector.load %arg9[%c10, %c0_54] : memref<64x128xbf16, #tpu.memory_space<vmem>>, vector<1x128xbf16>
    tpu.vector_store %arg9[%c10, %c0_54], %53 {strides = array<i32>} : memref<64x128xbf16, #tpu.memory_space<vmem>>, vector<1x128xbf16>,
    %c1_55 = arith.constant 1 : index
    %c3_56 = arith.constant 3 : index
    %55 = memref.load %arg0[%c1_55, %c3_56] : memref<8x8xi32, #tpu.memory_space<smem>>
    %56 = arith.index_cast %55 : i32 to index
    %c0_57 = arith.constant 0 : index
    %c0_58 = arith.constant 0 : index
    %57 = vector.load %arg1[%56, %c0_57, %c0_58] : memref<50x1x128xbf16, #tpu.memory_space<vmem>>, vector<1x1x128xbf16>
    %58 = vector.shape_cast %57 : vector<1x1x128xbf16> to vector<1x128xbf16>
    %c11 = arith.constant 11 : index
    %c0_59 = arith.constant 0 : index
    %59 = vector.load %arg9[%c11, %c0_59] : memref<64x128xbf16, #tpu.memory_space<vmem>>, vector<1x128xbf16>
    tpu.vector_store %arg9[%c11, %c0_59], %58 {strides = array<i32>} : memref<64x128xbf16, #tpu.memory_space<vmem>>, vector<1x128xbf16>,
    %c1_60 = arith.constant 1 : index
    %c4_61 = arith.constant 4 : index
    %60 = memref.load %arg0[%c1_60, %c4_61] : memref<8x8xi32, #tpu.memory_space<smem>>
    %61 = arith.index_cast %60 : i32 to index
    %c0_62 = arith.constant 0 : index
    %c0_63 = arith.constant 0 : index
    %62 = vector.load %arg1[%61, %c0_62, %c0_63] : memref<50x1x128xbf16, #tpu.memory_space<vmem>>, vector<1x1x128xbf16>
    %63 = vector.shape_cast %62 : vector<1x1x128xbf16> to vector<1x128xbf16>
    %c12 = arith.constant 12 : index
    %c0_64 = arith.constant 0 : index
    %64 = vector.load %arg9[%c12, %c0_64] : memref<64x128xbf16, #tpu.memory_space<vmem>>, vector<1x128xbf16>
    tpu.vector_store %arg9[%c12, %c0_64], %63 {strides = array<i32>} : memref<64x128xbf16, #tpu.memory_space<vmem>>, vector<1x128xbf16>,
    %c1_65 = arith.constant 1 : index
    %c5_66 = arith.constant 5 : index
    %65 = memref.load %arg0[%c1_65, %c5_66] : memref<8x8xi32, #tpu.memory_space<smem>>
    %66 = arith.index_cast %65 : i32 to index
    %c0_67 = arith.constant 0 : index
    %c0_68 = arith.constant 0 : index
    %67 = vector.load %arg1[%66, %c0_67, %c0_68] : memref<50x1x128xbf16, #tpu.memory_space<vmem>>, vector<1x1x128xbf16>
    %68 = vector.shape_cast %67 : vector<1x1x128xbf16> to vector<1x128xbf16>
    %c13 = arith.constant 13 : index
    %c0_69 = arith.constant 0 : index
    %69 = vector.load %arg9[%c13, %c0_69] : memref<64x128xbf16, #tpu.memory_space<vmem>>, vector<1x128xbf16>
    tpu.vector_store %arg9[%c13, %c0_69], %68 {strides = array<i32>} : memref<64x128xbf16, #tpu.memory_space<vmem>>, vector<1x128xbf16>,
    %c1_70 = arith.constant 1 : index
    %c6_71 = arith.constant 6 : index
    %70 = memref.load %arg0[%c1_70, %c6_71] : memref<8x8xi32, #tpu.memory_space<smem>>
    %71 = arith.index_cast %70 : i32 to index
    %c0_72 = arith.constant 0 : index
    %c0_73 = arith.constant 0 : index
    %72 = vector.load %arg1[%71, %c0_72, %c0_73] : memref<50x1x128xbf16, #tpu.memory_space<vmem>>, vector<1x1x128xbf16>
    %73 = vector.shape_cast %72 : vector<1x1x128xbf16> to vector<1x128xbf16>
    %c14 = arith.constant 14 : index
    %c0_74 = arith.constant 0 : index
    %74 = vector.load %arg9[%c14, %c0_74] : memref<64x128xbf16, #tpu.memory_space<vmem>>, vector<1x128xbf16>
    tpu.vector_store %arg9[%c14, %c0_74], %73 {strides = array<i32>} : memref<64x128xbf16, #tpu.memory_space<vmem>>, vector<1x128xbf16>,
    %c1_75 = arith.constant 1 : index
    %c7_76 = arith.constant 7 : index
    %75 = memref.load %arg0[%c1_75, %c7_76] : memref<8x8xi32, #tpu.memory_space<smem>>
    %76 = arith.index_cast %75 : i32 to index
    %c0_77 = arith.constant 0 : index
    %c0_78 = arith.constant 0 : index
    %77 = vector.load %arg1[%76, %c0_77, %c0_78] : memref<50x1x128xbf16, #tpu.memory_space<vmem>>, vector<1x1x128xbf16>
    %78 = vector.shape_cast %77 : vector<1x1x128xbf16> to vector<1x128xbf16>
    %c15 = arith.constant 15 : index
    %c0_79 = arith.constant 0 : index
    %79 = vector.load %arg9[%c15, %c0_79] : memref<64x128xbf16, #tpu.memory_space<vmem>>, vector<1x128xbf16>
    tpu.vector_store %arg9[%c15, %c0_79], %78 {strides = array<i32>} : memref<64x128xbf16, #tpu.memory_space<vmem>>, vector<1x128xbf16>,
    %c2_80 = arith.constant 2 : index
    %c0_81 = arith.constant 0 : index
    %80 = memref.load %arg0[%c2_80, %c0_81] : memref<8x8xi32, #tpu.memory_space<smem>>
    %81 = arith.index_cast %80 : i32 to index
    %c0_82 = arith.constant 0 : index
    %c0_83 = arith.constant 0 : index
    %82 = vector.load %arg1[%81, %c0_82, %c0_83] : memref<50x1x128xbf16, #tpu.memory_space<vmem>>, vector<1x1x128xbf16>
    %83 = vector.shape_cast %82 : vector<1x1x128xbf16> to vector<1x128xbf16>
    %c16 = arith.constant 16 : index
    %c0_84 = arith.constant 0 : index
    %84 = vector.load %arg9[%c16, %c0_84] : memref<64x128xbf16, #tpu.memory_space<vmem>>, vector<1x128xbf16>
    tpu.vector_store %arg9[%c16, %c0_84], %83 {strides = array<i32>} : memref<64x128xbf16, #tpu.memory_space<vmem>>, vector<1x128xbf16>,
    %c2_85 = arith.constant 2 : index
    %c1_86 = arith.constant 1 : index
    %85 = memref.load %arg0[%c2_85, %c1_86] : memref<8x8xi32, #tpu.memory_space<smem>>
    %86 = arith.index_cast %85 : i32 to index
    %c0_87 = arith.constant 0 : index
    %c0_88 = arith.constant 0 : index
    %87 = vector.load %arg1[%86, %c0_87, %c0_88] : memref<50x1x128xbf16, #tpu.memory_space<vmem>>, vector<1x1x128xbf16>
    %88 = vector.shape_cast %87 : vector<1x1x128xbf16> to vector<1x128xbf16>
    %c17 = arith.constant 17 : index
    %c0_89 = arith.constant 0 : index
    %89 = vector.load %arg9[%c17, %c0_89] : memref<64x128xbf16, #tpu.memory_space<vmem>>, vector<1x128xbf16>
    tpu.vector_store %arg9[%c17, %c0_89], %88 {strides = array<i32>} : memref<64x128xbf16, #tpu.memory_space<vmem>>, vector<1x128xbf16>,
    %c2_90 = arith.constant 2 : index
    %c2_91 = arith.constant 2 : index
    %90 = memref.load %arg0[%c2_90, %c2_91] : memref<8x8xi32, #tpu.memory_space<smem>>
    %91 = arith.index_cast %90 : i32 to index
    %c0_92 = arith.constant 0 : index
    %c0_93 = arith.constant 0 : index
    %92 = vector.load %arg1[%91, %c0_92, %c0_93] : memref<50x1x128xbf16, #tpu.memory_space<vmem>>, vector<1x1x128xbf16>
    %93 = vector.shape_cast %92 : vector<1x1x128xbf16> to vector<1x128xbf16>
    %c18 = arith.constant 18 : index
    %c0_94 = arith.constant 0 : index
    %94 = vector.load %arg9[%c18, %c0_94] : memref<64x128xbf16, #tpu.memory_space<vmem>>, vector<1x128xbf16>
    tpu.vector_store %arg9[%c18, %c0_94], %93 {strides = array<i32>} : memref<64x128xbf16, #tpu.memory_space<vmem>>, vector<1x128xbf16>,
    %c2_95 = arith.constant 2 : index
    %c3_96 = arith.constant 3 : index
    %95 = memref.load %arg0[%c2_95, %c3_96] : memref<8x8xi32, #tpu.memory_space<smem>>
    %96 = arith.index_cast %95 : i32 to index
    %c0_97 = arith.constant 0 : index
    %c0_98 = arith.constant 0 : index
    %97 = vector.load %arg1[%96, %c0_97, %c0_98] : memref<50x1x128xbf16, #tpu.memory_space<vmem>>, vector<1x1x128xbf16>
    %98 = vector.shape_cast %97 : vector<1x1x128xbf16> to vector<1x128xbf16>
    %c19 = arith.constant 19 : index
    %c0_99 = arith.constant 0 : index
    %99 = vector.load %arg9[%c19, %c0_99] : memref<64x128xbf16, #tpu.memory_space<vmem>>, vector<1x128xbf16>
    tpu.vector_store %arg9[%c19, %c0_99], %98 {strides = array<i32>} : memref<64x128xbf16, #tpu.memory_space<vmem>>, vector<1x128xbf16>,
    %c2_100 = arith.constant 2 : index
    %c4_101 = arith.constant 4 : index
    %100 = memref.load %arg0[%c2_100, %c4_101] : memref<8x8xi32, #tpu.memory_space<smem>>
    %101 = arith.index_cast %100 : i32 to index
    %c0_102 = arith.constant 0 : index
    %c0_103 = arith.constant 0 : index
    %102 = vector.load %arg1[%101, %c0_102, %c0_103] : memref<50x1x128xbf16, #tpu.memory_space<vmem>>, vector<1x1x128xbf16>
    %103 = vector.shape_cast %102 : vector<1x1x128xbf16> to vector<1x128xbf16>
    %c20 = arith.constant 20 : index
    %c0_104 = arith.constant 0 : index
    %104 = vector.load %arg9[%c20, %c0_104] : memref<64x128xbf16, #tpu.memory_space<vmem>>, vector<1x128xbf16>
    tpu.vector_store %arg9[%c20, %c0_104], %103 {strides = array<i32>} : memref<64x128xbf16, #tpu.memory_space<vmem>>, vector<1x128xbf16>,
    %c2_105 = arith.constant 2 : index
    %c5_106 = arith.constant 5 : index
    %105 = memref.load %arg0[%c2_105, %c5_106] : memref<8x8xi32, #tpu.memory_space<smem>>
    %106 = arith.index_cast %105 : i32 to index
    %c0_107 = arith.constant 0 : index
    %c0_108 = arith.constant 0 : index
    %107 = vector.load %arg1[%106, %c0_107, %c0_108] : memref<50x1x128xbf16, #tpu.memory_space<vmem>>, vector<1x1x128xbf16>
    %108 = vector.shape_cast %107 : vector<1x1x128xbf16> to vector<1x128xbf16>
    %c21 = arith.constant 21 : index
    %c0_109 = arith.constant 0 : index
    %109 = vector.load %arg9[%c21, %c0_109] : memref<64x128xbf16, #tpu.memory_space<vmem>>, vector<1x128xbf16>
    tpu.vector_store %arg9[%c21, %c0_109], %108 {strides = array<i32>} : memref<64x128xbf16, #tpu.memory_space<vmem>>, vector<1x128xbf16>,
    %c2_110 = arith.constant 2 : index
    %c6_111 = arith.constant 6 : index
    %110 = memref.load %arg0[%c2_110, %c6_111] : memref<8x8xi32, #tpu.memory_space<smem>>
    %111 = arith.index_cast %110 : i32 to index
    %c0_112 = arith.constant 0 : index
    %c0_113 = arith.constant 0 : index
    %112 = vector.load %arg1[%111, %c0_112, %c0_113] : memref<50x1x128xbf16, #tpu.memory_space<vmem>>, vector<1x1x128xbf16>
    %113 = vector.shape_cast %112 : vector<1x1x128xbf16> to vector<1x128xbf16>
    %c22 = arith.constant 22 : index
    %c0_114 = arith.constant 0 : index
    %114 = vector.load %arg9[%c22, %c0_114] : memref<64x128xbf16, #tpu.memory_space<vmem>>, vector<1x128xbf16>
    tpu.vector_store %arg9[%c22, %c0_114], %113 {strides = array<i32>} : memref<64x128xbf16, #tpu.memory_space<vmem>>, vector<1x128xbf16>,
    %c2_115 = arith.constant 2 : index
    %c7_116 = arith.constant 7 : index
    %115 = memref.load %arg0[%c2_115, %c7_116] : memref<8x8xi32, #tpu.memory_space<smem>>
    %116 = arith.index_cast %115 : i32 to index
    %c0_117 = arith.constant 0 : index
    %c0_118 = arith.constant 0 : index
    %117 = vector.load %arg1[%116, %c0_117, %c0_118] : memref<50x1x128xbf16, #tpu.memory_space<vmem>>, vector<1x1x128xbf16>
    %118 = vector.shape_cast %117 : vector<1x1x128xbf16> to vector<1x128xbf16>
    %c23 = arith.constant 23 : index
    %c0_119 = arith.constant 0 : index
    %119 = vector.load %arg9[%c23, %c0_119] : memref<64x128xbf16, #tpu.memory_space<vmem>>, vector<1x128xbf16>
    tpu.vector_store %arg9[%c23, %c0_119], %118 {strides = array<i32>} : memref<64x128xbf16, #tpu.memory_space<vmem>>, vector<1x128xbf16>,
    %c3_120 = arith.constant 3 : index
    %c0_121 = arith.constant 0 : index
    %120 = memref.load %arg0[%c3_120, %c0_121] : memref<8x8xi32, #tpu.memory_space<smem>>
    %121 = arith.index_cast %120 : i32 to index
    %c0_122 = arith.constant 0 : index
    %c0_123 = arith.constant 0 : index
    %122 = vector.load %arg1[%121, %c0_122, %c0_123] : memref<50x1x128xbf16, #tpu.memory_space<vmem>>, vector<1x1x128xbf16>
    %123 = vector.shape_cast %122 : vector<1x1x128xbf16> to vector<1x128xbf16>
    %c24 = arith.constant 24 : index
    %c0_124 = arith.constant 0 : index
    %124 = vector.load %arg9[%c24, %c0_124] : memref<64x128xbf16, #tpu.memory_space<vmem>>, vector<1x128xbf16>
    tpu.vector_store %arg9[%c24, %c0_124], %123 {strides = array<i32>} : memref<64x128xbf16, #tpu.memory_space<vmem>>, vector<1x128xbf16>,
    %c3_125 = arith.constant 3 : index
    %c1_126 = arith.constant 1 : index
    %125 = memref.load %arg0[%c3_125, %c1_126] : memref<8x8xi32, #tpu.memory_space<smem>>
    %126 = arith.index_cast %125 : i32 to index
    %c0_127 = arith.constant 0 : index
    %c0_128 = arith.constant 0 : index
    %127 = vector.load %arg1[%126, %c0_127, %c0_128] : memref<50x1x128xbf16, #tpu.memory_space<vmem>>, vector<1x1x128xbf16>
    %128 = vector.shape_cast %127 : vector<1x1x128xbf16> to vector<1x128xbf16>
    %c25 = arith.constant 25 : index
    %c0_129 = arith.constant 0 : index
    %129 = vector.load %arg9[%c25, %c0_129] : memref<64x128xbf16, #tpu.memory_space<vmem>>, vector<1x128xbf16>
    tpu.vector_store %arg9[%c25, %c0_129], %128 {strides = array<i32>} : memref<64x128xbf16, #tpu.memory_space<vmem>>, vector<1x128xbf16>,
    %c3_130 = arith.constant 3 : index
    %c2_131 = arith.constant 2 : index
    %130 = memref.load %arg0[%c3_130, %c2_131] : memref<8x8xi32, #tpu.memory_space<smem>>
    %131 = arith.index_cast %130 : i32 to index
    %c0_132 = arith.constant 0 : index
    %c0_133 = arith.constant 0 : index
    %132 = vector.load %arg1[%131, %c0_132, %c0_133] : memref<50x1x128xbf16, #tpu.memory_space<vmem>>, vector<1x1x128xbf16>
    %133 = vector.shape_cast %132 : vector<1x1x128xbf16> to vector<1x128xbf16>
    %c26 = arith.constant 26 : index
    %c0_134 = arith.constant 0 : index
    %134 = vector.load %arg9[%c26, %c0_134] : memref<64x128xbf16, #tpu.memory_space<vmem>>, vector<1x128xbf16>
    tpu.vector_store %arg9[%c26, %c0_134], %133 {strides = array<i32>} : memref<64x128xbf16, #tpu.memory_space<vmem>>, vector<1x128xbf16>,
    %c3_135 = arith.constant 3 : index
    %c3_136 = arith.constant 3 : index
    %135 = memref.load %arg0[%c3_135, %c3_136] : memref<8x8xi32, #tpu.memory_space<smem>>
    %136 = arith.index_cast %135 : i32 to index
    %c0_137 = arith.constant 0 : index
    %c0_138 = arith.constant 0 : index
    %137 = vector.load %arg1[%136, %c0_137, %c0_138] : memref<50x1x128xbf16, #tpu.memory_space<vmem>>, vector<1x1x128xbf16>
    %138 = vector.shape_cast %137 : vector<1x1x128xbf16> to vector<1x128xbf16>
    %c27 = arith.constant 27 : index
    %c0_139 = arith.constant 0 : index
    %139 = vector.load %arg9[%c27, %c0_139] : memref<64x128xbf16, #tpu.memory_space<vmem>>, vector<1x128xbf16>
    tpu.vector_store %arg9[%c27, %c0_139], %138 {strides = array<i32>} : memref<64x128xbf16, #tpu.memory_space<vmem>>, vector<1x128xbf16>,
    %c3_140 = arith.constant 3 : index
    %c4_141 = arith.constant 4 : index
    %140 = memref.load %arg0[%c3_140, %c4_141] : memref<8x8xi32, #tpu.memory_space<smem>>
    %141 = arith.index_cast %140 : i32 to index
    %c0_142 = arith.constant 0 : index
    %c0_143 = arith.constant 0 : index
    %142 = vector.load %arg1[%141, %c0_142, %c0_143] : memref<50x1x128xbf16, #tpu.memory_space<vmem>>, vector<1x1x128xbf16>
    %143 = vector.shape_cast %142 : vector<1x1x128xbf16> to vector<1x128xbf16>
    %c28 = arith.constant 28 : index
    %c0_144 = arith.constant 0 : index
    %144 = vector.load %arg9[%c28, %c0_144] : memref<64x128xbf16, #tpu.memory_space<vmem>>, vector<1x128xbf16>
    tpu.vector_store %arg9[%c28, %c0_144], %143 {strides = array<i32>} : memref<64x128xbf16, #tpu.memory_space<vmem>>, vector<1x128xbf16>,
    %c3_145 = arith.constant 3 : index
    %c5_146 = arith.constant 5 : index
    %145 = memref.load %arg0[%c3_145, %c5_146] : memref<8x8xi32, #tpu.memory_space<smem>>
    %146 = arith.index_cast %145 : i32 to index
    %c0_147 = arith.constant 0 : index
    %c0_148 = arith.constant 0 : index
    %147 = vector.load %arg1[%146, %c0_147, %c0_148] : memref<50x1x128xbf16, #tpu.memory_space<vmem>>, vector<1x1x128xbf16>
    %148 = vector.shape_cast %147 : vector<1x1x128xbf16> to vector<1x128xbf16>
    %c29 = arith.constant 29 : index
    %c0_149 = arith.constant 0 : index
    %149 = vector.load %arg9[%c29, %c0_149] : memref<64x128xbf16, #tpu.memory_space<vmem>>, vector<1x128xbf16>
    tpu.vector_store %arg9[%c29, %c0_149], %148 {strides = array<i32>} : memref<64x128xbf16, #tpu.memory_space<vmem>>, vector<1x128xbf16>,
    %c3_150 = arith.constant 3 : index
    %c6_151 = arith.constant 6 : index
    %150 = memref.load %arg0[%c3_150, %c6_151] : memref<8x8xi32, #tpu.memory_space<smem>>
    %151 = arith.index_cast %150 : i32 to index
    %c0_152 = arith.constant 0 : index
    %c0_153 = arith.constant 0 : index
    %152 = vector.load %arg1[%151, %c0_152, %c0_153] : memref<50x1x128xbf16, #tpu.memory_space<vmem>>, vector<1x1x128xbf16>
    %153 = vector.shape_cast %152 : vector<1x1x128xbf16> to vector<1x128xbf16>
    %c30 = arith.constant 30 : index
    %c0_154 = arith.constant 0 : index
    %154 = vector.load %arg9[%c30, %c0_154] : memref<64x128xbf16, #tpu.memory_space<vmem>>, vector<1x128xbf16>
    tpu.vector_store %arg9[%c30, %c0_154], %153 {strides = array<i32>} : memref<64x128xbf16, #tpu.memory_space<vmem>>, vector<1x128xbf16>,
    %c3_155 = arith.constant 3 : index
    %c7_156 = arith.constant 7 : index
    %155 = memref.load %arg0[%c3_155, %c7_156] : memref<8x8xi32, #tpu.memory_space<smem>>
    %156 = arith.index_cast %155 : i32 to index
    %c0_157 = arith.constant 0 : index
    %c0_158 = arith.constant 0 : index
    %157 = vector.load %arg1[%156, %c0_157, %c0_158] : memref<50x1x128xbf16, #tpu.memory_space<vmem>>, vector<1x1x128xbf16>
    %158 = vector.shape_cast %157 : vector<1x1x128xbf16> to vector<1x128xbf16>
    %c31 = arith.constant 31 : index
    %c0_159 = arith.constant 0 : index
    %159 = vector.load %arg9[%c31, %c0_159] : memref<64x128xbf16, #tpu.memory_space<vmem>>, vector<1x128xbf16>
    tpu.vector_store %arg9[%c31, %c0_159], %158 {strides = array<i32>} : memref<64x128xbf16, #tpu.memory_space<vmem>>, vector<1x128xbf16>,
    %c4_160 = arith.constant 4 : index
    %c0_161 = arith.constant 0 : index
    %160 = memref.load %arg0[%c4_160, %c0_161] : memref<8x8xi32, #tpu.memory_space<smem>>
    %161 = arith.index_cast %160 : i32 to index
    %c0_162 = arith.constant 0 : index
    %c0_163 = arith.constant 0 : index
    %162 = vector.load %arg1[%161, %c0_162, %c0_163] : memref<50x1x128xbf16, #tpu.memory_space<vmem>>, vector<1x1x128xbf16>
    %163 = vector.shape_cast %162 : vector<1x1x128xbf16> to vector<1x128xbf16>
    %c32 = arith.constant 32 : index
    %c0_164 = arith.constant 0 : index
    %164 = vector.load %arg9[%c32, %c0_164] : memref<64x128xbf16, #tpu.memory_space<vmem>>, vector<1x128xbf16>
    tpu.vector_store %arg9[%c32, %c0_164], %163 {strides = array<i32>} : memref<64x128xbf16, #tpu.memory_space<vmem>>, vector<1x128xbf16>,
    %c4_165 = arith.constant 4 : index
    %c1_166 = arith.constant 1 : index
    %165 = memref.load %arg0[%c4_165, %c1_166] : memref<8x8xi32, #tpu.memory_space<smem>>
    %166 = arith.index_cast %165 : i32 to index
    %c0_167 = arith.constant 0 : index
    %c0_168 = arith.constant 0 : index
    %167 = vector.load %arg1[%166, %c0_167, %c0_168] : memref<50x1x128xbf16, #tpu.memory_space<vmem>>, vector<1x1x128xbf16>
    %168 = vector.shape_cast %167 : vector<1x1x128xbf16> to vector<1x128xbf16>
    %c33 = arith.constant 33 : index
    %c0_169 = arith.constant 0 : index
    %169 = vector.load %arg9[%c33, %c0_169] : memref<64x128xbf16, #tpu.memory_space<vmem>>, vector<1x128xbf16>
    tpu.vector_store %arg9[%c33, %c0_169], %168 {strides = array<i32>} : memref<64x128xbf16, #tpu.memory_space<vmem>>, vector<1x128xbf16>,
    %c4_170 = arith.constant 4 : index
    %c2_171 = arith.constant 2 : index
    %170 = memref.load %arg0[%c4_170, %c2_171] : memref<8x8xi32, #tpu.memory_space<smem>>
    %171 = arith.index_cast %170 : i32 to index
    %c0_172 = arith.constant 0 : index
    %c0_173 = arith.constant 0 : index
    %172 = vector.load %arg1[%171, %c0_172, %c0_173] : memref<50x1x128xbf16, #tpu.memory_space<vmem>>, vector<1x1x128xbf16>
    %173 = vector.shape_cast %172 : vector<1x1x128xbf16> to vector<1x128xbf16>
    %c34 = arith.constant 34 : index
    %c0_174 = arith.constant 0 : index
    %174 = vector.load %arg9[%c34, %c0_174] : memref<64x128xbf16, #tpu.memory_space<vmem>>, vector<1x128xbf16>
    tpu.vector_store %arg9[%c34, %c0_174], %173 {strides = array<i32>} : memref<64x128xbf16, #tpu.memory_space<vmem>>, vector<1x128xbf16>,
    %c4_175 = arith.constant 4 : index
    %c3_176 = arith.constant 3 : index
    %175 = memref.load %arg0[%c4_175, %c3_176] : memref<8x8xi32, #tpu.memory_space<smem>>
    %176 = arith.index_cast %175 : i32 to index
    %c0_177 = arith.constant 0 : index
    %c0_178 = arith.constant 0 : index
    %177 = vector.load %arg1[%176, %c0_177, %c0_178] : memref<50x1x128xbf16, #tpu.memory_space<vmem>>, vector<1x1x128xbf16>
    %178 = vector.shape_cast %177 : vector<1x1x128xbf16> to vector<1x128xbf16>
    %c35 = arith.constant 35 : index
    %c0_179 = arith.constant 0 : index
    %179 = vector.load %arg9[%c35, %c0_179] : memref<64x128xbf16, #tpu.memory_space<vmem>>, vector<1x128xbf16>
    tpu.vector_store %arg9[%c35, %c0_179], %178 {strides = array<i32>} : memref<64x128xbf16, #tpu.memory_space<vmem>>, vector<1x128xbf16>,
    %c4_180 = arith.constant 4 : index
    %c4_181 = arith.constant 4 : index
    %180 = memref.load %arg0[%c4_180, %c4_181] : memref<8x8xi32, #tpu.memory_space<smem>>
    %181 = arith.index_cast %180 : i32 to index
    %c0_182 = arith.constant 0 : index
    %c0_183 = arith.constant 0 : index
    %182 = vector.load %arg1[%181, %c0_182, %c0_183] : memref<50x1x128xbf16, #tpu.memory_space<vmem>>, vector<1x1x128xbf16>
    %183 = vector.shape_cast %182 : vector<1x1x128xbf16> to vector<1x128xbf16>
    %c36 = arith.constant 36 : index
    %c0_184 = arith.constant 0 : index
    %184 = vector.load %arg9[%c36, %c0_184] : memref<64x128xbf16, #tpu.memory_space<vmem>>, vector<1x128xbf16>
    tpu.vector_store %arg9[%c36, %c0_184], %183 {strides = array<i32>} : memref<64x128xbf16, #tpu.memory_space<vmem>>, vector<1x128xbf16>,
    %c4_185 = arith.constant 4 : index
    %c5_186 = arith.constant 5 : index
    %185 = memref.load %arg0[%c4_185, %c5_186] : memref<8x8xi32, #tpu.memory_space<smem>>
    %186 = arith.index_cast %185 : i32 to index
    %c0_187 = arith.constant 0 : index
    %c0_188 = arith.constant 0 : index
    %187 = vector.load %arg1[%186, %c0_187, %c0_188] : memref<50x1x128xbf16, #tpu.memory_space<vmem>>, vector<1x1x128xbf16>
    %188 = vector.shape_cast %187 : vector<1x1x128xbf16> to vector<1x128xbf16>
    %c37 = arith.constant 37 : index
    %c0_189 = arith.constant 0 : index
    %189 = vector.load %arg9[%c37, %c0_189] : memref<64x128xbf16, #tpu.memory_space<vmem>>, vector<1x128xbf16>
    tpu.vector_store %arg9[%c37, %c0_189], %188 {strides = array<i32>} : memref<64x128xbf16, #tpu.memory_space<vmem>>, vector<1x128xbf16>,
    %c4_190 = arith.constant 4 : index
    %c6_191 = arith.constant 6 : index
    %190 = memref.load %arg0[%c4_190, %c6_191] : memref<8x8xi32, #tpu.memory_space<smem>>
    %191 = arith.index_cast %190 : i32 to index
    %c0_192 = arith.constant 0 : index
    %c0_193 = arith.constant 0 : index
    %192 = vector.load %arg1[%191, %c0_192, %c0_193] : memref<50x1x128xbf16, #tpu.memory_space<vmem>>, vector<1x1x128xbf16>
    %193 = vector.shape_cast %192 : vector<1x1x128xbf16> to vector<1x128xbf16>
    %c38 = arith.constant 38 : index
    %c0_194 = arith.constant 0 : index
    %194 = vector.load %arg9[%c38, %c0_194] : memref<64x128xbf16, #tpu.memory_space<vmem>>, vector<1x128xbf16>
    tpu.vector_store %arg9[%c38, %c0_194], %193 {strides = array<i32>} : memref<64x128xbf16, #tpu.memory_space<vmem>>, vector<1x128xbf16>,
    %c4_195 = arith.constant 4 : index
    %c7_196 = arith.constant 7 : index
    %195 = memref.load %arg0[%c4_195, %c7_196] : memref<8x8xi32, #tpu.memory_space<smem>>
    %196 = arith.index_cast %195 : i32 to index
    %c0_197 = arith.constant 0 : index
    %c0_198 = arith.constant 0 : index
    %197 = vector.load %arg1[%196, %c0_197, %c0_198] : memref<50x1x128xbf16, #tpu.memory_space<vmem>>, vector<1x1x128xbf16>
    %198 = vector.shape_cast %197 : vector<1x1x128xbf16> to vector<1x128xbf16>
    %c39 = arith.constant 39 : index
    %c0_199 = arith.constant 0 : index
    %199 = vector.load %arg9[%c39, %c0_199] : memref<64x128xbf16, #tpu.memory_space<vmem>>, vector<1x128xbf16>
    tpu.vector_store %arg9[%c39, %c0_199], %198 {strides = array<i32>} : memref<64x128xbf16, #tpu.memory_space<vmem>>, vector<1x128xbf16>,
    %c5_200 = arith.constant 5 : index
    %c0_201 = arith.constant 0 : index
    %200 = memref.load %arg0[%c5_200, %c0_201] : memref<8x8xi32, #tpu.memory_space<smem>>
    %201 = arith.index_cast %200 : i32 to index
    %c0_202 = arith.constant 0 : index
    %c0_203 = arith.constant 0 : index
    %202 = vector.load %arg1[%201, %c0_202, %c0_203] : memref<50x1x128xbf16, #tpu.memory_space<vmem>>, vector<1x1x128xbf16>
    %203 = vector.shape_cast %202 : vector<1x1x128xbf16> to vector<1x128xbf16>
    %c40 = arith.constant 40 : index
    %c0_204 = arith.constant 0 : index
    %204 = vector.load %arg9[%c40, %c0_204] : memref<64x128xbf16, #tpu.memory_space<vmem>>, vector<1x128xbf16>
    tpu.vector_store %arg9[%c40, %c0_204], %203 {strides = array<i32>} : memref<64x128xbf16, #tpu.memory_space<vmem>>, vector<1x128xbf16>,
    %c5_205 = arith.constant 5 : index
    %c1_206 = arith.constant 1 : index
    %205 = memref.load %arg0[%c5_205, %c1_206] : memref<8x8xi32, #tpu.memory_space<smem>>
    %206 = arith.index_cast %205 : i32 to index
    %c0_207 = arith.constant 0 : index
    %c0_208 = arith.constant 0 : index
    %207 = vector.load %arg1[%206, %c0_207, %c0_208] : memref<50x1x128xbf16, #tpu.memory_space<vmem>>, vector<1x1x128xbf16>
    %208 = vector.shape_cast %207 : vector<1x1x128xbf16> to vector<1x128xbf16>
    %c41 = arith.constant 41 : index
    %c0_209 = arith.constant 0 : index
    %209 = vector.load %arg9[%c41, %c0_209] : memref<64x128xbf16, #tpu.memory_space<vmem>>, vector<1x128xbf16>
    tpu.vector_store %arg9[%c41, %c0_209], %208 {strides = array<i32>} : memref<64x128xbf16, #tpu.memory_space<vmem>>, vector<1x128xbf16>,
    %c5_210 = arith.constant 5 : index
    %c2_211 = arith.constant 2 : index
    %210 = memref.load %arg0[%c5_210, %c2_211] : memref<8x8xi32, #tpu.memory_space<smem>>
    %211 = arith.index_cast %210 : i32 to index
    %c0_212 = arith.constant 0 : index
    %c0_213 = arith.constant 0 : index
    %212 = vector.load %arg1[%211, %c0_212, %c0_213] : memref<50x1x128xbf16, #tpu.memory_space<vmem>>, vector<1x1x128xbf16>
    %213 = vector.shape_cast %212 : vector<1x1x128xbf16> to vector<1x128xbf16>
    %c42 = arith.constant 42 : index
    %c0_214 = arith.constant 0 : index
    %214 = vector.load %arg9[%c42, %c0_214] : memref<64x128xbf16, #tpu.memory_space<vmem>>, vector<1x128xbf16>
    tpu.vector_store %arg9[%c42, %c0_214], %213 {strides = array<i32>} : memref<64x128xbf16, #tpu.memory_space<vmem>>, vector<1x128xbf16>,
    %c5_215 = arith.constant 5 : index
    %c3_216 = arith.constant 3 : index
    %215 = memref.load %arg0[%c5_215, %c3_216] : memref<8x8xi32, #tpu.memory_space<smem>>
    %216 = arith.index_cast %215 : i32 to index
    %c0_217 = arith.constant 0 : index
    %c0_218 = arith.constant 0 : index
    %217 = vector.load %arg1[%216, %c0_217, %c0_218] : memref<50x1x128xbf16, #tpu.memory_space<vmem>>, vector<1x1x128xbf16>
    %218 = vector.shape_cast %217 : vector<1x1x128xbf16> to vector<1x128xbf16>
    %c43 = arith.constant 43 : index
    %c0_219 = arith.constant 0 : index
    %219 = vector.load %arg9[%c43, %c0_219] : memref<64x128xbf16, #tpu.memory_space<vmem>>, vector<1x128xbf16>
    tpu.vector_store %arg9[%c43, %c0_219], %218 {strides = array<i32>} : memref<64x128xbf16, #tpu.memory_space<vmem>>, vector<1x128xbf16>,
    %c5_220 = arith.constant 5 : index
    %c4_221 = arith.constant 4 : index
    %220 = memref.load %arg0[%c5_220, %c4_221] : memref<8x8xi32, #tpu.memory_space<smem>>
    %221 = arith.index_cast %220 : i32 to index
    %c0_222 = arith.constant 0 : index
    %c0_223 = arith.constant 0 : index
    %222 = vector.load %arg1[%221, %c0_222, %c0_223] : memref<50x1x128xbf16, #tpu.memory_space<vmem>>, vector<1x1x128xbf16>
    %223 = vector.shape_cast %222 : vector<1x1x128xbf16> to vector<1x128xbf16>
    %c44 = arith.constant 44 : index
    %c0_224 = arith.constant 0 : index
    %224 = vector.load %arg9[%c44, %c0_224] : memref<64x128xbf16, #tpu.memory_space<vmem>>, vector<1x128xbf16>
    tpu.vector_store %arg9[%c44, %c0_224], %223 {strides = array<i32>} : memref<64x128xbf16, #tpu.memory_space<vmem>>, vector<1x128xbf16>,
    %c5_225 = arith.constant 5 : index
    %c5_226 = arith.constant 5 : index
    %225 = memref.load %arg0[%c5_225, %c5_226] : memref<8x8xi32, #tpu.memory_space<smem>>
    %226 = arith.index_cast %225 : i32 to index
    %c0_227 = arith.constant 0 : index
    %c0_228 = arith.constant 0 : index
    %227 = vector.load %arg1[%226, %c0_227, %c0_228] : memref<50x1x128xbf16, #tpu.memory_space<vmem>>, vector<1x1x128xbf16>
    %228 = vector.shape_cast %227 : vector<1x1x128xbf16> to vector<1x128xbf16>
    %c45 = arith.constant 45 : index
    %c0_229 = arith.constant 0 : index
    %229 = vector.load %arg9[%c45, %c0_229] : memref<64x128xbf16, #tpu.memory_space<vmem>>, vector<1x128xbf16>
    tpu.vector_store %arg9[%c45, %c0_229], %228 {strides = array<i32>} : memref<64x128xbf16, #tpu.memory_space<vmem>>, vector<1x128xbf16>,
    %c5_230 = arith.constant 5 : index
    %c6_231 = arith.constant 6 : index
    %230 = memref.load %arg0[%c5_230, %c6_231] : memref<8x8xi32, #tpu.memory_space<smem>>
    %231 = arith.index_cast %230 : i32 to index
    %c0_232 = arith.constant 0 : index
    %c0_233 = arith.constant 0 : index
    %232 = vector.load %arg1[%231, %c0_232, %c0_233] : memref<50x1x128xbf16, #tpu.memory_space<vmem>>, vector<1x1x128xbf16>
    %233 = vector.shape_cast %232 : vector<1x1x128xbf16> to vector<1x128xbf16>
    %c46 = arith.constant 46 : index
    %c0_234 = arith.constant 0 : index
    %234 = vector.load %arg9[%c46, %c0_234] : memref<64x128xbf16, #tpu.memory_space<vmem>>, vector<1x128xbf16>
    tpu.vector_store %arg9[%c46, %c0_234], %233 {strides = array<i32>} : memref<64x128xbf16, #tpu.memory_space<vmem>>, vector<1x128xbf16>,
    %c5_235 = arith.constant 5 : index
    %c7_236 = arith.constant 7 : index
    %235 = memref.load %arg0[%c5_235, %c7_236] : memref<8x8xi32, #tpu.memory_space<smem>>
    %236 = arith.index_cast %235 : i32 to index
    %c0_237 = arith.constant 0 : index
    %c0_238 = arith.constant 0 : index
    %237 = vector.load %arg1[%236, %c0_237, %c0_238] : memref<50x1x128xbf16, #tpu.memory_space<vmem>>, vector<1x1x128xbf16>
    %238 = vector.shape_cast %237 : vector<1x1x128xbf16> to vector<1x128xbf16>
    %c47 = arith.constant 47 : index
    %c0_239 = arith.constant 0 : index
    %239 = vector.load %arg9[%c47, %c0_239] : memref<64x128xbf16, #tpu.memory_space<vmem>>, vector<1x128xbf16>
    tpu.vector_store %arg9[%c47, %c0_239], %238 {strides = array<i32>} : memref<64x128xbf16, #tpu.memory_space<vmem>>, vector<1x128xbf16>,
    %c6_240 = arith.constant 6 : index
    %c0_241 = arith.constant 0 : index
    %240 = memref.load %arg0[%c6_240, %c0_241] : memref<8x8xi32, #tpu.memory_space<smem>>
    %241 = arith.index_cast %240 : i32 to index
    %c0_242 = arith.constant 0 : index
    %c0_243 = arith.constant 0 : index
    %242 = vector.load %arg1[%241, %c0_242, %c0_243] : memref<50x1x128xbf16, #tpu.memory_space<vmem>>, vector<1x1x128xbf16>
    %243 = vector.shape_cast %242 : vector<1x1x128xbf16> to vector<1x128xbf16>
    %c48 = arith.constant 48 : index
    %c0_244 = arith.constant 0 : index
    %244 = vector.load %arg9[%c48, %c0_244] : memref<64x128xbf16, #tpu.memory_space<vmem>>, vector<1x128xbf16>
    tpu.vector_store %arg9[%c48, %c0_244], %243 {strides = array<i32>} : memref<64x128xbf16, #tpu.memory_space<vmem>>, vector<1x128xbf16>,
    %c6_245 = arith.constant 6 : index
    %c1_246 = arith.constant 1 : index
    %245 = memref.load %arg0[%c6_245, %c1_246] : memref<8x8xi32, #tpu.memory_space<smem>>
    %246 = arith.index_cast %245 : i32 to index
    %c0_247 = arith.constant 0 : index
    %c0_248 = arith.constant 0 : index
    %247 = vector.load %arg1[%246, %c0_247, %c0_248] : memref<50x1x128xbf16, #tpu.memory_space<vmem>>, vector<1x1x128xbf16>
    %248 = vector.shape_cast %247 : vector<1x1x128xbf16> to vector<1x128xbf16>
    %c49 = arith.constant 49 : index
    %c0_249 = arith.constant 0 : index
    %249 = vector.load %arg9[%c49, %c0_249] : memref<64x128xbf16, #tpu.memory_space<vmem>>, vector<1x128xbf16>
    tpu.vector_store %arg9[%c49, %c0_249], %248 {strides = array<i32>} : memref<64x128xbf16, #tpu.memory_space<vmem>>, vector<1x128xbf16>,
    %c6_250 = arith.constant 6 : index
    %c2_251 = arith.constant 2 : index
    %250 = memref.load %arg0[%c6_250, %c2_251] : memref<8x8xi32, #tpu.memory_space<smem>>
    %251 = arith.index_cast %250 : i32 to index
    %c0_252 = arith.constant 0 : index
    %c0_253 = arith.constant 0 : index
    %252 = vector.load %arg1[%251, %c0_252, %c0_253] : memref<50x1x128xbf16, #tpu.memory_space<vmem>>, vector<1x1x128xbf16>
    %253 = vector.shape_cast %252 : vector<1x1x128xbf16> to vector<1x128xbf16>
    %c50 = arith.constant 50 : index
    %c0_254 = arith.constant 0 : index
    %254 = vector.load %arg9[%c50, %c0_254] : memref<64x128xbf16, #tpu.memory_space<vmem>>, vector<1x128xbf16>
    tpu.vector_store %arg9[%c50, %c0_254], %253 {strides = array<i32>} : memref<64x128xbf16, #tpu.memory_space<vmem>>, vector<1x128xbf16>,
    %c6_255 = arith.constant 6 : index
    %c3_256 = arith.constant 3 : index
    %255 = memref.load %arg0[%c6_255, %c3_256] : memref<8x8xi32, #tpu.memory_space<smem>>
    %256 = arith.index_cast %255 : i32 to index
    %c0_257 = arith.constant 0 : index
    %c0_258 = arith.constant 0 : index
    %257 = vector.load %arg1[%256, %c0_257, %c0_258] : memref<50x1x128xbf16, #tpu.memory_space<vmem>>, vector<1x1x128xbf16>
    %258 = vector.shape_cast %257 : vector<1x1x128xbf16> to vector<1x128xbf16>
    %c51 = arith.constant 51 : index
    %c0_259 = arith.constant 0 : index
    %259 = vector.load %arg9[%c51, %c0_259] : memref<64x128xbf16, #tpu.memory_space<vmem>>, vector<1x128xbf16>
    tpu.vector_store %arg9[%c51, %c0_259], %258 {strides = array<i32>} : memref<64x128xbf16, #tpu.memory_space<vmem>>, vector<1x128xbf16>,
    %c6_260 = arith.constant 6 : index
    %c4_261 = arith.constant 4 : index
    %260 = memref.load %arg0[%c6_260, %c4_261] : memref<8x8xi32, #tpu.memory_space<smem>>
    %261 = arith.index_cast %260 : i32 to index
    %c0_262 = arith.constant 0 : index
    %c0_263 = arith.constant 0 : index
    %262 = vector.load %arg1[%261, %c0_262, %c0_263] : memref<50x1x128xbf16, #tpu.memory_space<vmem>>, vector<1x1x128xbf16>
    %263 = vector.shape_cast %262 : vector<1x1x128xbf16> to vector<1x128xbf16>
    %c52 = arith.constant 52 : index
    %c0_264 = arith.constant 0 : index
    %264 = vector.load %arg9[%c52, %c0_264] : memref<64x128xbf16, #tpu.memory_space<vmem>>, vector<1x128xbf16>
    tpu.vector_store %arg9[%c52, %c0_264], %263 {strides = array<i32>} : memref<64x128xbf16, #tpu.memory_space<vmem>>, vector<1x128xbf16>,
    %c6_265 = arith.constant 6 : index
    %c5_266 = arith.constant 5 : index
    %265 = memref.load %arg0[%c6_265, %c5_266] : memref<8x8xi32, #tpu.memory_space<smem>>
    %266 = arith.index_cast %265 : i32 to index
    %c0_267 = arith.constant 0 : index
    %c0_268 = arith.constant 0 : index
    %267 = vector.load %arg1[%266, %c0_267, %c0_268] : memref<50x1x128xbf16, #tpu.memory_space<vmem>>, vector<1x1x128xbf16>
    %268 = vector.shape_cast %267 : vector<1x1x128xbf16> to vector<1x128xbf16>
    %c53 = arith.constant 53 : index
    %c0_269 = arith.constant 0 : index
    %269 = vector.load %arg9[%c53, %c0_269] : memref<64x128xbf16, #tpu.memory_space<vmem>>, vector<1x128xbf16>
    tpu.vector_store %arg9[%c53, %c0_269], %268 {strides = array<i32>} : memref<64x128xbf16, #tpu.memory_space<vmem>>, vector<1x128xbf16>,
    %c6_270 = arith.constant 6 : index
    %c6_271 = arith.constant 6 : index
    %270 = memref.load %arg0[%c6_270, %c6_271] : memref<8x8xi32, #tpu.memory_space<smem>>
    %271 = arith.index_cast %270 : i32 to index
    %c0_272 = arith.constant 0 : index
    %c0_273 = arith.constant 0 : index
    %272 = vector.load %arg1[%271, %c0_272, %c0_273] : memref<50x1x128xbf16, #tpu.memory_space<vmem>>, vector<1x1x128xbf16>
    %273 = vector.shape_cast %272 : vector<1x1x128xbf16> to vector<1x128xbf16>
    %c54 = arith.constant 54 : index
    %c0_274 = arith.constant 0 : index
    %274 = vector.load %arg9[%c54, %c0_274] : memref<64x128xbf16, #tpu.memory_space<vmem>>, vector<1x128xbf16>
    tpu.vector_store %arg9[%c54, %c0_274], %273 {strides = array<i32>} : memref<64x128xbf16, #tpu.memory_space<vmem>>, vector<1x128xbf16>,
    %c6_275 = arith.constant 6 : index
    %c7_276 = arith.constant 7 : index
    %275 = memref.load %arg0[%c6_275, %c7_276] : memref<8x8xi32, #tpu.memory_space<smem>>
    %276 = arith.index_cast %275 : i32 to index
    %c0_277 = arith.constant 0 : index
    %c0_278 = arith.constant 0 : index
    %277 = vector.load %arg1[%276, %c0_277, %c0_278] : memref<50x1x128xbf16, #tpu.memory_space<vmem>>, vector<1x1x128xbf16>
    %278 = vector.shape_cast %277 : vector<1x1x128xbf16> to vector<1x128xbf16>
    %c55 = arith.constant 55 : index
    %c0_279 = arith.constant 0 : index
    %279 = vector.load %arg9[%c55, %c0_279] : memref<64x128xbf16, #tpu.memory_space<vmem>>, vector<1x128xbf16>
    tpu.vector_store %arg9[%c55, %c0_279], %278 {strides = array<i32>} : memref<64x128xbf16, #tpu.memory_space<vmem>>, vector<1x128xbf16>,
    %c7_280 = arith.constant 7 : index
    %c0_281 = arith.constant 0 : index
    %280 = memref.load %arg0[%c7_280, %c0_281] : memref<8x8xi32, #tpu.memory_space<smem>>
    %281 = arith.index_cast %280 : i32 to index
    %c0_282 = arith.constant 0 : index
    %c0_283 = arith.constant 0 : index
    %282 = vector.load %arg1[%281, %c0_282, %c0_283] : memref<50x1x128xbf16, #tpu.memory_space<vmem>>, vector<1x1x128xbf16>
    %283 = vector.shape_cast %282 : vector<1x1x128xbf16> to vector<1x128xbf16>
    %c56 = arith.constant 56 : index
    %c0_284 = arith.constant 0 : index
    %284 = vector.load %arg9[%c56, %c0_284] : memref<64x128xbf16, #tpu.memory_space<vmem>>, vector<1x128xbf16>
    tpu.vector_store %arg9[%c56, %c0_284], %283 {strides = array<i32>} : memref<64x128xbf16, #tpu.memory_space<vmem>>, vector<1x128xbf16>,
    %c7_285 = arith.constant 7 : index
    %c1_286 = arith.constant 1 : index
    %285 = memref.load %arg0[%c7_285, %c1_286] : memref<8x8xi32, #tpu.memory_space<smem>>
    %286 = arith.index_cast %285 : i32 to index
    %c0_287 = arith.constant 0 : index
    %c0_288 = arith.constant 0 : index
    %287 = vector.load %arg1[%286, %c0_287, %c0_288] : memref<50x1x128xbf16, #tpu.memory_space<vmem>>, vector<1x1x128xbf16>
    %288 = vector.shape_cast %287 : vector<1x1x128xbf16> to vector<1x128xbf16>
    %c57 = arith.constant 57 : index
    %c0_289 = arith.constant 0 : index
    %289 = vector.load %arg9[%c57, %c0_289] : memref<64x128xbf16, #tpu.memory_space<vmem>>, vector<1x128xbf16>
    tpu.vector_store %arg9[%c57, %c0_289], %288 {strides = array<i32>} : memref<64x128xbf16, #tpu.memory_space<vmem>>, vector<1x128xbf16>,
    %c7_290 = arith.constant 7 : index
    %c2_291 = arith.constant 2 : index
    %290 = memref.load %arg0[%c7_290, %c2_291] : memref<8x8xi32, #tpu.memory_space<smem>>
    %291 = arith.index_cast %290 : i32 to index
    %c0_292 = arith.constant 0 : index
    %c0_293 = arith.constant 0 : index
    %292 = vector.load %arg1[%291, %c0_292, %c0_293] : memref<50x1x128xbf16, #tpu.memory_space<vmem>>, vector<1x1x128xbf16>
    %293 = vector.shape_cast %292 : vector<1x1x128xbf16> to vector<1x128xbf16>
    %c58 = arith.constant 58 : index
    %c0_294 = arith.constant 0 : index
    %294 = vector.load %arg9[%c58, %c0_294] : memref<64x128xbf16, #tpu.memory_space<vmem>>, vector<1x128xbf16>
    tpu.vector_store %arg9[%c58, %c0_294], %293 {strides = array<i32>} : memref<64x128xbf16, #tpu.memory_space<vmem>>, vector<1x128xbf16>,
    %c7_295 = arith.constant 7 : index
    %c3_296 = arith.constant 3 : index
    %295 = memref.load %arg0[%c7_295, %c3_296] : memref<8x8xi32, #tpu.memory_space<smem>>
    %296 = arith.index_cast %295 : i32 to index
    %c0_297 = arith.constant 0 : index
    %c0_298 = arith.constant 0 : index
    %297 = vector.load %arg1[%296, %c0_297, %c0_298] : memref<50x1x128xbf16, #tpu.memory_space<vmem>>, vector<1x1x128xbf16>
    %298 = vector.shape_cast %297 : vector<1x1x128xbf16> to vector<1x128xbf16>
    %c59 = arith.constant 59 : index
    %c0_299 = arith.constant 0 : index
    %299 = vector.load %arg9[%c59, %c0_299] : memref<64x128xbf16, #tpu.memory_space<vmem>>, vector<1x128xbf16>
    tpu.vector_store %arg9[%c59, %c0_299], %298 {strides = array<i32>} : memref<64x128xbf16, #tpu.memory_space<vmem>>, vector<1x128xbf16>,
    %c7_300 = arith.constant 7 : index
    %c4_301 = arith.constant 4 : index
    %300 = memref.load %arg0[%c7_300, %c4_301] : memref<8x8xi32, #tpu.memory_space<smem>>
    %301 = arith.index_cast %300 : i32 to index
    %c0_302 = arith.constant 0 : index
    %c0_303 = arith.constant 0 : index
    %302 = vector.load %arg1[%301, %c0_302, %c0_303] : memref<50x1x128xbf16, #tpu.memory_space<vmem>>, vector<1x1x128xbf16>
    %303 = vector.shape_cast %302 : vector<1x1x128xbf16> to vector<1x128xbf16>
    %c60 = arith.constant 60 : index
    %c0_304 = arith.constant 0 : index
    %304 = vector.load %arg9[%c60, %c0_304] : memref<64x128xbf16, #tpu.memory_space<vmem>>, vector<1x128xbf16>
    tpu.vector_store %arg9[%c60, %c0_304], %303 {strides = array<i32>} : memref<64x128xbf16, #tpu.memory_space<vmem>>, vector<1x128xbf16>,
    %c7_305 = arith.constant 7 : index
    %c5_306 = arith.constant 5 : index
    %305 = memref.load %arg0[%c7_305, %c5_306] : memref<8x8xi32, #tpu.memory_space<smem>>
    %306 = arith.index_cast %305 : i32 to index
    %c0_307 = arith.constant 0 : index
    %c0_308 = arith.constant 0 : index
    %307 = vector.load %arg1[%306, %c0_307, %c0_308] : memref<50x1x128xbf16, #tpu.memory_space<vmem>>, vector<1x1x128xbf16>
    %308 = vector.shape_cast %307 : vector<1x1x128xbf16> to vector<1x128xbf16>
    %c61 = arith.constant 61 : index
    %c0_309 = arith.constant 0 : index
    %309 = vector.load %arg9[%c61, %c0_309] : memref<64x128xbf16, #tpu.memory_space<vmem>>, vector<1x128xbf16>
    tpu.vector_store %arg9[%c61, %c0_309], %308 {strides = array<i32>} : memref<64x128xbf16, #tpu.memory_space<vmem>>, vector<1x128xbf16>,
    %c7_310 = arith.constant 7 : index
    %c6_311 = arith.constant 6 : index
    %310 = memref.load %arg0[%c7_310, %c6_311] : memref<8x8xi32, #tpu.memory_space<smem>>
    %311 = arith.index_cast %310 : i32 to index
    %c0_312 = arith.constant 0 : index
    %c0_313 = arith.constant 0 : index
    %312 = vector.load %arg1[%311, %c0_312, %c0_313] : memref<50x1x128xbf16, #tpu.memory_space<vmem>>, vector<1x1x128xbf16>
    %313 = vector.shape_cast %312 : vector<1x1x128xbf16> to vector<1x128xbf16>
    %c62 = arith.constant 62 : index
    %c0_314 = arith.constant 0 : index
    %314 = vector.load %arg9[%c62, %c0_314] : memref<64x128xbf16, #tpu.memory_space<vmem>>, vector<1x128xbf16>
    tpu.vector_store %arg9[%c62, %c0_314], %313 {strides = array<i32>} : memref<64x128xbf16, #tpu.memory_space<vmem>>, vector<1x128xbf16>,
    %c7_315 = arith.constant 7 : index
    %c7_316 = arith.constant 7 : index
    %315 = memref.load %arg0[%c7_315, %c7_316] : memref<8x8xi32, #tpu.memory_space<smem>>
    %316 = arith.index_cast %315 : i32 to index
    %c0_317 = arith.constant 0 : index
    %c0_318 = arith.constant 0 : index
    %317 = vector.load %arg1[%316, %c0_317, %c0_318] : memref<50x1x128xbf16, #tpu.memory_space<vmem>>, vector<1x1x128xbf16>
    %318 = vector.shape_cast %317 : vector<1x1x128xbf16> to vector<1x128xbf16>
    %c63 = arith.constant 63 : index
    %c0_319 = arith.constant 0 : index
    %319 = vector.load %arg9[%c63, %c0_319] : memref<64x128xbf16, #tpu.memory_space<vmem>>, vector<1x128xbf16>
    tpu.vector_store %arg9[%c63, %c0_319], %318 {strides = array<i32>} : memref<64x128xbf16, #tpu.memory_space<vmem>>, vector<1x128xbf16>,
    %c0_320 = arith.constant 0 : index
    %c0_321 = arith.constant 0 : index
    %320 = vector.load %arg9[%c0_320, %c0_321] : memref<64x128xbf16, #tpu.memory_space<vmem>>, vector<64x128xbf16>
    %c0_322 = arith.constant 0 : index
    %c0_323 = arith.constant 0 : index
    %321 = vector.load %arg2[%c0_322, %c0_323] : memref<128x384xbf16, #tpu.memory_space<vmem>>, vector<128x384xbf16>
    %cst = arith.constant dense<0.000000e+00> : vector<64x384xf32>
    %322 = tpu.matmul %320, %321, %cst {dimension_numbers = #tpu.dot_dimension_numbers<[1], [0], [0], [1], [0, 0, 1, 1], [], []>} : vector<64x128xbf16>, vector<128x384xbf16>, vector<64x384xf32> -> vector<64x384xf32>
    %c0_324 = arith.constant 0 : index
    %c0_325 = arith.constant 0 : index
    %323 = vector.load %arg4[%c0_324, %c0_325] : memref<1x384xf32, #tpu.memory_space<vmem>>, vector<1x384xf32>
    %324 = vector.broadcast %323 : vector<1x384xf32> to vector<64x384xf32>
    %325 = arith.addf %322, %324 : vector<64x384xf32>
    %326 = arith.truncf %325 : vector<64x384xf32> to vector<64x384xbf16>
    %327 = vector.shape_cast %326 : vector<64x384xbf16> to vector<8x8x384xbf16>
    %c0_326 = arith.constant 0 : index
    %c0_327 = arith.constant 0 : index
    %c0_328 = arith.constant 0 : index
    %328 = vector.load %arg10[%c0_326, %c0_327, %c0_328] : memref<8x8x384xbf16, #tpu.memory_space<vmem>>, vector<8x8x384xbf16>
    tpu.vector_store %arg10[%c0_326, %c0_327, %c0_328], %327 {strides = array<i32>} : memref<8x8x384xbf16, #tpu.memory_space<vmem>>, vector<8x8x384xbf16>,
    %cst_329 = arith.constant 0.000000e+00 : f32
    %329 = vector.broadcast %cst_329 : f32 to vector<8x128xf32>
    %c0_i32 = arith.constant 0 : i32
    %330 = arith.index_cast %c0_i32 : i32 to index
    %c0_330 = arith.constant 0 : index
    %c0_331 = arith.constant 0 : index
    %331 = vector.load %arg10[%330, %c0_330, %c0_331] : memref<8x8x384xbf16, #tpu.memory_space<vmem>>, vector<1x8x384xbf16>
    %332 = vector.shape_cast %331 : vector<1x8x384xbf16> to vector<8x384xbf16>
    %333 = arith.extf %332 : vector<8x384xbf16> to vector<8x384xf32>
    %334 = arith.truncf %329 : vector<8x128xf32> to vector<8x128xbf16>
    %c0_332 = arith.constant 0 : index
    %c0_333 = arith.constant 0 : index
    %335 = vector.load %arg3[%c0_332, %c0_333] : memref<128x384xbf16, #tpu.memory_space<vmem>>, vector<128x384xbf16>
    %cst_334 = arith.constant dense<0.000000e+00> : vector<8x384xf32>
    %336 = tpu.matmul %334, %335, %cst_334 {dimension_numbers = #tpu.dot_dimension_numbers<[1], [0], [0], [1], [0, 0, 1, 1], [], []>} : vector<8x128xbf16>, vector<128x384xbf16>, vector<8x384xf32> -> vector<8x384xf32>
    %c0_335 = arith.constant 0 : index
    %c0_336 = arith.constant 0 : index
    %337 = vector.load %arg5[%c0_335, %c0_336] : memref<1x384xf32, #tpu.memory_space<vmem>>, vector<1x384xf32>
    %338 = vector.broadcast %337 : vector<1x384xf32> to vector<8x384xf32>
    %339 = arith.addf %336, %338 : vector<8x384xf32>
    %340 = vector.extract_strided_slice %333 {offsets = [0, 0], sizes = [8, 128], strides = [1, 1]} : vector<8x384xf32> to vector<8x128xf32>
    %341 = vector.extract_strided_slice %339 {offsets = [0, 0], sizes = [8, 128], strides = [1, 1]} : vector<8x384xf32> to vector<8x128xf32>
    %342 = arith.addf %340, %341 : vector<8x128xf32>
    %343 = arith.negf %342 : vector<8x128xf32>
    %344 = math.exp %343 : vector<8x128xf32>
    %cst_337 = arith.constant 1.000000e+00 : f32
    %345 = vector.broadcast %cst_337 : f32 to vector<8x128xf32>
    %346 = arith.addf %345, %344 : vector<8x128xf32>
    %347 = arith.divf %345, %346 : vector<8x128xf32>
    %348 = vector.extract_strided_slice %333 {offsets = [0, 128], sizes = [8, 128], strides = [1, 1]} : vector<8x384xf32> to vector<8x128xf32>
    %349 = vector.extract_strided_slice %339 {offsets = [0, 128], sizes = [8, 128], strides = [1, 1]} : vector<8x384xf32> to vector<8x128xf32>
    %350 = arith.addf %348, %349 : vector<8x128xf32>
    %351 = arith.negf %350 : vector<8x128xf32>
    %352 = math.exp %351 : vector<8x128xf32>
    %cst_338 = arith.constant 1.000000e+00 : f32
    %353 = vector.broadcast %cst_338 : f32 to vector<8x128xf32>
    %354 = arith.addf %353, %352 : vector<8x128xf32>
    %355 = arith.divf %353, %354 : vector<8x128xf32>
    %356 = vector.extract_strided_slice %333 {offsets = [0, 256], sizes = [8, 128], strides = [1, 1]} : vector<8x384xf32> to vector<8x128xf32>
    %357 = vector.extract_strided_slice %339 {offsets = [0, 256], sizes = [8, 128], strides = [1, 1]} : vector<8x384xf32> to vector<8x128xf32>
    %358 = arith.mulf %347, %357 : vector<8x128xf32>
    %359 = arith.addf %356, %358 : vector<8x128xf32>
    %360 = math.tanh %359 : vector<8x128xf32>
    %361 = arith.subf %329, %360 : vector<8x128xf32>
    %362 = arith.mulf %355, %361 : vector<8x128xf32>
    %363 = arith.addf %360, %362 : vector<8x128xf32>
    %c1_i32 = arith.constant 1 : i32
    %364 = arith.index_cast %c1_i32 : i32 to index
    %c0_339 = arith.constant 0 : index
    %c0_340 = arith.constant 0 : index
    %365 = vector.load %arg10[%364, %c0_339, %c0_340] : memref<8x8x384xbf16, #tpu.memory_space<vmem>>, vector<1x8x384xbf16>
    %366 = vector.shape_cast %365 : vector<1x8x384xbf16> to vector<8x384xbf16>
    %367 = arith.extf %366 : vector<8x384xbf16> to vector<8x384xf32>
    %368 = arith.truncf %363 : vector<8x128xf32> to vector<8x128xbf16>
    %c0_341 = arith.constant 0 : index
    %c0_342 = arith.constant 0 : index
    %369 = vector.load %arg3[%c0_341, %c0_342] : memref<128x384xbf16, #tpu.memory_space<vmem>>, vector<128x384xbf16>
    %cst_343 = arith.constant dense<0.000000e+00> : vector<8x384xf32>
    %370 = tpu.matmul %368, %369, %cst_343 {dimension_numbers = #tpu.dot_dimension_numbers<[1], [0], [0], [1], [0, 0, 1, 1], [], []>} : vector<8x128xbf16>, vector<128x384xbf16>, vector<8x384xf32> -> vector<8x384xf32>
    %c0_344 = arith.constant 0 : index
    %c0_345 = arith.constant 0 : index
    %371 = vector.load %arg5[%c0_344, %c0_345] : memref<1x384xf32, #tpu.memory_space<vmem>>, vector<1x384xf32>
    %372 = vector.broadcast %371 : vector<1x384xf32> to vector<8x384xf32>
    %373 = arith.addf %370, %372 : vector<8x384xf32>
    %374 = vector.extract_strided_slice %367 {offsets = [0, 0], sizes = [8, 128], strides = [1, 1]} : vector<8x384xf32> to vector<8x128xf32>
    %375 = vector.extract_strided_slice %373 {offsets = [0, 0], sizes = [8, 128], strides = [1, 1]} : vector<8x384xf32> to vector<8x128xf32>
    %376 = arith.addf %374, %375 : vector<8x128xf32>
    %377 = arith.negf %376 : vector<8x128xf32>
    %378 = math.exp %377 : vector<8x128xf32>
    %cst_346 = arith.constant 1.000000e+00 : f32
    %379 = vector.broadcast %cst_346 : f32 to vector<8x128xf32>
    %380 = arith.addf %379, %378 : vector<8x128xf32>
    %381 = arith.divf %379, %380 : vector<8x128xf32>
    %382 = vector.extract_strided_slice %367 {offsets = [0, 128], sizes = [8, 128], strides = [1, 1]} : vector<8x384xf32> to vector<8x128xf32>
    %383 = vector.extract_strided_slice %373 {offsets = [0, 128], sizes = [8, 128], strides = [1, 1]} : vector<8x384xf32> to vector<8x128xf32>
    %384 = arith.addf %382, %383 : vector<8x128xf32>
    %385 = arith.negf %384 : vector<8x128xf32>
    %386 = math.exp %385 : vector<8x128xf32>
    %cst_347 = arith.constant 1.000000e+00 : f32
    %387 = vector.broadcast %cst_347 : f32 to vector<8x128xf32>
    %388 = arith.addf %387, %386 : vector<8x128xf32>
    %389 = arith.divf %387, %388 : vector<8x128xf32>
    %390 = vector.extract_strided_slice %367 {offsets = [0, 256], sizes = [8, 128], strides = [1, 1]} : vector<8x384xf32> to vector<8x128xf32>
    %391 = vector.extract_strided_slice %373 {offsets = [0, 256], sizes = [8, 128], strides = [1, 1]} : vector<8x384xf32> to vector<8x128xf32>
    %392 = arith.mulf %381, %391 : vector<8x128xf32>
    %393 = arith.addf %390, %392 : vector<8x128xf32>
    %394 = math.tanh %393 : vector<8x128xf32>
    %395 = arith.subf %363, %394 : vector<8x128xf32>
    %396 = arith.mulf %389, %395 : vector<8x128xf32>
    %397 = arith.addf %394, %396 : vector<8x128xf32>
    %c2_i32 = arith.constant 2 : i32
    %398 = arith.index_cast %c2_i32 : i32 to index
    %c0_348 = arith.constant 0 : index
    %c0_349 = arith.constant 0 : index
    %399 = vector.load %arg10[%398, %c0_348, %c0_349] : memref<8x8x384xbf16, #tpu.memory_space<vmem>>, vector<1x8x384xbf16>
    %400 = vector.shape_cast %399 : vector<1x8x384xbf16> to vector<8x384xbf16>
    %401 = arith.extf %400 : vector<8x384xbf16> to vector<8x384xf32>
    %402 = arith.truncf %397 : vector<8x128xf32> to vector<8x128xbf16>
    %c0_350 = arith.constant 0 : index
    %c0_351 = arith.constant 0 : index
    %403 = vector.load %arg3[%c0_350, %c0_351] : memref<128x384xbf16, #tpu.memory_space<vmem>>, vector<128x384xbf16>
    %cst_352 = arith.constant dense<0.000000e+00> : vector<8x384xf32>
    %404 = tpu.matmul %402, %403, %cst_352 {dimension_numbers = #tpu.dot_dimension_numbers<[1], [0], [0], [1], [0, 0, 1, 1], [], []>} : vector<8x128xbf16>, vector<128x384xbf16>, vector<8x384xf32> -> vector<8x384xf32>
    %c0_353 = arith.constant 0 : index
    %c0_354 = arith.constant 0 : index
    %405 = vector.load %arg5[%c0_353, %c0_354] : memref<1x384xf32, #tpu.memory_space<vmem>>, vector<1x384xf32>
    %406 = vector.broadcast %405 : vector<1x384xf32> to vector<8x384xf32>
    %407 = arith.addf %404, %406 : vector<8x384xf32>
    %408 = vector.extract_strided_slice %401 {offsets = [0, 0], sizes = [8, 128], strides = [1, 1]} : vector<8x384xf32> to vector<8x128xf32>
    %409 = vector.extract_strided_slice %407 {offsets = [0, 0], sizes = [8, 128], strides = [1, 1]} : vector<8x384xf32> to vector<8x128xf32>
    %410 = arith.addf %408, %409 : vector<8x128xf32>
    %411 = arith.negf %410 : vector<8x128xf32>
    %412 = math.exp %411 : vector<8x128xf32>
    %cst_355 = arith.constant 1.000000e+00 : f32
    %413 = vector.broadcast %cst_355 : f32 to vector<8x128xf32>
    %414 = arith.addf %413, %412 : vector<8x128xf32>
    %415 = arith.divf %413, %414 : vector<8x128xf32>
    %416 = vector.extract_strided_slice %401 {offsets = [0, 128], sizes = [8, 128], strides = [1, 1]} : vector<8x384xf32> to vector<8x128xf32>
    %417 = vector.extract_strided_slice %407 {offsets = [0, 128], sizes = [8, 128], strides = [1, 1]} : vector<8x384xf32> to vector<8x128xf32>
    %418 = arith.addf %416, %417 : vector<8x128xf32>
    %419 = arith.negf %418 : vector<8x128xf32>
    %420 = math.exp %419 : vector<8x128xf32>
    %cst_356 = arith.constant 1.000000e+00 : f32
    %421 = vector.broadcast %cst_356 : f32 to vector<8x128xf32>
    %422 = arith.addf %421, %420 : vector<8x128xf32>
    %423 = arith.divf %421, %422 : vector<8x128xf32>
    %424 = vector.extract_strided_slice %401 {offsets = [0, 256], sizes = [8, 128], strides = [1, 1]} : vector<8x384xf32> to vector<8x128xf32>
    %425 = vector.extract_strided_slice %407 {offsets = [0, 256], sizes = [8, 128], strides = [1, 1]} : vector<8x384xf32> to vector<8x128xf32>
    %426 = arith.mulf %415, %425 : vector<8x128xf32>
    %427 = arith.addf %424, %426 : vector<8x128xf32>
    %428 = math.tanh %427 : vector<8x128xf32>
    %429 = arith.subf %397, %428 : vector<8x128xf32>
    %430 = arith.mulf %423, %429 : vector<8x128xf32>
    %431 = arith.addf %428, %430 : vector<8x128xf32>
    %c3_i32 = arith.constant 3 : i32
    %432 = arith.index_cast %c3_i32 : i32 to index
    %c0_357 = arith.constant 0 : index
    %c0_358 = arith.constant 0 : index
    %433 = vector.load %arg10[%432, %c0_357, %c0_358] : memref<8x8x384xbf16, #tpu.memory_space<vmem>>, vector<1x8x384xbf16>
    %434 = vector.shape_cast %433 : vector<1x8x384xbf16> to vector<8x384xbf16>
    %435 = arith.extf %434 : vector<8x384xbf16> to vector<8x384xf32>
    %436 = arith.truncf %431 : vector<8x128xf32> to vector<8x128xbf16>
    %c0_359 = arith.constant 0 : index
    %c0_360 = arith.constant 0 : index
    %437 = vector.load %arg3[%c0_359, %c0_360] : memref<128x384xbf16, #tpu.memory_space<vmem>>, vector<128x384xbf16>
    %cst_361 = arith.constant dense<0.000000e+00> : vector<8x384xf32>
    %438 = tpu.matmul %436, %437, %cst_361 {dimension_numbers = #tpu.dot_dimension_numbers<[1], [0], [0], [1], [0, 0, 1, 1], [], []>} : vector<8x128xbf16>, vector<128x384xbf16>, vector<8x384xf32> -> vector<8x384xf32>
    %c0_362 = arith.constant 0 : index
    %c0_363 = arith.constant 0 : index
    %439 = vector.load %arg5[%c0_362, %c0_363] : memref<1x384xf32, #tpu.memory_space<vmem>>, vector<1x384xf32>
    %440 = vector.broadcast %439 : vector<1x384xf32> to vector<8x384xf32>
    %441 = arith.addf %438, %440 : vector<8x384xf32>
    %442 = vector.extract_strided_slice %435 {offsets = [0, 0], sizes = [8, 128], strides = [1, 1]} : vector<8x384xf32> to vector<8x128xf32>
    %443 = vector.extract_strided_slice %441 {offsets = [0, 0], sizes = [8, 128], strides = [1, 1]} : vector<8x384xf32> to vector<8x128xf32>
    %444 = arith.addf %442, %443 : vector<8x128xf32>
    %445 = arith.negf %444 : vector<8x128xf32>
    %446 = math.exp %445 : vector<8x128xf32>
    %cst_364 = arith.constant 1.000000e+00 : f32
    %447 = vector.broadcast %cst_364 : f32 to vector<8x128xf32>
    %448 = arith.addf %447, %446 : vector<8x128xf32>
    %449 = arith.divf %447, %448 : vector<8x128xf32>
    %450 = vector.extract_strided_slice %435 {offsets = [0, 128], sizes = [8, 128], strides = [1, 1]} : vector<8x384xf32> to vector<8x128xf32>
    %451 = vector.extract_strided_slice %441 {offsets = [0, 128], sizes = [8, 128], strides = [1, 1]} : vector<8x384xf32> to vector<8x128xf32>
    %452 = arith.addf %450, %451 : vector<8x128xf32>
    %453 = arith.negf %452 : vector<8x128xf32>
    %454 = math.exp %453 : vector<8x128xf32>
    %cst_365 = arith.constant 1.000000e+00 : f32
    %455 = vector.broadcast %cst_365 : f32 to vector<8x128xf32>
    %456 = arith.addf %455, %454 : vector<8x128xf32>
    %457 = arith.divf %455, %456 : vector<8x128xf32>
    %458 = vector.extract_strided_slice %435 {offsets = [0, 256], sizes = [8, 128], strides = [1, 1]} : vector<8x384xf32> to vector<8x128xf32>
    %459 = vector.extract_strided_slice %441 {offsets = [0, 256], sizes = [8, 128], strides = [1, 1]} : vector<8x384xf32> to vector<8x128xf32>
    %460 = arith.mulf %449, %459 : vector<8x128xf32>
    %461 = arith.addf %458, %460 : vector<8x128xf32>
    %462 = math.tanh %461 : vector<8x128xf32>
    %463 = arith.subf %431, %462 : vector<8x128xf32>
    %464 = arith.mulf %457, %463 : vector<8x128xf32>
    %465 = arith.addf %462, %464 : vector<8x128xf32>
    %c4_i32 = arith.constant 4 : i32
    %466 = arith.index_cast %c4_i32 : i32 to index
    %c0_366 = arith.constant 0 : index
    %c0_367 = arith.constant 0 : index
    %467 = vector.load %arg10[%466, %c0_366, %c0_367] : memref<8x8x384xbf16, #tpu.memory_space<vmem>>, vector<1x8x384xbf16>
    %468 = vector.shape_cast %467 : vector<1x8x384xbf16> to vector<8x384xbf16>
    %469 = arith.extf %468 : vector<8x384xbf16> to vector<8x384xf32>
    %470 = arith.truncf %465 : vector<8x128xf32> to vector<8x128xbf16>
    %c0_368 = arith.constant 0 : index
    %c0_369 = arith.constant 0 : index
    %471 = vector.load %arg3[%c0_368, %c0_369] : memref<128x384xbf16, #tpu.memory_space<vmem>>, vector<128x384xbf16>
    %cst_370 = arith.constant dense<0.000000e+00> : vector<8x384xf32>
    %472 = tpu.matmul %470, %471, %cst_370 {dimension_numbers = #tpu.dot_dimension_numbers<[1], [0], [0], [1], [0, 0, 1, 1], [], []>} : vector<8x128xbf16>, vector<128x384xbf16>, vector<8x384xf32> -> vector<8x384xf32>
    %c0_371 = arith.constant 0 : index
    %c0_372 = arith.constant 0 : index
    %473 = vector.load %arg5[%c0_371, %c0_372] : memref<1x384xf32, #tpu.memory_space<vmem>>, vector<1x384xf32>
    %474 = vector.broadcast %473 : vector<1x384xf32> to vector<8x384xf32>
    %475 = arith.addf %472, %474 : vector<8x384xf32>
    %476 = vector.extract_strided_slice %469 {offsets = [0, 0], sizes = [8, 128], strides = [1, 1]} : vector<8x384xf32> to vector<8x128xf32>
    %477 = vector.extract_strided_slice %475 {offsets = [0, 0], sizes = [8, 128], strides = [1, 1]} : vector<8x384xf32> to vector<8x128xf32>
    %478 = arith.addf %476, %477 : vector<8x128xf32>
    %479 = arith.negf %478 : vector<8x128xf32>
    %480 = math.exp %479 : vector<8x128xf32>
    %cst_373 = arith.constant 1.000000e+00 : f32
    %481 = vector.broadcast %cst_373 : f32 to vector<8x128xf32>
    %482 = arith.addf %481, %480 : vector<8x128xf32>
    %483 = arith.divf %481, %482 : vector<8x128xf32>
    %484 = vector.extract_strided_slice %469 {offsets = [0, 128], sizes = [8, 128], strides = [1, 1]} : vector<8x384xf32> to vector<8x128xf32>
    %485 = vector.extract_strided_slice %475 {offsets = [0, 128], sizes = [8, 128], strides = [1, 1]} : vector<8x384xf32> to vector<8x128xf32>
    %486 = arith.addf %484, %485 : vector<8x128xf32>
    %487 = arith.negf %486 : vector<8x128xf32>
    %488 = math.exp %487 : vector<8x128xf32>
    %cst_374 = arith.constant 1.000000e+00 : f32
    %489 = vector.broadcast %cst_374 : f32 to vector<8x128xf32>
    %490 = arith.addf %489, %488 : vector<8x128xf32>
    %491 = arith.divf %489, %490 : vector<8x128xf32>
    %492 = vector.extract_strided_slice %469 {offsets = [0, 256], sizes = [8, 128], strides = [1, 1]} : vector<8x384xf32> to vector<8x128xf32>
    %493 = vector.extract_strided_slice %475 {offsets = [0, 256], sizes = [8, 128], strides = [1, 1]} : vector<8x384xf32> to vector<8x128xf32>
    %494 = arith.mulf %483, %493 : vector<8x128xf32>
    %495 = arith.addf %492, %494 : vector<8x128xf32>
    %496 = math.tanh %495 : vector<8x128xf32>
    %497 = arith.subf %465, %496 : vector<8x128xf32>
    %498 = arith.mulf %491, %497 : vector<8x128xf32>
    %499 = arith.addf %496, %498 : vector<8x128xf32>
    %c5_i32 = arith.constant 5 : i32
    %500 = arith.index_cast %c5_i32 : i32 to index
    %c0_375 = arith.constant 0 : index
    %c0_376 = arith.constant 0 : index
    %501 = vector.load %arg10[%500, %c0_375, %c0_376] : memref<8x8x384xbf16, #tpu.memory_space<vmem>>, vector<1x8x384xbf16>
    %502 = vector.shape_cast %501 : vector<1x8x384xbf16> to vector<8x384xbf16>
    %503 = arith.extf %502 : vector<8x384xbf16> to vector<8x384xf32>
    %504 = arith.truncf %499 : vector<8x128xf32> to vector<8x128xbf16>
    %c0_377 = arith.constant 0 : index
    %c0_378 = arith.constant 0 : index
    %505 = vector.load %arg3[%c0_377, %c0_378] : memref<128x384xbf16, #tpu.memory_space<vmem>>, vector<128x384xbf16>
    %cst_379 = arith.constant dense<0.000000e+00> : vector<8x384xf32>
    %506 = tpu.matmul %504, %505, %cst_379 {dimension_numbers = #tpu.dot_dimension_numbers<[1], [0], [0], [1], [0, 0, 1, 1], [], []>} : vector<8x128xbf16>, vector<128x384xbf16>, vector<8x384xf32> -> vector<8x384xf32>
    %c0_380 = arith.constant 0 : index
    %c0_381 = arith.constant 0 : index
    %507 = vector.load %arg5[%c0_380, %c0_381] : memref<1x384xf32, #tpu.memory_space<vmem>>, vector<1x384xf32>
    %508 = vector.broadcast %507 : vector<1x384xf32> to vector<8x384xf32>
    %509 = arith.addf %506, %508 : vector<8x384xf32>
    %510 = vector.extract_strided_slice %503 {offsets = [0, 0], sizes = [8, 128], strides = [1, 1]} : vector<8x384xf32> to vector<8x128xf32>
    %511 = vector.extract_strided_slice %509 {offsets = [0, 0], sizes = [8, 128], strides = [1, 1]} : vector<8x384xf32> to vector<8x128xf32>
    %512 = arith.addf %510, %511 : vector<8x128xf32>
    %513 = arith.negf %512 : vector<8x128xf32>
    %514 = math.exp %513 : vector<8x128xf32>
    %cst_382 = arith.constant 1.000000e+00 : f32
    %515 = vector.broadcast %cst_382 : f32 to vector<8x128xf32>
    %516 = arith.addf %515, %514 : vector<8x128xf32>
    %517 = arith.divf %515, %516 : vector<8x128xf32>
    %518 = vector.extract_strided_slice %503 {offsets = [0, 128], sizes = [8, 128], strides = [1, 1]} : vector<8x384xf32> to vector<8x128xf32>
    %519 = vector.extract_strided_slice %509 {offsets = [0, 128], sizes = [8, 128], strides = [1, 1]} : vector<8x384xf32> to vector<8x128xf32>
    %520 = arith.addf %518, %519 : vector<8x128xf32>
    %521 = arith.negf %520 : vector<8x128xf32>
    %522 = math.exp %521 : vector<8x128xf32>
    %cst_383 = arith.constant 1.000000e+00 : f32
    %523 = vector.broadcast %cst_383 : f32 to vector<8x128xf32>
    %524 = arith.addf %523, %522 : vector<8x128xf32>
    %525 = arith.divf %523, %524 : vector<8x128xf32>
    %526 = vector.extract_strided_slice %503 {offsets = [0, 256], sizes = [8, 128], strides = [1, 1]} : vector<8x384xf32> to vector<8x128xf32>
    %527 = vector.extract_strided_slice %509 {offsets = [0, 256], sizes = [8, 128], strides = [1, 1]} : vector<8x384xf32> to vector<8x128xf32>
    %528 = arith.mulf %517, %527 : vector<8x128xf32>
    %529 = arith.addf %526, %528 : vector<8x128xf32>
    %530 = math.tanh %529 : vector<8x128xf32>
    %531 = arith.subf %499, %530 : vector<8x128xf32>
    %532 = arith.mulf %525, %531 : vector<8x128xf32>
    %533 = arith.addf %530, %532 : vector<8x128xf32>
    %c6_i32 = arith.constant 6 : i32
    %534 = arith.index_cast %c6_i32 : i32 to index
    %c0_384 = arith.constant 0 : index
    %c0_385 = arith.constant 0 : index
    %535 = vector.load %arg10[%534, %c0_384, %c0_385] : memref<8x8x384xbf16, #tpu.memory_space<vmem>>, vector<1x8x384xbf16>
    %536 = vector.shape_cast %535 : vector<1x8x384xbf16> to vector<8x384xbf16>
    %537 = arith.extf %536 : vector<8x384xbf16> to vector<8x384xf32>
    %538 = arith.truncf %533 : vector<8x128xf32> to vector<8x128xbf16>
    %c0_386 = arith.constant 0 : index
    %c0_387 = arith.constant 0 : index
    %539 = vector.load %arg3[%c0_386, %c0_387] : memref<128x384xbf16, #tpu.memory_space<vmem>>, vector<128x384xbf16>
    %cst_388 = arith.constant dense<0.000000e+00> : vector<8x384xf32>
    %540 = tpu.matmul %538, %539, %cst_388 {dimension_numbers = #tpu.dot_dimension_numbers<[1], [0], [0], [1], [0, 0, 1, 1], [], []>} : vector<8x128xbf16>, vector<128x384xbf16>, vector<8x384xf32> -> vector<8x384xf32>
    %c0_389 = arith.constant 0 : index
    %c0_390 = arith.constant 0 : index
    %541 = vector.load %arg5[%c0_389, %c0_390] : memref<1x384xf32, #tpu.memory_space<vmem>>, vector<1x384xf32>
    %542 = vector.broadcast %541 : vector<1x384xf32> to vector<8x384xf32>
    %543 = arith.addf %540, %542 : vector<8x384xf32>
    %544 = vector.extract_strided_slice %537 {offsets = [0, 0], sizes = [8, 128], strides = [1, 1]} : vector<8x384xf32> to vector<8x128xf32>
    %545 = vector.extract_strided_slice %543 {offsets = [0, 0], sizes = [8, 128], strides = [1, 1]} : vector<8x384xf32> to vector<8x128xf32>
    %546 = arith.addf %544, %545 : vector<8x128xf32>
    %547 = arith.negf %546 : vector<8x128xf32>
    %548 = math.exp %547 : vector<8x128xf32>
    %cst_391 = arith.constant 1.000000e+00 : f32
    %549 = vector.broadcast %cst_391 : f32 to vector<8x128xf32>
    %550 = arith.addf %549, %548 : vector<8x128xf32>
    %551 = arith.divf %549, %550 : vector<8x128xf32>
    %552 = vector.extract_strided_slice %537 {offsets = [0, 128], sizes = [8, 128], strides = [1, 1]} : vector<8x384xf32> to vector<8x128xf32>
    %553 = vector.extract_strided_slice %543 {offsets = [0, 128], sizes = [8, 128], strides = [1, 1]} : vector<8x384xf32> to vector<8x128xf32>
    %554 = arith.addf %552, %553 : vector<8x128xf32>
    %555 = arith.negf %554 : vector<8x128xf32>
    %556 = math.exp %555 : vector<8x128xf32>
    %cst_392 = arith.constant 1.000000e+00 : f32
    %557 = vector.broadcast %cst_392 : f32 to vector<8x128xf32>
    %558 = arith.addf %557, %556 : vector<8x128xf32>
    %559 = arith.divf %557, %558 : vector<8x128xf32>
    %560 = vector.extract_strided_slice %537 {offsets = [0, 256], sizes = [8, 128], strides = [1, 1]} : vector<8x384xf32> to vector<8x128xf32>
    %561 = vector.extract_strided_slice %543 {offsets = [0, 256], sizes = [8, 128], strides = [1, 1]} : vector<8x384xf32> to vector<8x128xf32>
    %562 = arith.mulf %551, %561 : vector<8x128xf32>
    %563 = arith.addf %560, %562 : vector<8x128xf32>
    %564 = math.tanh %563 : vector<8x128xf32>
    %565 = arith.subf %533, %564 : vector<8x128xf32>
    %566 = arith.mulf %559, %565 : vector<8x128xf32>
    %567 = arith.addf %564, %566 : vector<8x128xf32>
    %c7_i32 = arith.constant 7 : i32
    %568 = arith.index_cast %c7_i32 : i32 to index
    %c0_393 = arith.constant 0 : index
    %c0_394 = arith.constant 0 : index
    %569 = vector.load %arg10[%568, %c0_393, %c0_394] : memref<8x8x384xbf16, #tpu.memory_space<vmem>>, vector<1x8x384xbf16>
    %570 = vector.shape_cast %569 : vector<1x8x384xbf16> to vector<8x384xbf16>
    %571 = arith.extf %570 : vector<8x384xbf16> to vector<8x384xf32>
    %572 = arith.truncf %567 : vector<8x128xf32> to vector<8x128xbf16>
    %c0_395 = arith.constant 0 : index
    %c0_396 = arith.constant 0 : index
    %573 = vector.load %arg3[%c0_395, %c0_396] : memref<128x384xbf16, #tpu.memory_space<vmem>>, vector<128x384xbf16>
    %cst_397 = arith.constant dense<0.000000e+00> : vector<8x384xf32>
    %574 = tpu.matmul %572, %573, %cst_397 {dimension_numbers = #tpu.dot_dimension_numbers<[1], [0], [0], [1], [0, 0, 1, 1], [], []>} : vector<8x128xbf16>, vector<128x384xbf16>, vector<8x384xf32> -> vector<8x384xf32>
    %c0_398 = arith.constant 0 : index
    %c0_399 = arith.constant 0 : index
    %575 = vector.load %arg5[%c0_398, %c0_399] : memref<1x384xf32, #tpu.memory_space<vmem>>, vector<1x384xf32>
    %576 = vector.broadcast %575 : vector<1x384xf32> to vector<8x384xf32>
    %577 = arith.addf %574, %576 : vector<8x384xf32>
    %578 = vector.extract_strided_slice %571 {offsets = [0, 0], sizes = [8, 128], strides = [1, 1]} : vector<8x384xf32> to vector<8x128xf32>
    %579 = vector.extract_strided_slice %577 {offsets = [0, 0], sizes = [8, 128], strides = [1, 1]} : vector<8x384xf32> to vector<8x128xf32>
    %580 = arith.addf %578, %579 : vector<8x128xf32>
    %581 = arith.negf %580 : vector<8x128xf32>
    %582 = math.exp %581 : vector<8x128xf32>
    %cst_400 = arith.constant 1.000000e+00 : f32
    %583 = vector.broadcast %cst_400 : f32 to vector<8x128xf32>
    %584 = arith.addf %583, %582 : vector<8x128xf32>
    %585 = arith.divf %583, %584 : vector<8x128xf32>
    %586 = vector.extract_strided_slice %571 {offsets = [0, 128], sizes = [8, 128], strides = [1, 1]} : vector<8x384xf32> to vector<8x128xf32>
    %587 = vector.extract_strided_slice %577 {offsets = [0, 128], sizes = [8, 128], strides = [1, 1]} : vector<8x384xf32> to vector<8x128xf32>
    %588 = arith.addf %586, %587 : vector<8x128xf32>
    %589 = arith.negf %588 : vector<8x128xf32>
    %590 = math.exp %589 : vector<8x128xf32>
    %cst_401 = arith.constant 1.000000e+00 : f32
    %591 = vector.broadcast %cst_401 : f32 to vector<8x128xf32>
    %592 = arith.addf %591, %590 : vector<8x128xf32>
    %593 = arith.divf %591, %592 : vector<8x128xf32>
    %594 = vector.extract_strided_slice %571 {offsets = [0, 256], sizes = [8, 128], strides = [1, 1]} : vector<8x384xf32> to vector<8x128xf32>
    %595 = vector.extract_strided_slice %577 {offsets = [0, 256], sizes = [8, 128], strides = [1, 1]} : vector<8x384xf32> to vector<8x128xf32>
    %596 = arith.mulf %585, %595 : vector<8x128xf32>
    %597 = arith.addf %594, %596 : vector<8x128xf32>
    %598 = math.tanh %597 : vector<8x128xf32>
    %599 = arith.subf %567, %598 : vector<8x128xf32>
    %600 = arith.mulf %593, %599 : vector<8x128xf32>
    %601 = arith.addf %598, %600 : vector<8x128xf32>
    %c8_i32 = arith.constant 8 : i32
    %c0_402 = arith.constant 0 : index
    %c0_403 = arith.constant 0 : index
    %602 = vector.load %arg6[%c0_402, %c0_403] : memref<1x128xf32, #tpu.memory_space<vmem>>, vector<1x128xf32>
    %603 = vector.broadcast %602 : vector<1x128xf32> to vector<8x128xf32>
    %604 = arith.mulf %601, %603 : vector<8x128xf32>
    %cst_404 = arith.constant dense<0.000000e+00> : vector<8xf32>
    %605 = vector.multi_reduction <add>, %604, %cst_404 [1] : vector<8x128xf32> to vector<8xf32>
    %606 = vector.shape_cast %605 : vector<8xf32> to vector<8x1xf32>
    %c0_405 = arith.constant 0 : index
    %c0_406 = arith.constant 0 : index
    %607 = vector.load %arg7[%c0_405, %c0_406] : memref<1x1xf32, #tpu.memory_space<vmem>>, vector<1x1xf32>
    %608 = vector.broadcast %607 : vector<1x1xf32> to vector<8x1xf32>
    %609 = arith.addf %606, %608 : vector<8x1xf32>
    %610 = vector.shape_cast %609 : vector<8x1xf32> to vector<8x1xf32>
    %611 = vector.broadcast %610 : vector<8x1xf32> to vector<8x128xf32>
    %c0_407 = arith.constant 0 : index
    %c0_408 = arith.constant 0 : index
    %612 = vector.load %arg8[%c0_407, %c0_408] : memref<8x128xf32, #tpu.memory_space<vmem>>, vector<8x128xf32>
    tpu.vector_store %arg8[%c0_407, %c0_408], %611 {strides = array<i32>} : memref<8x128xf32, #tpu.memory_space<vmem>>, vector<8x128xf32>,
    return
  }
}

</mosaic_0001>

<llo_original>
// kernel: net_forward.1
$region0: #{net_forward.1}
  #allocation0 [shape = 'u32[]', space=smem, size = 0x4, offset = 0x4, fixed_abs, tag = 'smem constant byte address 0x4 - core index']
  #allocation1 [shape = 'u32[144,128]{1,0:T(1,128)}', space=vmem, size = 0x12000, scoped, tag = 'internal scratch']
  #allocation2 [shape = 'bf16[64,128]{1,0:T(8,128)(2,1)}', space=vmem, size = 0x4000, scoped, tag = 'scratch operand']
  #allocation3 [shape = 'bf16[8,8,384]{2,1,0:T(8,128)(2,1)}', space=vmem, size = 0xc000, scoped, tag = 'scratch operand']
  #allocation4 [shape = 'f32[1,1]{1,0:T(1,128)S(1)}', space=vmem, size = 0x200, scoped, tag = 'scoped memory for net_forward.1']
  %s0 = inlined_call_operand.vmem [shape: s32[8,8], index: 0, kind: input, shape index: {}]
  %s1 = inlined_call_operand.vmem [shape: bf16[50,1,128], index: 1, kind: input, shape index: {}]
  %s2 = inlined_call_operand.hbm [shape: bf16[128,384], index: 2, kind: input, shape index: {}]
  %s3 = inlined_call_operand.hbm [shape: bf16[128,384], index: 3, kind: input, shape index: {}]
  %s4 = inlined_call_operand.vmem [shape: f32[1,384], index: 4, kind: input, shape index: {}]
  %s5 = inlined_call_operand.vmem [shape: f32[1,384], index: 5, kind: input, shape index: {}]
  %s6 = inlined_call_operand.vmem [shape: f32[1,128], index: 6, kind: input, shape index: {}]
  %s7 = inlined_call_operand.<no memory space> [shape: f32[1,1], index: 7, kind: input, shape index: {}]
  %s8 = inlined_call_operand.vmem [shape: f32[8,128], index: 8, kind: output, shape index: {}]
  %s9 = sld [smem:[#allocation0]]
  $region54: #{net_forward.1} parent=0
    _
  %s11 = ssub.s32 1, %s9
  %s12 = scalar_select 0, %s11, %s9
  %v13 = vstv %s7
  %14 = vst [vmem:[#allocation4] sm:$0x1] %v13
  $region1: #{net_forward.1} parent=0
    #allocation5 [shape = 'u8[4096]{0}', space=smem, size = 0x1000, scoped, tag = 'input window, operand 0, single buffered']
    #allocation6 [shape = 's32[1]{0}', space=sflag, size = 0x4, scoped, tag = 'scoped memory for net_forward.1']
    #allocation7 [shape = 's32[1]{0}', space=sflag, size = 0x4, scoped, tag = 'scoped memory for net_forward.1']
    #allocation8 [shape = 'u8[98304]{0}', space=vmem, size = 0x18000, scoped, tag = 'input window, operand 2, single buffered']
    #allocation9 [shape = 'u8[98304]{0}', space=vmem, size = 0x18000, scoped, tag = 'input window, operand 3, single buffered']
    #allocation10 [shape = 's32[1]{0}', space=sflag, size = 0x4, scoped, tag = 'scoped memory for net_forward.1']
    %15 = vsyncpa [#allocation7], 0
    %16 = vsyncpa [#allocation6], 0
    %17 = vsyncpa [#allocation10], 0
    // Predicated region
    $region2: #{net_forward.1} parent=1 // pred_check
      _
    $region3: #{net_forward.1} parent=1 // pred_check_branch
      %19 = sbr.rel (0) target = $region5
    $region4: #{net_forward.1} parent=1 // pred_region
      %s21 = ssub.s32 128, 128
      %22 = vsyncadd [#allocation7], %s21
      %s24 = sshll.u32 %s0, 4
      %s25 = int_to_ptr.vmem [resolvable:$true] %s24
      %27 = dma.vmem_to_smem %s25, 128, [#allocation5], [#allocation7]
    $region5: #{net_forward.1} parent=1 // pred_fallthru
      _
    // Predicated region
    $region6: #{net_forward.1} parent=1 // pred_check
      _
    $region7: #{net_forward.1} parent=1 // pred_check_branch
      %29 = sbr.rel (0) target = $region9
    $region8: #{net_forward.1} parent=1 // pred_region
      _
    $region9: #{net_forward.1} parent=1 // pred_fallthru
      _
    // Predicated region
    $region10: #{net_forward.1} parent=1 // pred_check
      _
    $region11: #{net_forward.1} parent=1 // pred_check_branch
      %31 = sbr.rel (0) target = $region13
    $region12: #{net_forward.1} parent=1 // pred_region
      %s33 = ssub.s32 3072, 3072
      %34 = vsyncadd [#allocation6], %s33
      %s35 = sshll.u32 [#allocation8], 4
      %s36 = int_to_ptr.vmem [resolvable:$true] %s35
      %41 = dma.hbm_to_vmem [thread:$0]  %s2, 3072, %s36, [#allocation6], 192, 192, 12
    $region13: #{net_forward.1} parent=1 // pred_fallthru
      _
    // Predicated region
    $region14: #{net_forward.1} parent=1 // pred_check
      _
    $region15: #{net_forward.1} parent=1 // pred_check_branch
      %43 = sbr.rel (0) target = $region17
    $region16: #{net_forward.1} parent=1 // pred_region
      %s45 = ssub.s32 3072, 3072
      %46 = vsyncadd [#allocation10], %s45
      %s47 = sshll.u32 [#allocation9], 4
      %s48 = int_to_ptr.vmem [resolvable:$true] %s47
      %53 = dma.hbm_to_vmem [thread:$0]  %s3, 3072, %s48, [#allocation10], 192, 192, 12
    $region17: #{net_forward.1} parent=1 // pred_fallthru
      _
    // Predicated region
    $region18: #{net_forward.1} parent=1 // pred_check
      _
    $region19: #{net_forward.1} parent=1 // pred_check_branch
      %55 = sbr.rel (0) target = $region21
    $region20: #{net_forward.1} parent=1 // pred_region
      _
    $region21: #{net_forward.1} parent=1 // pred_fallthru
      _
    // Predicated region
    $region22: #{net_forward.1} parent=1 // pred_check
      _
    $region23: #{net_forward.1} parent=1 // pred_check_branch
      %57 = sbr.rel (0) target = $region25
    $region24: #{net_forward.1} parent=1 // pred_region
      _
    $region25: #{net_forward.1} parent=1 // pred_fallthru
      _
    // Predicated region
    $region26: #{net_forward.1} parent=1 // pred_check
      _
    $region27: #{net_forward.1} parent=1 // pred_check_branch
      %59 = sbr.rel (0) target = $region29
    $region28: #{net_forward.1} parent=1 // pred_region
      _
    $region29: #{net_forward.1} parent=1 // pred_fallthru
      _
    // Predicated region
    $region30: #{net_forward.1} parent=1 // pred_check
      _
    $region31: #{net_forward.1} parent=1 // pred_check_branch
      %61 = sbr.rel (0) target = $region33
    $region32: #{net_forward.1} parent=1 // pred_region
      _
    $region33: #{net_forward.1} parent=1 // pred_fallthru
      _
    // Predicated region
    $region34: #{net_forward.1} parent=1 // pred_check
      _
    $region35: #{net_forward.1} parent=1 // pred_check_branch
      %63 = sbr.rel (0) target = $region37
    $region36: #{net_forward.1} parent=1 // pred_region
      %64 = dma.done [#allocation7], 128
    $region37: #{net_forward.1} parent=1 // pred_fallthru
      _
    // Predicated region
    $region38: #{net_forward.1} parent=1 // pred_check
      _
    $region39: #{net_forward.1} parent=1 // pred_check_branch
      %66 = sbr.rel (0) target = $region41
    $region40: #{net_forward.1} parent=1 // pred_region
      %67 = dma.done [#allocation6], 3072
    $region41: #{net_forward.1} parent=1 // pred_fallthru
      _
    // Predicated region
    $region42: #{net_forward.1} parent=1 // pred_check
      _
    $region43: #{net_forward.1} parent=1 // pred_check_branch
      %69 = sbr.rel (0) target = $region45
    $region44: #{net_forward.1} parent=1 // pred_region
      %70 = dma.done [#allocation10], 3072
    $region45: #{net_forward.1} parent=1 // pred_fallthru
      _
    %71 = sfence
    %s73 = sld [smem:[#allocation5]]
    %s74 = scalar_lea.vmem %s1, %s73
    %v75 = vld [vmem:[%s74] sm:$0x1]
    %vm76 = vcmask 1040384
    %vm77 = vsmask.f32 256
    %vm78 = vmand %vm76, %vm77
    %v79 = vld [vmem:[#allocation2] sm:$0x1]
    %v80 = vsel %vm78, %v75, %v79
    %81 = vst [vmem:[#allocation2] sm:$0x1] %v80
    %s82 = sld [smem:[#allocation5 + $0x1]]
    %s83 = scalar_lea.vmem %s1, %s82
    %v84 = vld [vmem:[%s83] sm:$0x1]
    %v87 = vunpack.c.l.s4 1935823168
    %v88 = vunpack.c.0.s8 %v87
    %v89 = vlaneseq
    %v90 = vshrl.u32 %v89, 7
    %v91 = vsub.s32 %v88, %v90
    %v92 = vrot.slane %v84, %v91
    %v94 = vunpack.c.l.s4 1935823168
    %v95 = vunpack.c.0.s8 %v94
    %v96 = vlaneseq
    %v97 = vshrl.u32 %v96, 7
    %v98 = vsub.s32 %v95, %v97
    %v99 = vrot.slane %v92, %v98
    %v101 = vshll.u32 %v99, 16
    %vm104 = vsmask.f32 7938
    %vm105 = vmand %vm76, %vm104
    %v106 = vld [vmem:[#allocation2] sm:$0x1]
    %v107 = vsel %vm105, %v101, %v106
    %108 = vst [vmem:[#allocation2] sm:$0x1] %v107
    %s109 = sld [smem:[#allocation5 + $0x2]]
    %s110 = scalar_lea.vmem %s1, %s109
    %v111 = vld [vmem:[%s110] sm:$0x1]
    %v114 = vunpack.c.l.s4 1935823168
    %v115 = vunpack.c.0.s8 %v114
    %v116 = vlaneseq
    %v117 = vshrl.u32 %v116, 7
    %v118 = vsub.s32 %v115, %v117
    %v119 = vrot.slane %v111, %v118
    %v120 = vcombine.low %v119, %v119
    %v122 = vunpack.c.l.s4 1935823168
    %v123 = vunpack.c.0.s8 %v122
    %v124 = vlaneseq
    %v125 = vshrl.u32 %v124, 7
    %v126 = vsub.s32 %v123, %v125
    %v127 = vrot.slane %v120, %v126
    %vm129 = vcmask 1041409
    %vm130 = vsmask.f32 1280
    %vm131 = vmand %vm129, %vm130
    %v132 = vld [vmem:[#allocation2] sm:$0x2]
    %v133 = vsel %vm131, %v127, %v132
    %134 = vst [vmem:[#allocation2] sm:$0x2] %v133
    %s135 = sld [smem:[#allocation5 + $0x3]]
    %s136 = scalar_lea.vmem %s1, %s135
    %v137 = vld [vmem:[%s136] sm:$0x1]
    %v140 = vunpack.c.l.s4 1935823168
    %v141 = vunpack.c.0.s8 %v140
    %v142 = vlaneseq
    %v143 = vshrl.u32 %v142, 7
    %v144 = vsub.s32 %v141, %v143
    %v145 = vrot.slane %v137, %v144
    %v147 = vunpack.c.l.s4 1935823168
    %v148 = vunpack.c.0.s8 %v147
    %v149 = vlaneseq
    %v150 = vshrl.u32 %v149, 7
    %v151 = vsub.s32 %v148, %v150
    %v152 = vrot.slane %v145, %v151
    %v154 = vshll.u32 %v152, 16
    %v156 = vrot.slane %v154, 7
    %vm158 = vsmask.f32 7942
    %vm159 = vmand %vm129, %vm158
    %v160 = vld [vmem:[#allocation2] sm:$0x2]
    %v161 = vsel %vm159, %v156, %v160
    %162 = vst [vmem:[#allocation2] sm:$0x2] %v161
    %s163 = sld [smem:[#allocation5 + $0x4]]
    %s164 = scalar_lea.vmem %s1, %s163
    %v165 = vld [vmem:[%s164] sm:$0x1]
    %v167 = vcombine.low %v165, %v165
    %v169 = vunpack.c.l.s4 1935823168
    %v170 = vunpack.c.0.s8 %v169
    %v171 = vlaneseq
    %v172 = vshrl.u32 %v171, 7
    %v173 = vsub.s32 %v170, %v172
    %v174 = vrot.slane %v167, %v173
    %v176 = vunpack.c.l.s4 1935823168
    %v177 = vunpack.c.0.s8 %v176
    %v178 = vlaneseq
    %v179 = vshrl.u32 %v178, 7
    %v180 = vsub.s32 %v177, %v179
    %v181 = vrot.slane %v174, %v180
    %vm183 = vcmask 1042434
    %vm184 = vsmask.f32 2304
    %vm185 = vmand %vm183, %vm184
    %v186 = vld [vmem:[#allocation2] sm:$0x4]
    %v187 = vsel %vm185, %v181, %v186
    %188 = vst [vmem:[#allocation2] sm:$0x4] %v187
    %s189 = sld [smem:[#allocation5 + $0x5]]
    %s190 = scalar_lea.vmem %s1, %s189
    %v191 = vld [vmem:[%s190] sm:$0x1]
    %v194 = vunpack.c.l.s4 1935823168
    %v195 = vunpack.c.0.s8 %v194
    %v196 = vlaneseq
    %v197 = vshrl.u32 %v196, 7
    %v198 = vsub.s32 %v195, %v197
    %v199 = vrot.slane %v191, %v198
    %v201 = vunpack.c.l.s4 1935823168
    %v202 = vunpack.c.0.s8 %v201
    %v203 = vlaneseq
    %v204 = vshrl.u32 %v203, 7
    %v205 = vsub.s32 %v202, %v204
    %v206 = vrot.slane %v199, %v205
    %v208 = vshll.u32 %v206, 16
    %v210 = vrot.slane %v208, 6
    %vm212 = vsmask.f32 7946
    %vm213 = vmand %vm183, %vm212
    %v214 = vld [vmem:[#allocation2] sm:$0x4]
    %v215 = vsel %vm213, %v210, %v214
    %216 = vst [vmem:[#allocation2] sm:$0x4] %v215
    %s217 = sld [smem:[#allocation5 + $0x6]]
    %s218 = scalar_lea.vmem %s1, %s217
    %v219 = vld [vmem:[%s218] sm:$0x1]
    %v221 = vcombine.low %v219, %v219
    %v223 = vunpack.c.l.s4 1935823168
    %v224 = vunpack.c.0.s8 %v223
    %v225 = vlaneseq
    %v226 = vshrl.u32 %v225, 7
    %v227 = vsub.s32 %v224, %v226
    %v228 = vrot.slane %v221, %v227
    %v229 = vcombine.low %v228, %v228
    %v231 = vunpack.c.l.s4 1935823168
    %v232 = vunpack.c.0.s8 %v231
    %v233 = vlaneseq
    %v234 = vshrl.u32 %v233, 7
    %v235 = vsub.s32 %v232, %v234
    %v236 = vrot.slane %v229, %v235
    %vm238 = vcmask 1043459
    %vm239 = vsmask.f32 3328
    %vm240 = vmand %vm238, %vm239
    %v241 = vld [vmem:[#allocation2] sm:$0x8]
    %v242 = vsel %vm240, %v236, %v241
    %243 = vst [vmem:[#allocation2] sm:$0x8] %v242
    %s244 = sld [smem:[#allocation5 + $0x7]]
    %s245 = scalar_lea.vmem %s1, %s244
    %v246 = vld [vmem:[%s245] sm:$0x1]
    %v249 = vunpack.c.l.s4 1935823168
    %v250 = vunpack.c.0.s8 %v249
    %v251 = vlaneseq
    %v252 = vshrl.u32 %v251, 7
    %v253 = vsub.s32 %v250, %v252
    %v254 = vrot.slane %v246, %v253
    %v256 = vunpack.c.l.s4 1935823168
    %v257 = vunpack.c.0.s8 %v256
    %v258 = vlaneseq
    %v259 = vshrl.u32 %v258, 7
    %v260 = vsub.s32 %v257, %v259
    %v261 = vrot.slane %v254, %v260
    %v263 = vshll.u32 %v261, 16
    %v265 = vrot.slane %v263, 5
    %vm267 = vsmask.f32 7950
    %vm268 = vmand %vm238, %vm267
    %v269 = vld [vmem:[#allocation2] sm:$0x8]
    %v270 = vsel %vm268, %v265, %v269
    %271 = vst [vmem:[#allocation2] sm:$0x8] %v270
    %s272 = sld [smem:[#allocation5 + $0x80]]
    %s273 = scalar_lea.vmem %s1, %s272
    %v274 = vld [vmem:[%s273] sm:$0x1]
    %v275 = vld [vmem:[#allocation2 + $0x4] sm:$0x1]
    %v276 = vsel %vm78, %v274, %v275
    %277 = vst [vmem:[#allocation2 + $0x4] sm:$0x1] %v276
    %s278 = sld [smem:[#allocation5 + $0x81]]
    %s279 = scalar_lea.vmem %s1, %s278
    %v280 = vld [vmem:[%s279] sm:$0x1]
    %v283 = vunpack.c.l.s4 1935823168
    %v284 = vunpack.c.0.s8 %v283
    %v285 = vlaneseq
    %v286 = vshrl.u32 %v285, 7
    %v287 = vsub.s32 %v284, %v286
    %v288 = vrot.slane %v280, %v287
    %v290 = vunpack.c.l.s4 1935823168
    %v291 = vunpack.c.0.s8 %v290
    %v292 = vlaneseq
    %v293 = vshrl.u32 %v292, 7
    %v294 = vsub.s32 %v291, %v293
    %v295 = vrot.slane %v288, %v294
    %v297 = vshll.u32 %v295, 16
    %v300 = vld [vmem:[#allocation2 + $0x4] sm:$0x1]
    %v301 = vsel %vm105, %v297, %v300
    %302 = vst [vmem:[#allocation2 + $0x4] sm:$0x1] %v301
    %s303 = sld [smem:[#allocation5 + $0x82]]
    %s304 = scalar_lea.vmem %s1, %s303
    %v305 = vld [vmem:[%s304] sm:$0x1]
    %v308 = vunpack.c.l.s4 1935823168
    %v309 = vunpack.c.0.s8 %v308
    %v310 = vlaneseq
    %v311 = vshrl.u32 %v310, 7
    %v312 = vsub.s32 %v309, %v311
    %v313 = vrot.slane %v305, %v312
    %v314 = vcombine.low %v313, %v313
    %v316 = vunpack.c.l.s4 1935823168
    %v317 = vunpack.c.0.s8 %v316
    %v318 = vlaneseq
    %v319 = vshrl.u32 %v318, 7
    %v320 = vsub.s32 %v317, %v319
    %v321 = vrot.slane %v314, %v320
    %v323 = vld [vmem:[#allocation2 + $0x4] sm:$0x2]
    %v324 = vsel %vm131, %v321, %v323
    %325 = vst [vmem:[#allocation2 + $0x4] sm:$0x2] %v324
    %s326 = sld [smem:[#allocation5 + $0x83]]
    %s327 = scalar_lea.vmem %s1, %s326
    %v328 = vld [vmem:[%s327] sm:$0x1]
    %v331 = vunpack.c.l.s4 1935823168
    %v332 = vunpack.c.0.s8 %v331
    %v333 = vlaneseq
    %v334 = vshrl.u32 %v333, 7
    %v335 = vsub.s32 %v332, %v334
    %v336 = vrot.slane %v328, %v335
    %v338 = vunpack.c.l.s4 1935823168
    %v339 = vunpack.c.0.s8 %v338
    %v340 = vlaneseq
    %v341 = vshrl.u32 %v340, 7
    %v342 = vsub.s32 %v339, %v341
    %v343 = vrot.slane %v336, %v342
    %v345 = vshll.u32 %v343, 16
    %v347 = vrot.slane %v345, 7
    %v349 = vld [vmem:[#allocation2 + $0x4] sm:$0x2]
    %v350 = vsel %vm159, %v347, %v349
    %351 = vst [vmem:[#allocation2 + $0x4] sm:$0x2] %v350
    %s352 = sld [smem:[#allocation5 + $0x84]]
    %s353 = scalar_lea.vmem %s1, %s352
    %v354 = vld [vmem:[%s353] sm:$0x1]
    %v356 = vcombine.low %v354, %v354
    %v358 = vunpack.c.l.s4 1935823168
    %v359 = vunpack.c.0.s8 %v358
    %v360 = vlaneseq
    %v361 = vshrl.u32 %v360, 7
    %v362 = vsub.s32 %v359, %v361
    %v363 = vrot.slane %v356, %v362
    %v365 = vunpack.c.l.s4 1935823168
    %v366 = vunpack.c.0.s8 %v365
    %v367 = vlaneseq
    %v368 = vshrl.u32 %v367, 7
    %v369 = vsub.s32 %v366, %v368
    %v370 = vrot.slane %v363, %v369
    %v372 = vld [vmem:[#allocation2 + $0x4] sm:$0x4]
    %v373 = vsel %vm185, %v370, %v372
    %374 = vst [vmem:[#allocation2 + $0x4] sm:$0x4] %v373
    %s375 = sld [smem:[#allocation5 + $0x85]]
    %s376 = scalar_lea.vmem %s1, %s375
    %v377 = vld [vmem:[%s376] sm:$0x1]
    %v380 = vunpack.c.l.s4 1935823168
    %v381 = vunpack.c.0.s8 %v380
    %v382 = vlaneseq
    %v383 = vshrl.u32 %v382, 7
    %v384 = vsub.s32 %v381, %v383
    %v385 = vrot.slane %v377, %v384
    %v387 = vunpack.c.l.s4 1935823168
    %v388 = vunpack.c.0.s8 %v387
    %v389 = vlaneseq
    %v390 = vshrl.u32 %v389, 7
    %v391 = vsub.s32 %v388, %v390
    %v392 = vrot.slane %v385, %v391
    %v394 = vshll.u32 %v392, 16
    %v396 = vrot.slane %v394, 6
    %v398 = vld [vmem:[#allocation2 + $0x4] sm:$0x4]
    %v399 = vsel %vm213, %v396, %v398
    %400 = vst [vmem:[#allocation2 + $0x4] sm:$0x4] %v399
    %s401 = sld [smem:[#allocation5 + $0x86]]
    %s402 = scalar_lea.vmem %s1, %s401
    %v403 = vld [vmem:[%s402] sm:$0x1]
    %v405 = vcombine.low %v403, %v403
    %v407 = vunpack.c.l.s4 1935823168
    %v408 = vunpack.c.0.s8 %v407
    %v409 = vlaneseq
    %v410 = vshrl.u32 %v409, 7
    %v411 = vsub.s32 %v408, %v410
    %v412 = vrot.slane %v405, %v411
    %v413 = vcombine.low %v412, %v412
    %v415 = vunpack.c.l.s4 1935823168
    %v416 = vunpack.c.0.s8 %v415
    %v417 = vlaneseq
    %v418 = vshrl.u32 %v417, 7
    %v419 = vsub.s32 %v416, %v418
    %v420 = vrot.slane %v413, %v419
    %v422 = vld [vmem:[#allocation2 + $0x4] sm:$0x8]
    %v423 = vsel %vm240, %v420, %v422
    %424 = vst [vmem:[#allocation2 + $0x4] sm:$0x8] %v423
    %s425 = sld [smem:[#allocation5 + $0x87]]
    %s426 = scalar_lea.vmem %s1, %s425
    %v427 = vld [vmem:[%s426] sm:$0x1]
    %v430 = vunpack.c.l.s4 1935823168
    %v431 = vunpack.c.0.s8 %v430
    %v432 = vlaneseq
    %v433 = vshrl.u32 %v432, 7
    %v434 = vsub.s32 %v431, %v433
    %v435 = vrot.slane %v427, %v434
    %v437 = vunpack.c.l.s4 1935823168
    %v438 = vunpack.c.0.s8 %v437
    %v439 = vlaneseq
    %v440 = vshrl.u32 %v439, 7
    %v441 = vsub.s32 %v438, %v440
    %v442 = vrot.slane %v435, %v441
    %v444 = vshll.u32 %v442, 16
    %v446 = vrot.slane %v444, 5
    %v448 = vld [vmem:[#allocation2 + $0x4] sm:$0x8]
    %v449 = vsel %vm268, %v446, %v448
    %450 = vst [vmem:[#allocation2 + $0x4] sm:$0x8] %v449
    %s451 = sld [smem:[#allocation5 + $0x100]]
    %s452 = scalar_lea.vmem %s1, %s451
    %v453 = vld [vmem:[%s452] sm:$0x1]
    %v454 = vld [vmem:[#allocation2 + $0x8] sm:$0x1]
    %v455 = vsel %vm78, %v453, %v454
    %456 = vst [vmem:[#allocation2 + $0x8] sm:$0x1] %v455
    %s457 = sld [smem:[#allocation5 + $0x101]]
    %s458 = scalar_lea.vmem %s1, %s457
    %v459 = vld [vmem:[%s458] sm:$0x1]
    %v462 = vunpack.c.l.s4 1935823168
    %v463 = vunpack.c.0.s8 %v462
    %v464 = vlaneseq
    %v465 = vshrl.u32 %v464, 7
    %v466 = vsub.s32 %v463, %v465
    %v467 = vrot.slane %v459, %v466
    %v469 = vunpack.c.l.s4 1935823168
    %v470 = vunpack.c.0.s8 %v469
    %v471 = vlaneseq
    %v472 = vshrl.u32 %v471, 7
    %v473 = vsub.s32 %v470, %v472
    %v474 = vrot.slane %v467, %v473
    %v476 = vshll.u32 %v474, 16
    %v479 = vld [vmem:[#allocation2 + $0x8] sm:$0x1]
    %v480 = vsel %vm105, %v476, %v479
    %481 = vst [vmem:[#allocation2 + $0x8] sm:$0x1] %v480
    %s482 = sld [smem:[#allocation5 + $0x102]]
    %s483 = scalar_lea.vmem %s1, %s482
    %v484 = vld [vmem:[%s483] sm:$0x1]
    %v487 = vunpack.c.l.s4 1935823168
    %v488 = vunpack.c.0.s8 %v487
    %v489 = vlaneseq
    %v490 = vshrl.u32 %v489, 7
    %v491 = vsub.s32 %v488, %v490
    %v492 = vrot.slane %v484, %v491
    %v493 = vcombine.low %v492, %v492
    %v495 = vunpack.c.l.s4 1935823168
    %v496 = vunpack.c.0.s8 %v495
    %v497 = vlaneseq
    %v498 = vshrl.u32 %v497, 7
    %v499 = vsub.s32 %v496, %v498
    %v500 = vrot.slane %v493, %v499
    %v502 = vld [vmem:[#allocation2 + $0x8] sm:$0x2]
    %v503 = vsel %vm131, %v500, %v502
    %504 = vst [vmem:[#allocation2 + $0x8] sm:$0x2] %v503
    %s505 = sld [smem:[#allocation5 + $0x103]]
    %s506 = scalar_lea.vmem %s1, %s505
    %v507 = vld [vmem:[%s506] sm:$0x1]
    %v510 = vunpack.c.l.s4 1935823168
    %v511 = vunpack.c.0.s8 %v510
    %v512 = vlaneseq
    %v513 = vshrl.u32 %v512, 7
    %v514 = vsub.s32 %v511, %v513
    %v515 = vrot.slane %v507, %v514
    %v517 = vunpack.c.l.s4 1935823168
    %v518 = vunpack.c.0.s8 %v517
    %v519 = vlaneseq
    %v520 = vshrl.u32 %v519, 7
    %v521 = vsub.s32 %v518, %v520
    %v522 = vrot.slane %v515, %v521
    %v524 = vshll.u32 %v522, 16
    %v526 = vrot.slane %v524, 7
    %v528 = vld [vmem:[#allocation2 + $0x8] sm:$0x2]
    %v529 = vsel %vm159, %v526, %v528
    %530 = vst [vmem:[#allocation2 + $0x8] sm:$0x2] %v529
    %s531 = sld [smem:[#allocation5 + $0x104]]
    %s532 = scalar_lea.vmem %s1, %s531
    %v533 = vld [vmem:[%s532] sm:$0x1]
    %v535 = vcombine.low %v533, %v533
    %v537 = vunpack.c.l.s4 1935823168
    %v538 = vunpack.c.0.s8 %v537
    %v539 = vlaneseq
    %v540 = vshrl.u32 %v539, 7
    %v541 = vsub.s32 %v538, %v540
    %v542 = vrot.slane %v535, %v541
    %v544 = vunpack.c.l.s4 1935823168
    %v545 = vunpack.c.0.s8 %v544
    %v546 = vlaneseq
    %v547 = vshrl.u32 %v546, 7
    %v548 = vsub.s32 %v545, %v547
    %v549 = vrot.slane %v542, %v548
    %v551 = vld [vmem:[#allocation2 + $0x8] sm:$0x4]
    %v552 = vsel %vm185, %v549, %v551
    %553 = vst [vmem:[#allocation2 + $0x8] sm:$0x4] %v552
    %s554 = sld [smem:[#allocation5 + $0x105]]
    %s555 = scalar_lea.vmem %s1, %s554
    %v556 = vld [vmem:[%s555] sm:$0x1]
    %v559 = vunpack.c.l.s4 1935823168
    %v560 = vunpack.c.0.s8 %v559
    %v561 = vlaneseq
    %v562 = vshrl.u32 %v561, 7
    %v563 = vsub.s32 %v560, %v562
    %v564 = vrot.slane %v556, %v563
    %v566 = vunpack.c.l.s4 1935823168
    %v567 = vunpack.c.0.s8 %v566
    %v568 = vlaneseq
    %v569 = vshrl.u32 %v568, 7
    %v570 = vsub.s32 %v567, %v569
    %v571 = vrot.slane %v564, %v570
    %v573 = vshll.u32 %v571, 16
    %v575 = vrot.slane %v573, 6
    %v577 = vld [vmem:[#allocation2 + $0x8] sm:$0x4]
    %v578 = vsel %vm213, %v575, %v577
    %579 = vst [vmem:[#allocation2 + $0x8] sm:$0x4] %v578
    %s580 = sld [smem:[#allocation5 + $0x106]]
    %s581 = scalar_lea.vmem %s1, %s580
    %v582 = vld [vmem:[%s581] sm:$0x1]
    %v584 = vcombine.low %v582, %v582
    %v586 = vunpack.c.l.s4 1935823168
    %v587 = vunpack.c.0.s8 %v586
    %v588 = vlaneseq
    %v589 = vshrl.u32 %v588, 7
    %v590 = vsub.s32 %v587, %v589
    %v591 = vrot.slane %v584, %v590
    %v592 = vcombine.low %v591, %v591
    %v594 = vunpack.c.l.s4 1935823168
    %v595 = vunpack.c.0.s8 %v594
    %v596 = vlaneseq
    %v597 = vshrl.u32 %v596, 7
    %v598 = vsub.s32 %v595, %v597
    %v599 = vrot.slane %v592, %v598
    %v601 = vld [vmem:[#allocation2 + $0x8] sm:$0x8]
    %v602 = vsel %vm240, %v599, %v601
    %603 = vst [vmem:[#allocation2 + $0x8] sm:$0x8] %v602
    %s604 = sld [smem:[#allocation5 + $0x107]]
    %s605 = scalar_lea.vmem %s1, %s604
    %v606 = vld [vmem:[%s605] sm:$0x1]
    %v609 = vunpack.c.l.s4 1935823168
    %v610 = vunpack.c.0.s8 %v609
    %v611 = vlaneseq
    %v612 = vshrl.u32 %v611, 7
    %v613 = vsub.s32 %v610, %v612
    %v614 = vrot.slane %v606, %v613
    %v616 = vunpack.c.l.s4 1935823168
    %v617 = vunpack.c.0.s8 %v616
    %v618 = vlaneseq
    %v619 = vshrl.u32 %v618, 7
    %v620 = vsub.s32 %v617, %v619
    %v621 = vrot.slane %v614, %v620
    %v623 = vshll.u32 %v621, 16
    %v625 = vrot.slane %v623, 5
    %v627 = vld [vmem:[#allocation2 + $0x8] sm:$0x8]
    %v628 = vsel %vm268, %v625, %v627
    %629 = vst [vmem:[#allocation2 + $0x8] sm:$0x8] %v628
    %s630 = sld [smem:[#allocation5 + $0x180]]
    %s631 = scalar_lea.vmem %s1, %s630
    %v632 = vld [vmem:[%s631] sm:$0x1]
    %v633 = vld [vmem:[#allocation2 + $0xc] sm:$0x1]
    %v634 = vsel %vm78, %v632, %v633
    %635 = vst [vmem:[#allocation2 + $0xc] sm:$0x1] %v634
    %s636 = sld [smem:[#allocation5 + $0x181]]
    %s637 = scalar_lea.vmem %s1, %s636
    %v638 = vld [vmem:[%s637] sm:$0x1]
    %v641 = vunpack.c.l.s4 1935823168
    %v642 = vunpack.c.0.s8 %v641
    %v643 = vlaneseq
    %v644 = vshrl.u32 %v643, 7
    %v645 = vsub.s32 %v642, %v644
    %v646 = vrot.slane %v638, %v645
    %v648 = vunpack.c.l.s4 1935823168
    %v649 = vunpack.c.0.s8 %v648
    %v650 = vlaneseq
    %v651 = vshrl.u32 %v650, 7
    %v652 = vsub.s32 %v649, %v651
    %v653 = vrot.slane %v646, %v652
    %v655 = vshll.u32 %v653, 16
    %v658 = vld [vmem:[#allocation2 + $0xc] sm:$0x1]
    %v659 = vsel %vm105, %v655, %v658
    %660 = vst [vmem:[#allocation2 + $0xc] sm:$0x1] %v659
    %s661 = sld [smem:[#allocation5 + $0x182]]
    %s662 = scalar_lea.vmem %s1, %s661
    %v663 = vld [vmem:[%s662] sm:$0x1]
    %v666 = vunpack.c.l.s4 1935823168
    %v667 = vunpack.c.0.s8 %v666
    %v668 = vlaneseq
    %v669 = vshrl.u32 %v668, 7
    %v670 = vsub.s32 %v667, %v669
    %v671 = vrot.slane %v663, %v670
    %v672 = vcombine.low %v671, %v671
    %v674 = vunpack.c.l.s4 1935823168
    %v675 = vunpack.c.0.s8 %v674
    %v676 = vlaneseq
    %v677 = vshrl.u32 %v676, 7
    %v678 = vsub.s32 %v675, %v677
    %v679 = vrot.slane %v672, %v678
    %v681 = vld [vmem:[#allocation2 + $0xc] sm:$0x2]
    %v682 = vsel %vm131, %v679, %v681
    %683 = vst [vmem:[#allocation2 + $0xc] sm:$0x2] %v682
    %s684 = sld [smem:[#allocation5 + $0x183]]
    %s685 = scalar_lea.vmem %s1, %s684
    %v686 = vld [vmem:[%s685] sm:$0x1]
    %v689 = vunpack.c.l.s4 1935823168
    %v690 = vunpack.c.0.s8 %v689
    %v691 = vlaneseq
    %v692 = vshrl.u32 %v691, 7
    %v693 = vsub.s32 %v690, %v692
    %v694 = vrot.slane %v686, %v693
    %v696 = vunpack.c.l.s4 1935823168
    %v697 = vunpack.c.0.s8 %v696
    %v698 = vlaneseq
    %v699 = vshrl.u32 %v698, 7
    %v700 = vsub.s32 %v697, %v699
    %v701 = vrot.slane %v694, %v700
    %v703 = vshll.u32 %v701, 16
    %v705 = vrot.slane %v703, 7
    %v707 = vld [vmem:[#allocation2 + $0xc] sm:$0x2]
    %v708 = vsel %vm159, %v705, %v707
    %709 = vst [vmem:[#allocation2 + $0xc] sm:$0x2] %v708
    %s710 = sld [smem:[#allocation5 + $0x184]]
    %s711 = scalar_lea.vmem %s1, %s710
    %v712 = vld [vmem:[%s711] sm:$0x1]
    %v714 = vcombine.low %v712, %v712
    %v716 = vunpack.c.l.s4 1935823168
    %v717 = vunpack.c.0.s8 %v716
    %v718 = vlaneseq
    %v719 = vshrl.u32 %v718, 7
    %v720 = vsub.s32 %v717, %v719
    %v721 = vrot.slane %v714, %v720
    %v723 = vunpack.c.l.s4 1935823168
    %v724 = vunpack.c.0.s8 %v723
    %v725 = vlaneseq
    %v726 = vshrl.u32 %v725, 7
    %v727 = vsub.s32 %v724, %v726
    %v728 = vrot.slane %v721, %v727
    %v730 = vld [vmem:[#allocation2 + $0xc] sm:$0x4]
    %v731 = vsel %vm185, %v728, %v730
    %732 = vst [vmem:[#allocation2 + $0xc] sm:$0x4] %v731
    %s733 = sld [smem:[#allocation5 + $0x185]]
    %s734 = scalar_lea.vmem %s1, %s733
    %v735 = vld [vmem:[%s734] sm:$0x1]
    %v738 = vunpack.c.l.s4 1935823168
    %v739 = vunpack.c.0.s8 %v738
    %v740 = vlaneseq
    %v741 = vshrl.u32 %v740, 7
    %v742 = vsub.s32 %v739, %v741
    %v743 = vrot.slane %v735, %v742
    %v745 = vunpack.c.l.s4 1935823168
    %v746 = vunpack.c.0.s8 %v745
    %v747 = vlaneseq
    %v748 = vshrl.u32 %v747, 7
    %v749 = vsub.s32 %v746, %v748
    %v750 = vrot.slane %v743, %v749
    %v752 = vshll.u32 %v750, 16
    %v754 = vrot.slane %v752, 6
    %v756 = vld [vmem:[#allocation2 + $0xc] sm:$0x4]
    %v757 = vsel %vm213, %v754, %v756
    %758 = vst [vmem:[#allocation2 + $0xc] sm:$0x4] %v757
    %s759 = sld [smem:[#allocation5 + $0x186]]
    %s760 = scalar_lea.vmem %s1, %s759
    %v761 = vld [vmem:[%s760] sm:$0x1]
    %v763 = vcombine.low %v761, %v761
    %v765 = vunpack.c.l.s4 1935823168
    %v766 = vunpack.c.0.s8 %v765
    %v767 = vlaneseq
    %v768 = vshrl.u32 %v767, 7
    %v769 = vsub.s32 %v766, %v768
    %v770 = vrot.slane %v763, %v769
    %v771 = vcombine.low %v770, %v770
    %v773 = vunpack.c.l.s4 1935823168
    %v774 = vunpack.c.0.s8 %v773
    %v775 = vlaneseq
    %v776 = vshrl.u32 %v775, 7
    %v777 = vsub.s32 %v774, %v776
    %v778 = vrot.slane %v771, %v777
    %v780 = vld [vmem:[#allocation2 + $0xc] sm:$0x8]
    %v781 = vsel %vm240, %v778, %v780
    %782 = vst [vmem:[#allocation2 + $0xc] sm:$0x8] %v781
    %s783 = sld [smem:[#allocation5 + $0x187]]
    %s784 = scalar_lea.vmem %s1, %s783
    %v785 = vld [vmem:[%s784] sm:$0x1]
    %v788 = vunpack.c.l.s4 1935823168
    %v789 = vunpack.c.0.s8 %v788
    %v790 = vlaneseq
    %v791 = vshrl.u32 %v790, 7
    %v792 = vsub.s32 %v789, %v791
    %v793 = vrot.slane %v785, %v792
    %v795 = vunpack.c.l.s4 1935823168
    %v796 = vunpack.c.0.s8 %v795
    %v797 = vlaneseq
    %v798 = vshrl.u32 %v797, 7
    %v799 = vsub.s32 %v796, %v798
    %v800 = vrot.slane %v793, %v799
    %v802 = vshll.u32 %v800, 16
    %v804 = vrot.slane %v802, 5
    %v806 = vld [vmem:[#allocation2 + $0xc] sm:$0x8]
    %v807 = vsel %vm268, %v804, %v806
    %808 = vst [vmem:[#allocation2 + $0xc] sm:$0x8] %v807
    %s809 = sld [smem:[#allocation5 + $0x200]]
    %s810 = scalar_lea.vmem %s1, %s809
    %v811 = vld [vmem:[%s810] sm:$0x1]
    %v812 = vld [vmem:[#allocation2 + $0x10] sm:$0x1]
    %v813 = vsel %vm78, %v811, %v812
    %814 = vst [vmem:[#allocation2 + $0x10] sm:$0x1] %v813
    %s815 = sld [smem:[#allocation5 + $0x201]]
    %s816 = scalar_lea.vmem %s1, %s815
    %v817 = vld [vmem:[%s816] sm:$0x1]
    %v820 = vunpack.c.l.s4 1935823168
    %v821 = vunpack.c.0.s8 %v820
    %v822 = vlaneseq
    %v823 = vshrl.u32 %v822, 7
    %v824 = vsub.s32 %v821, %v823
    %v825 = vrot.slane %v817, %v824
    %v827 = vunpack.c.l.s4 1935823168
    %v828 = vunpack.c.0.s8 %v827
    %v829 = vlaneseq
    %v830 = vshrl.u32 %v829, 7
    %v831 = vsub.s32 %v828, %v830
    %v832 = vrot.slane %v825, %v831
    %v834 = vshll.u32 %v832, 16
    %v837 = vld [vmem:[#allocation2 + $0x10] sm:$0x1]
    %v838 = vsel %vm105, %v834, %v837
    %839 = vst [vmem:[#allocation2 + $0x10] sm:$0x1] %v838
    %s840 = sld [smem:[#allocation5 + $0x202]]
    %s841 = scalar_lea.vmem %s1, %s840
    %v842 = vld [vmem:[%s841] sm:$0x1]
    %v845 = vunpack.c.l.s4 1935823168
    %v846 = vunpack.c.0.s8 %v845
    %v847 = vlaneseq
    %v848 = vshrl.u32 %v847, 7
    %v849 = vsub.s32 %v846, %v848
    %v850 = vrot.slane %v842, %v849
    %v851 = vcombine.low %v850, %v850
    %v853 = vunpack.c.l.s4 1935823168
    %v854 = vunpack.c.0.s8 %v853
    %v855 = vlaneseq
    %v856 = vshrl.u32 %v855, 7
    %v857 = vsub.s32 %v854, %v856
    %v858 = vrot.slane %v851, %v857
    %v860 = vld [vmem:[#allocation2 + $0x10] sm:$0x2]
    %v861 = vsel %vm131, %v858, %v860
    %862 = vst [vmem:[#allocation2 + $0x10] sm:$0x2] %v861
    %s863 = sld [smem:[#allocation5 + $0x203]]
    %s864 = scalar_lea.vmem %s1, %s863
    %v865 = vld [vmem:[%s864] sm:$0x1]
    %v868 = vunpack.c.l.s4 1935823168
    %v869 = vunpack.c.0.s8 %v868
    %v870 = vlaneseq
    %v871 = vshrl.u32 %v870, 7
    %v872 = vsub.s32 %v869, %v871
    %v873 = vrot.slane %v865, %v872
    %v875 = vunpack.c.l.s4 1935823168
    %v876 = vunpack.c.0.s8 %v875
    %v877 = vlaneseq
    %v878 = vshrl.u32 %v877, 7
    %v879 = vsub.s32 %v876, %v878
    %v880 = vrot.slane %v873, %v879
    %v882 = vshll.u32 %v880, 16
    %v884 = vrot.slane %v882, 7
    %v886 = vld [vmem:[#allocation2 + $0x10] sm:$0x2]
    %v887 = vsel %vm159, %v884, %v886
    %888 = vst [vmem:[#allocation2 + $0x10] sm:$0x2] %v887
    %s889 = sld [smem:[#allocation5 + $0x204]]
    %s890 = scalar_lea.vmem %s1, %s889
    %v891 = vld [vmem:[%s890] sm:$0x1]
    %v893 = vcombine.low %v891, %v891
    %v895 = vunpack.c.l.s4 1935823168
    %v896 = vunpack.c.0.s8 %v895
    %v897 = vlaneseq
    %v898 = vshrl.u32 %v897, 7
    %v899 = vsub.s32 %v896, %v898
    %v900 = vrot.slane %v893, %v899
    %v902 = vunpack.c.l.s4 1935823168
    %v903 = vunpack.c.0.s8 %v902
    %v904 = vlaneseq
    %v905 = vshrl.u32 %v904, 7
    %v906 = vsub.s32 %v903, %v905
    %v907 = vrot.slane %v900, %v906
    %v909 = vld [vmem:[#allocation2 + $0x10] sm:$0x4]
    %v910 = vsel %vm185, %v907, %v909
    %911 = vst [vmem:[#allocation2 + $0x10] sm:$0x4] %v910
    %s912 = sld [smem:[#allocation5 + $0x205]]
    %s913 = scalar_lea.vmem %s1, %s912
    %v914 = vld [vmem:[%s913] sm:$0x1]
    %v917 = vunpack.c.l.s4 1935823168
    %v918 = vunpack.c.0.s8 %v917
    %v919 = vlaneseq
    %v920 = vshrl.u32 %v919, 7
    %v921 = vsub.s32 %v918, %v920
    %v922 = vrot.slane %v914, %v921
    %v924 = vunpack.c.l.s4 1935823168
    %v925 = vunpack.c.0.s8 %v924
    %v926 = vlaneseq
    %v927 = vshrl.u32 %v926, 7
    %v928 = vsub.s32 %v925, %v927
    %v929 = vrot.slane %v922, %v928
    %v931 = vshll.u32 %v929, 16
    %v933 = vrot.slane %v931, 6
    %v935 = vld [vmem:[#allocation2 + $0x10] sm:$0x4]
    %v936 = vsel %vm213, %v933, %v935
    %937 = vst [vmem:[#allocation2 + $0x10] sm:$0x4] %v936
    %s938 = sld [smem:[#allocation5 + $0x206]]
    %s939 = scalar_lea.vmem %s1, %s938
    %v940 = vld [vmem:[%s939] sm:$0x1]
    %v942 = vcombine.low %v940, %v940
    %v944 = vunpack.c.l.s4 1935823168
    %v945 = vunpack.c.0.s8 %v944
    %v946 = vlaneseq
    %v947 = vshrl.u32 %v946, 7
    %v948 = vsub.s32 %v945, %v947
    %v949 = vrot.slane %v942, %v948
    %v950 = vcombine.low %v949, %v949
    %v952 = vunpack.c.l.s4 1935823168
    %v953 = vunpack.c.0.s8 %v952
    %v954 = vlaneseq
    %v955 = vshrl.u32 %v954, 7
    %v956 = vsub.s32 %v953, %v955
    %v957 = vrot.slane %v950, %v956
    %v959 = vld [vmem:[#allocation2 + $0x10] sm:$0x8]
    %v960 = vsel %vm240, %v957, %v959
    %961 = vst [vmem:[#allocation2 + $0x10] sm:$0x8] %v960
    %s962 = sld [smem:[#allocation5 + $0x207]]
    %s963 = scalar_lea.vmem %s1, %s962
    %v964 = vld [vmem:[%s963] sm:$0x1]
    %v967 = vunpack.c.l.s4 1935823168
    %v968 = vunpack.c.0.s8 %v967
    %v969 = vlaneseq
    %v970 = vshrl.u32 %v969, 7
    %v971 = vsub.s32 %v968, %v970
    %v972 = vrot.slane %v964, %v971
    %v974 = vunpack.c.l.s4 1935823168
    %v975 = vunpack.c.0.s8 %v974
    %v976 = vlaneseq
    %v977 = vshrl.u32 %v976, 7
    %v978 = vsub.s32 %v975, %v977
    %v979 = vrot.slane %v972, %v978
    %v981 = vshll.u32 %v979, 16
    %v983 = vrot.slane %v981, 5
    %v985 = vld [vmem:[#allocation2 + $0x10] sm:$0x8]
    %v986 = vsel %vm268, %v983, %v985
    %987 = vst [vmem:[#allocation2 + $0x10] sm:$0x8] %v986
    %s988 = sld [smem:[#allocation5 + $0x280]]
    %s989 = scalar_lea.vmem %s1, %s988
    %v990 = vld [vmem:[%s989] sm:$0x1]
    %v991 = vld [vmem:[#allocation2 + $0x14] sm:$0x1]
    %v992 = vsel %vm78, %v990, %v991
    %993 = vst [vmem:[#allocation2 + $0x14] sm:$0x1] %v992
    %s994 = sld [smem:[#allocation5 + $0x281]]
    %s995 = scalar_lea.vmem %s1, %s994
    %v996 = vld [vmem:[%s995] sm:$0x1]
    %v999 = vunpack.c.l.s4 1935823168
    %v1000 = vunpack.c.0.s8 %v999
    %v1001 = vlaneseq
    %v1002 = vshrl.u32 %v1001, 7
    %v1003 = vsub.s32 %v1000, %v1002
    %v1004 = vrot.slane %v996, %v1003
    %v1006 = vunpack.c.l.s4 1935823168
    %v1007 = vunpack.c.0.s8 %v1006
    %v1008 = vlaneseq
    %v1009 = vshrl.u32 %v1008, 7
    %v1010 = vsub.s32 %v1007, %v1009
    %v1011 = vrot.slane %v1004, %v1010
    %v1013 = vshll.u32 %v1011, 16
    %v1016 = vld [vmem:[#allocation2 + $0x14] sm:$0x1]
    %v1017 = vsel %vm105, %v1013, %v1016
    %1018 = vst [vmem:[#allocation2 + $0x14] sm:$0x1] %v1017
    %s1019 = sld [smem:[#allocation5 + $0x282]]
    %s1020 = scalar_lea.vmem %s1, %s1019
    %v1021 = vld [vmem:[%s1020] sm:$0x1]
    %v1024 = vunpack.c.l.s4 1935823168
    %v1025 = vunpack.c.0.s8 %v1024
    %v1026 = vlaneseq
    %v1027 = vshrl.u32 %v1026, 7
    %v1028 = vsub.s32 %v1025, %v1027
    %v1029 = vrot.slane %v1021, %v1028
    %v1030 = vcombine.low %v1029, %v1029
    %v1032 = vunpack.c.l.s4 1935823168
    %v1033 = vunpack.c.0.s8 %v1032
    %v1034 = vlaneseq
    %v1035 = vshrl.u32 %v1034, 7
    %v1036 = vsub.s32 %v1033, %v1035
    %v1037 = vrot.slane %v1030, %v1036
    %v1039 = vld [vmem:[#allocation2 + $0x14] sm:$0x2]
    %v1040 = vsel %vm131, %v1037, %v1039
    %1041 = vst [vmem:[#allocation2 + $0x14] sm:$0x2] %v1040
    %s1042 = sld [smem:[#allocation5 + $0x283]]
    %s1043 = scalar_lea.vmem %s1, %s1042
    %v1044 = vld [vmem:[%s1043] sm:$0x1]
    %v1047 = vunpack.c.l.s4 1935823168
    %v1048 = vunpack.c.0.s8 %v1047
    %v1049 = vlaneseq
    %v1050 = vshrl.u32 %v1049, 7
    %v1051 = vsub.s32 %v1048, %v1050
    %v1052 = vrot.slane %v1044, %v1051
    %v1054 = vunpack.c.l.s4 1935823168
    %v1055 = vunpack.c.0.s8 %v1054
    %v1056 = vlaneseq
    %v1057 = vshrl.u32 %v1056, 7
    %v1058 = vsub.s32 %v1055, %v1057
    %v1059 = vrot.slane %v1052, %v1058
    %v1061 = vshll.u32 %v1059, 16
    %v1063 = vrot.slane %v1061, 7
    %v1065 = vld [vmem:[#allocation2 + $0x14] sm:$0x2]
    %v1066 = vsel %vm159, %v1063, %v1065
    %1067 = vst [vmem:[#allocation2 + $0x14] sm:$0x2] %v1066
    %s1068 = sld [smem:[#allocation5 + $0x284]]
    %s1069 = scalar_lea.vmem %s1, %s1068
    %v1070 = vld [vmem:[%s1069] sm:$0x1]
    %v1072 = vcombine.low %v1070, %v1070
    %v1074 = vunpack.c.l.s4 1935823168
    %v1075 = vunpack.c.0.s8 %v1074
    %v1076 = vlaneseq
    %v1077 = vshrl.u32 %v1076, 7
    %v1078 = vsub.s32 %v1075, %v1077
    %v1079 = vrot.slane %v1072, %v1078
    %v1081 = vunpack.c.l.s4 1935823168
    %v1082 = vunpack.c.0.s8 %v1081
    %v1083 = vlaneseq
    %v1084 = vshrl.u32 %v1083, 7
    %v1085 = vsub.s32 %v1082, %v1084
    %v1086 = vrot.slane %v1079, %v1085
    %v1088 = vld [vmem:[#allocation2 + $0x14] sm:$0x4]
    %v1089 = vsel %vm185, %v1086, %v1088
    %1090 = vst [vmem:[#allocation2 + $0x14] sm:$0x4] %v1089
    %s1091 = sld [smem:[#allocation5 + $0x285]]
    %s1092 = scalar_lea.vmem %s1, %s1091
    %v1093 = vld [vmem:[%s1092] sm:$0x1]
    %v1096 = vunpack.c.l.s4 1935823168
    %v1097 = vunpack.c.0.s8 %v1096
    %v1098 = vlaneseq
    %v1099 = vshrl.u32 %v1098, 7
    %v1100 = vsub.s32 %v1097, %v1099
    %v1101 = vrot.slane %v1093, %v1100
    %v1103 = vunpack.c.l.s4 1935823168
    %v1104 = vunpack.c.0.s8 %v1103
    %v1105 = vlaneseq
    %v1106 = vshrl.u32 %v1105, 7
    %v1107 = vsub.s32 %v1104, %v1106
    %v1108 = vrot.slane %v1101, %v1107
    %v1110 = vshll.u32 %v1108, 16
    %v1112 = vrot.slane %v1110, 6
    %v1114 = vld [vmem:[#allocation2 + $0x14] sm:$0x4]
    %v1115 = vsel %vm213, %v1112, %v1114
    %1116 = vst [vmem:[#allocation2 + $0x14] sm:$0x4] %v1115
    %s1117 = sld [smem:[#allocation5 + $0x286]]
    %s1118 = scalar_lea.vmem %s1, %s1117
    %v1119 = vld [vmem:[%s1118] sm:$0x1]
    %v1121 = vcombine.low %v1119, %v1119
    %v1123 = vunpack.c.l.s4 1935823168
    %v1124 = vunpack.c.0.s8 %v1123
    %v1125 = vlaneseq
    %v1126 = vshrl.u32 %v1125, 7
    %v1127 = vsub.s32 %v1124, %v1126
    %v1128 = vrot.slane %v1121, %v1127
    %v1129 = vcombine.low %v1128, %v1128
    %v1131 = vunpack.c.l.s4 1935823168
    %v1132 = vunpack.c.0.s8 %v1131
    %v1133 = vlaneseq
    %v1134 = vshrl.u32 %v1133, 7
    %v1135 = vsub.s32 %v1132, %v1134
    %v1136 = vrot.slane %v1129, %v1135
    %v1138 = vld [vmem:[#allocation2 + $0x14] sm:$0x8]
    %v1139 = vsel %vm240, %v1136, %v1138
    %1140 = vst [vmem:[#allocation2 + $0x14] sm:$0x8] %v1139
    %s1141 = sld [smem:[#allocation5 + $0x287]]
    %s1142 = scalar_lea.vmem %s1, %s1141
    %v1143 = vld [vmem:[%s1142] sm:$0x1]
    %v1146 = vunpack.c.l.s4 1935823168
    %v1147 = vunpack.c.0.s8 %v1146
    %v1148 = vlaneseq
    %v1149 = vshrl.u32 %v1148, 7
    %v1150 = vsub.s32 %v1147, %v1149
    %v1151 = vrot.slane %v1143, %v1150
    %v1153 = vunpack.c.l.s4 1935823168
    %v1154 = vunpack.c.0.s8 %v1153
    %v1155 = vlaneseq
    %v1156 = vshrl.u32 %v1155, 7
    %v1157 = vsub.s32 %v1154, %v1156
    %v1158 = vrot.slane %v1151, %v1157
    %v1160 = vshll.u32 %v1158, 16
    %v1162 = vrot.slane %v1160, 5
    %v1164 = vld [vmem:[#allocation2 + $0x14] sm:$0x8]
    %v1165 = vsel %vm268, %v1162, %v1164
    %1166 = vst [vmem:[#allocation2 + $0x14] sm:$0x8] %v1165
    %s1167 = sld [smem:[#allocation5 + $0x300]]
    %s1168 = scalar_lea.vmem %s1, %s1167
    %v1169 = vld [vmem:[%s1168] sm:$0x1]
    %v1170 = vld [vmem:[#allocation2 + $0x18] sm:$0x1]
    %v1171 = vsel %vm78, %v1169, %v1170
    %1172 = vst [vmem:[#allocation2 + $0x18] sm:$0x1] %v1171
    %s1173 = sld [smem:[#allocation5 + $0x301]]
    %s1174 = scalar_lea.vmem %s1, %s1173
    %v1175 = vld [vmem:[%s1174] sm:$0x1]
    %v1178 = vunpack.c.l.s4 1935823168
    %v1179 = vunpack.c.0.s8 %v1178
    %v1180 = vlaneseq
    %v1181 = vshrl.u32 %v1180, 7
    %v1182 = vsub.s32 %v1179, %v1181
    %v1183 = vrot.slane %v1175, %v1182
    %v1185 = vunpack.c.l.s4 1935823168
    %v1186 = vunpack.c.0.s8 %v1185
    %v1187 = vlaneseq
    %v1188 = vshrl.u32 %v1187, 7
    %v1189 = vsub.s32 %v1186, %v1188
    %v1190 = vrot.slane %v1183, %v1189
    %v1192 = vshll.u32 %v1190, 16
    %v1195 = vld [vmem:[#allocation2 + $0x18] sm:$0x1]
    %v1196 = vsel %vm105, %v1192, %v1195
    %1197 = vst [vmem:[#allocation2 + $0x18] sm:$0x1] %v1196
    %s1198 = sld [smem:[#allocation5 + $0x302]]
    %s1199 = scalar_lea.vmem %s1, %s1198
    %v1200 = vld [vmem:[%s1199] sm:$0x1]
    %v1203 = vunpack.c.l.s4 1935823168
    %v1204 = vunpack.c.0.s8 %v1203
    %v1205 = vlaneseq
    %v1206 = vshrl.u32 %v1205, 7
    %v1207 = vsub.s32 %v1204, %v1206
    %v1208 = vrot.slane %v1200, %v1207
    %v1209 = vcombine.low %v1208, %v1208
    %v1211 = vunpack.c.l.s4 1935823168
    %v1212 = vunpack.c.0.s8 %v1211
    %v1213 = vlaneseq
    %v1214 = vshrl.u32 %v1213, 7
    %v1215 = vsub.s32 %v1212, %v1214
    %v1216 = vrot.slane %v1209, %v1215
    %v1218 = vld [vmem:[#allocation2 + $0x18] sm:$0x2]
    %v1219 = vsel %vm131, %v1216, %v1218
    %1220 = vst [vmem:[#allocation2 + $0x18] sm:$0x2] %v1219
    %s1221 = sld [smem:[#allocation5 + $0x303]]
    %s1222 = scalar_lea.vmem %s1, %s1221
    %v1223 = vld [vmem:[%s1222] sm:$0x1]
    %v1226 = vunpack.c.l.s4 1935823168
    %v1227 = vunpack.c.0.s8 %v1226
    %v1228 = vlaneseq
    %v1229 = vshrl.u32 %v1228, 7
    %v1230 = vsub.s32 %v1227, %v1229
    %v1231 = vrot.slane %v1223, %v1230
    %v1233 = vunpack.c.l.s4 1935823168
    %v1234 = vunpack.c.0.s8 %v1233
    %v1235 = vlaneseq
    %v1236 = vshrl.u32 %v1235, 7
    %v1237 = vsub.s32 %v1234, %v1236
    %v1238 = vrot.slane %v1231, %v1237
    %v1240 = vshll.u32 %v1238, 16
    %v1242 = vrot.slane %v1240, 7
    %v1244 = vld [vmem:[#allocation2 + $0x18] sm:$0x2]
    %v1245 = vsel %vm159, %v1242, %v1244
    %1246 = vst [vmem:[#allocation2 + $0x18] sm:$0x2] %v1245
    %s1247 = sld [smem:[#allocation5 + $0x304]]
    %s1248 = scalar_lea.vmem %s1, %s1247
    %v1249 = vld [vmem:[%s1248] sm:$0x1]
    %v1251 = vcombine.low %v1249, %v1249
    %v1253 = vunpack.c.l.s4 1935823168
    %v1254 = vunpack.c.0.s8 %v1253
    %v1255 = vlaneseq
    %v1256 = vshrl.u32 %v1255, 7
    %v1257 = vsub.s32 %v1254, %v1256
    %v1258 = vrot.slane %v1251, %v1257
    %v1260 = vunpack.c.l.s4 1935823168
    %v1261 = vunpack.c.0.s8 %v1260
    %v1262 = vlaneseq
    %v1263 = vshrl.u32 %v1262, 7
    %v1264 = vsub.s32 %v1261, %v1263
    %v1265 = vrot.slane %v1258, %v1264
    %v1267 = vld [vmem:[#allocation2 + $0x18] sm:$0x4]
    %v1268 = vsel %vm185, %v1265, %v1267
    %1269 = vst [vmem:[#allocation2 + $0x18] sm:$0x4] %v1268
    %s1270 = sld [smem:[#allocation5 + $0x305]]
    %s1271 = scalar_lea.vmem %s1, %s1270
    %v1272 = vld [vmem:[%s1271] sm:$0x1]
    %v1275 = vunpack.c.l.s4 1935823168
    %v1276 = vunpack.c.0.s8 %v1275
    %v1277 = vlaneseq
    %v1278 = vshrl.u32 %v1277, 7
    %v1279 = vsub.s32 %v1276, %v1278
    %v1280 = vrot.slane %v1272, %v1279
    %v1282 = vunpack.c.l.s4 1935823168
    %v1283 = vunpack.c.0.s8 %v1282
    %v1284 = vlaneseq
    %v1285 = vshrl.u32 %v1284, 7
    %v1286 = vsub.s32 %v1283, %v1285
    %v1287 = vrot.slane %v1280, %v1286
    %v1289 = vshll.u32 %v1287, 16
    %v1291 = vrot.slane %v1289, 6
    %v1293 = vld [vmem:[#allocation2 + $0x18] sm:$0x4]
    %v1294 = vsel %vm213, %v1291, %v1293
    %1295 = vst [vmem:[#allocation2 + $0x18] sm:$0x4] %v1294
    %s1296 = sld [smem:[#allocation5 + $0x306]]
    %s1297 = scalar_lea.vmem %s1, %s1296
    %v1298 = vld [vmem:[%s1297] sm:$0x1]
    %v1300 = vcombine.low %v1298, %v1298
    %v1302 = vunpack.c.l.s4 1935823168
    %v1303 = vunpack.c.0.s8 %v1302
    %v1304 = vlaneseq
    %v1305 = vshrl.u32 %v1304, 7
    %v1306 = vsub.s32 %v1303, %v1305
    %v1307 = vrot.slane %v1300, %v1306
    %v1308 = vcombine.low %v1307, %v1307
    %v1310 = vunpack.c.l.s4 1935823168
    %v1311 = vunpack.c.0.s8 %v1310
    %v1312 = vlaneseq
    %v1313 = vshrl.u32 %v1312, 7
    %v1314 = vsub.s32 %v1311, %v1313
    %v1315 = vrot.slane %v1308, %v1314
    %v1317 = vld [vmem:[#allocation2 + $0x18] sm:$0x8]
    %v1318 = vsel %vm240, %v1315, %v1317
    %1319 = vst [vmem:[#allocation2 + $0x18] sm:$0x8] %v1318
    %s1320 = sld [smem:[#allocation5 + $0x307]]
    %s1321 = scalar_lea.vmem %s1, %s1320
    %v1322 = vld [vmem:[%s1321] sm:$0x1]
    %v1325 = vunpack.c.l.s4 1935823168
    %v1326 = vunpack.c.0.s8 %v1325
    %v1327 = vlaneseq
    %v1328 = vshrl.u32 %v1327, 7
    %v1329 = vsub.s32 %v1326, %v1328
    %v1330 = vrot.slane %v1322, %v1329
    %v1332 = vunpack.c.l.s4 1935823168
    %v1333 = vunpack.c.0.s8 %v1332
    %v1334 = vlaneseq
    %v1335 = vshrl.u32 %v1334, 7
    %v1336 = vsub.s32 %v1333, %v1335
    %v1337 = vrot.slane %v1330, %v1336
    %v1339 = vshll.u32 %v1337, 16
    %v1341 = vrot.slane %v1339, 5
    %v1343 = vld [vmem:[#allocation2 + $0x18] sm:$0x8]
    %v1344 = vsel %vm268, %v1341, %v1343
    %1345 = vst [vmem:[#allocation2 + $0x18] sm:$0x8] %v1344
    %s1346 = sld [smem:[#allocation5 + $0x380]]
    %s1347 = scalar_lea.vmem %s1, %s1346
    %v1348 = vld [vmem:[%s1347] sm:$0x1]
    %v1349 = vld [vmem:[#allocation2 + $0x1c] sm:$0x1]
    %v1350 = vsel %vm78, %v1348, %v1349
    %1351 = vst [vmem:[#allocation2 + $0x1c] sm:$0x1] %v1350
    %s1352 = sld [smem:[#allocation5 + $0x381]]
    %s1353 = scalar_lea.vmem %s1, %s1352
    %v1354 = vld [vmem:[%s1353] sm:$0x1]
    %v1357 = vunpack.c.l.s4 1935823168
    %v1358 = vunpack.c.0.s8 %v1357
    %v1359 = vlaneseq
    %v1360 = vshrl.u32 %v1359, 7
    %v1361 = vsub.s32 %v1358, %v1360
    %v1362 = vrot.slane %v1354, %v1361
    %v1364 = vunpack.c.l.s4 1935823168
    %v1365 = vunpack.c.0.s8 %v1364
    %v1366 = vlaneseq
    %v1367 = vshrl.u32 %v1366, 7
    %v1368 = vsub.s32 %v1365, %v1367
    %v1369 = vrot.slane %v1362, %v1368
    %v1371 = vshll.u32 %v1369, 16
    %v1374 = vld [vmem:[#allocation2 + $0x1c] sm:$0x1]
    %v1375 = vsel %vm105, %v1371, %v1374
    %1376 = vst [vmem:[#allocation2 + $0x1c] sm:$0x1] %v1375
    %s1377 = sld [smem:[#allocation5 + $0x382]]
    %s1378 = scalar_lea.vmem %s1, %s1377
    %v1379 = vld [vmem:[%s1378] sm:$0x1]
    %v1382 = vunpack.c.l.s4 1935823168
    %v1383 = vunpack.c.0.s8 %v1382
    %v1384 = vlaneseq
    %v1385 = vshrl.u32 %v1384, 7
    %v1386 = vsub.s32 %v1383, %v1385
    %v1387 = vrot.slane %v1379, %v1386
    %v1388 = vcombine.low %v1387, %v1387
    %v1390 = vunpack.c.l.s4 1935823168
    %v1391 = vunpack.c.0.s8 %v1390
    %v1392 = vlaneseq
    %v1393 = vshrl.u32 %v1392, 7
    %v1394 = vsub.s32 %v1391, %v1393
    %v1395 = vrot.slane %v1388, %v1394
    %v1397 = vld [vmem:[#allocation2 + $0x1c] sm:$0x2]
    %v1398 = vsel %vm131, %v1395, %v1397
    %1399 = vst [vmem:[#allocation2 + $0x1c] sm:$0x2] %v1398
    %s1400 = sld [smem:[#allocation5 + $0x383]]
    %s1401 = scalar_lea.vmem %s1, %s1400
    %v1402 = vld [vmem:[%s1401] sm:$0x1]
    %v1405 = vunpack.c.l.s4 1935823168
    %v1406 = vunpack.c.0.s8 %v1405
    %v1407 = vlaneseq
    %v1408 = vshrl.u32 %v1407, 7
    %v1409 = vsub.s32 %v1406, %v1408
    %v1410 = vrot.slane %v1402, %v1409
    %v1412 = vunpack.c.l.s4 1935823168
    %v1413 = vunpack.c.0.s8 %v1412
    %v1414 = vlaneseq
    %v1415 = vshrl.u32 %v1414, 7
    %v1416 = vsub.s32 %v1413, %v1415
    %v1417 = vrot.slane %v1410, %v1416
    %v1419 = vshll.u32 %v1417, 16
    %v1421 = vrot.slane %v1419, 7
    %v1423 = vld [vmem:[#allocation2 + $0x1c] sm:$0x2]
    %v1424 = vsel %vm159, %v1421, %v1423
    %1425 = vst [vmem:[#allocation2 + $0x1c] sm:$0x2] %v1424
    %s1426 = sld [smem:[#allocation5 + $0x384]]
    %s1427 = scalar_lea.vmem %s1, %s1426
    %v1428 = vld [vmem:[%s1427] sm:$0x1]
    %v1430 = vcombine.low %v1428, %v1428
    %v1432 = vunpack.c.l.s4 1935823168
    %v1433 = vunpack.c.0.s8 %v1432
    %v1434 = vlaneseq
    %v1435 = vshrl.u32 %v1434, 7
    %v1436 = vsub.s32 %v1433, %v1435
    %v1437 = vrot.slane %v1430, %v1436
    %v1439 = vunpack.c.l.s4 1935823168
    %v1440 = vunpack.c.0.s8 %v1439
    %v1441 = vlaneseq
    %v1442 = vshrl.u32 %v1441, 7
    %v1443 = vsub.s32 %v1440, %v1442
    %v1444 = vrot.slane %v1437, %v1443
    %v1446 = vld [vmem:[#allocation2 + $0x1c] sm:$0x4]
    %v1447 = vsel %vm185, %v1444, %v1446
    %1448 = vst [vmem:[#allocation2 + $0x1c] sm:$0x4] %v1447
    %s1449 = sld [smem:[#allocation5 + $0x385]]
    %s1450 = scalar_lea.vmem %s1, %s1449
    %v1451 = vld [vmem:[%s1450] sm:$0x1]
    %v1454 = vunpack.c.l.s4 1935823168
    %v1455 = vunpack.c.0.s8 %v1454
    %v1456 = vlaneseq
    %v1457 = vshrl.u32 %v1456, 7
    %v1458 = vsub.s32 %v1455, %v1457
    %v1459 = vrot.slane %v1451, %v1458
    %v1461 = vunpack.c.l.s4 1935823168
    %v1462 = vunpack.c.0.s8 %v1461
    %v1463 = vlaneseq
    %v1464 = vshrl.u32 %v1463, 7
    %v1465 = vsub.s32 %v1462, %v1464
    %v1466 = vrot.slane %v1459, %v1465
    %v1468 = vshll.u32 %v1466, 16
    %v1470 = vrot.slane %v1468, 6
    %v1472 = vld [vmem:[#allocation2 + $0x1c] sm:$0x4]
    %v1473 = vsel %vm213, %v1470, %v1472
    %1474 = vst [vmem:[#allocation2 + $0x1c] sm:$0x4] %v1473
    %s1475 = sld [smem:[#allocation5 + $0x386]]
    %s1476 = scalar_lea.vmem %s1, %s1475
    %v1477 = vld [vmem:[%s1476] sm:$0x1]
    %v1479 = vcombine.low %v1477, %v1477
    %v1481 = vunpack.c.l.s4 1935823168
    %v1482 = vunpack.c.0.s8 %v1481
    %v1483 = vlaneseq
    %v1484 = vshrl.u32 %v1483, 7
    %v1485 = vsub.s32 %v1482, %v1484
    %v1486 = vrot.slane %v1479, %v1485
    %v1487 = vcombine.low %v1486, %v1486
    %v1489 = vunpack.c.l.s4 1935823168
    %v1490 = vunpack.c.0.s8 %v1489
    %v1491 = vlaneseq
    %v1492 = vshrl.u32 %v1491, 7
    %v1493 = vsub.s32 %v1490, %v1492
    %v1494 = vrot.slane %v1487, %v1493
    %v1496 = vld [vmem:[#allocation2 + $0x1c] sm:$0x8]
    %v1497 = vsel %vm240, %v1494, %v1496
    %1498 = vst [vmem:[#allocation2 + $0x1c] sm:$0x8] %v1497
    %s1499 = sld [smem:[#allocation5 + $0x387]]
    %s1500 = scalar_lea.vmem %s1, %s1499
    %v1501 = vld [vmem:[%s1500] sm:$0x1]
    %v1504 = vunpack.c.l.s4 1935823168
    %v1505 = vunpack.c.0.s8 %v1504
    %v1506 = vlaneseq
    %v1507 = vshrl.u32 %v1506, 7
    %v1508 = vsub.s32 %v1505, %v1507
    %v1509 = vrot.slane %v1501, %v1508
    %v1511 = vunpack.c.l.s4 1935823168
    %v1512 = vunpack.c.0.s8 %v1511
    %v1513 = vlaneseq
    %v1514 = vshrl.u32 %v1513, 7
    %v1515 = vsub.s32 %v1512, %v1514
    %v1516 = vrot.slane %v1509, %v1515
    %v1518 = vshll.u32 %v1516, 16
    %v1520 = vrot.slane %v1518, 5
    %v1522 = vld [vmem:[#allocation2 + $0x1c] sm:$0x8]
    %v1523 = vsel %vm268, %v1520, %v1522
    %1524 = vst [vmem:[#allocation2 + $0x1c] sm:$0x8] %v1523
    %v1525 = vld [vmem:[#allocation2] sm:$0xf]
    %v1526 = vld [vmem:[#allocation2 + $0x4] sm:$0xf]
    %v1527 = vld [vmem:[#allocation2 + $0x8] sm:$0xf]
    %v1528 = vld [vmem:[#allocation2 + $0xc] sm:$0xf]
    %v1529 = vld [vmem:[#allocation2 + $0x10] sm:$0xf]
    %v1530 = vld [vmem:[#allocation2 + $0x14] sm:$0xf]
    %v1531 = vld [vmem:[#allocation2 + $0x18] sm:$0xf]
    %v1532 = vld [vmem:[#allocation2 + $0x1c] sm:$0xf]
    %v1533 = vld [vmem:[#allocation8] sm:$0xff]
    %v1534 = vld [vmem:[#allocation8 + $0x8] sm:$0xf]
    %v1535 = vld [vmem:[#allocation8 + $0xc] sm:$0xff]
    %v1536 = vld [vmem:[#allocation8 + $0x14] sm:$0xf]
    %v1537 = vld [vmem:[#allocation8 + $0x18] sm:$0xff]
    %v1538 = vld [vmem:[#allocation8 + $0x20] sm:$0xf]
    %v1539 = vld [vmem:[#allocation8 + $0x24] sm:$0xff]
    %v1540 = vld [vmem:[#allocation8 + $0x2c] sm:$0xf]
    %v1541 = vld [vmem:[#allocation8 + $0x30] sm:$0xff]
    %v1542 = vld [vmem:[#allocation8 + $0x38] sm:$0xf]
    %v1543 = vld [vmem:[#allocation8 + $0x3c] sm:$0xff]
    %v1544 = vld [vmem:[#allocation8 + $0x44] sm:$0xf]
    %v1545 = vld [vmem:[#allocation8 + $0x48] sm:$0xff]
    %v1546 = vld [vmem:[#allocation8 + $0x50] sm:$0xf]
    %v1547 = vld [vmem:[#allocation8 + $0x54] sm:$0xff]
    %v1548 = vld [vmem:[#allocation8 + $0x5c] sm:$0xf]
    %v1549 = vld [vmem:[#allocation8 + $0x60] sm:$0xff]
    %v1550 = vld [vmem:[#allocation8 + $0x68] sm:$0xf]
    %v1551 = vld [vmem:[#allocation8 + $0x6c] sm:$0xff]
    %v1552 = vld [vmem:[#allocation8 + $0x74] sm:$0xf]
    %v1553 = vld [vmem:[#allocation8 + $0x78] sm:$0xff]
    %v1554 = vld [vmem:[#allocation8 + $0x80] sm:$0xf]
    %v1555 = vld [vmem:[#allocation8 + $0x84] sm:$0xff]
    %v1556 = vld [vmem:[#allocation8 + $0x8c] sm:$0xf]
    %v1557 = vld [vmem:[#allocation8 + $0x90] sm:$0xff]
    %v1558 = vld [vmem:[#allocation8 + $0x98] sm:$0xf]
    %v1559 = vld [vmem:[#allocation8 + $0x9c] sm:$0xff]
    %v1560 = vld [vmem:[#allocation8 + $0xa4] sm:$0xf]
    %v1561 = vld [vmem:[#allocation8 + $0xa8] sm:$0xff]
    %v1562 = vld [vmem:[#allocation8 + $0xb0] sm:$0xf]
    %v1563 = vld [vmem:[#allocation8 + $0xb4] sm:$0xff]
    %v1564 = vld [vmem:[#allocation8 + $0xbc] sm:$0xf]
    %v1565 = vld [vmem:[%s4] sm:$0x7]
    %v1567 = vlaneseq
    %v1568 = vshrl.u32 %v1567, 7
    %v1569 = vsub.s32 0, %v1568
    %v1570 = vrot.slane %v1565, %v1569
    %v1571 = vlaneseq
    %v1572 = vshrl.u32 %v1571, 7
    %v1573 = vsub.s32 1, %v1572
    %v1574 = vrot.slane %v1565, %v1573
    %v1575 = vlaneseq
    %v1576 = vshrl.u32 %v1575, 7
    %v1577 = vsub.s32 2, %v1576
    %v1578 = vrot.slane %v1565, %v1577
    %v1590 = vunpack.c.l.b16 %v1525
    %v1591 = vunpack.c.l.b16 %v1526
    %v1592 = vunpack.c.l.b16 %v1527
    %v1593 = vunpack.c.l.b16 %v1528
    %v1594 = vunpack.c.l.b16 %v1529
    %v1595 = vunpack.c.l.b16 %v1530
    %v1596 = vunpack.c.l.b16 %v1531
    %v1597 = vunpack.c.l.b16 %v1532
    %v1598 = vpack.c.b16 %v1591, %v1590
    %v1599 = vpack.c.b16 %v1593, %v1592
    %v1600 = vpack.c.b16 %v1595, %v1594
    %v1601 = vpack.c.b16 %v1597, %v1596
    %v1638 = vunpack.c.l.b16 %v1533
    %v1639 = vunpack.c.h.b16 %v1533
    %v1640 = vunpack.c.l.b16 %v1534
    %v1641 = vunpack.c.l.b16 %v1535
    %v1642 = vunpack.c.h.b16 %v1535
    %v1643 = vunpack.c.l.b16 %v1536
    %v1644 = vunpack.c.l.b16 %v1537
    %v1645 = vunpack.c.h.b16 %v1537
    %v1646 = vunpack.c.l.b16 %v1538
    %v1647 = vunpack.c.l.b16 %v1539
    %v1648 = vunpack.c.h.b16 %v1539
    %v1649 = vunpack.c.l.b16 %v1540
    %v1650 = vunpack.c.l.b16 %v1541
    %v1651 = vunpack.c.h.b16 %v1541
    %v1652 = vunpack.c.l.b16 %v1542
    %v1653 = vunpack.c.l.b16 %v1543
    %v1654 = vunpack.c.h.b16 %v1543
    %v1655 = vunpack.c.l.b16 %v1544
    %v1656 = vunpack.c.l.b16 %v1545
    %v1657 = vunpack.c.h.b16 %v1545
    %v1658 = vunpack.c.l.b16 %v1546
    %v1659 = vunpack.c.l.b16 %v1547
    %v1660 = vunpack.c.h.b16 %v1547
    %v1661 = vunpack.c.l.b16 %v1548
    %v1662 = vunpack.c.l.b16 %v1549
    %v1663 = vunpack.c.h.b16 %v1549
    %v1664 = vunpack.c.l.b16 %v1550
    %v1665 = vunpack.c.l.b16 %v1551
    %v1666 = vunpack.c.h.b16 %v1551
    %v1667 = vunpack.c.l.b16 %v1552
    %v1668 = vunpack.c.l.b16 %v1553
    %v1669 = vunpack.c.h.b16 %v1553
    %v1670 = vunpack.c.l.b16 %v1554
    %v1671 = vunpack.c.l.b16 %v1555
    %v1672 = vunpack.c.h.b16 %v1555
    %v1673 = vunpack.c.l.b16 %v1556
    %v1674 = vunpack.c.l.b16 %v1557
    %v1675 = vunpack.c.h.b16 %v1557
    %v1676 = vunpack.c.l.b16 %v1558
    %v1677 = vunpack.c.l.b16 %v1559
    %v1678 = vunpack.c.h.b16 %v1559
    %v1679 = vunpack.c.l.b16 %v1560
    %v1680 = vunpack.c.l.b16 %v1561
    %v1681 = vunpack.c.h.b16 %v1561
    %v1682 = vunpack.c.l.b16 %v1562
    %v1683 = vunpack.c.l.b16 %v1563
    %v1684 = vunpack.c.h.b16 %v1563
    %v1685 = vunpack.c.l.b16 %v1564
    %v1686 = vpack.c.b16 %v1641, %v1638
    %v1687 = vpack.c.b16 %v1642, %v1639
    %v1688 = vpack.c.b16 %v1643, %v1640
    %v1689 = vpack.c.b16 %v1647, %v1644
    %v1690 = vpack.c.b16 %v1648, %v1645
    %v1691 = vpack.c.b16 %v1649, %v1646
    %v1692 = vpack.c.b16 %v1653, %v1650
    %v1693 = vpack.c.b16 %v1654, %v1651
    %v1694 = vpack.c.b16 %v1655, %v1652
    %v1695 = vpack.c.b16 %v1659, %v1656
    %v1696 = vpack.c.b16 %v1660, %v1657
    %v1697 = vpack.c.b16 %v1661, %v1658
    %v1698 = vpack.c.b16 %v1665, %v1662
    %v1699 = vpack.c.b16 %v1666, %v1663
    %v1700 = vpack.c.b16 %v1667, %v1664
    %v1701 = vpack.c.b16 %v1671, %v1668
    %v1702 = vpack.c.b16 %v1672, %v1669
    %v1703 = vpack.c.b16 %v1673, %v1670
    %v1704 = vpack.c.b16 %v1677, %v1674
    %v1705 = vpack.c.b16 %v1678, %v1675
    %v1706 = vpack.c.b16 %v1679, %v1676
    %v1707 = vpack.c.b16 %v1683, %v1680
    %v1708 = vpack.c.b16 %v1684, %v1681
    %v1709 = vpack.c.b16 %v1685, %v1682
    %1734 = vmatprep.subr.bf16.mxu0 %v1708
    %1735 = vmatpush1.bf16.msra.mxu0 %v1707
    %1736 = vmatprep.subr.bf16.mxu0 %v1705
    %1737 = vmatpush1.bf16.msra.mxu0 %v1704
    %1738 = vmatprep.subr.bf16.mxu0 %v1702
    %1739 = vmatpush1.bf16.msra.mxu0 %v1701
    %1740 = vmatprep.subr.bf16.mxu0 %v1699
    %1741 = vmatpush1.bf16.msra.mxu0 %v1698
    %1742 = vmatprep.subr.bf16.mxu0 %v1696
    %1743 = vmatpush1.bf16.msra.mxu0 %v1695
    %1744 = vmatprep.subr.bf16.mxu0 %v1693
    %1745 = vmatpush1.bf16.msra.mxu0 %v1692
    %1746 = vmatprep.subr.bf16.mxu0 %v1690
    %1747 = vmatpush1.bf16.msra.mxu0 %v1689
    %1748 = vmatprep.subr.bf16.mxu0 %v1687
    %1749 = vmatpush1.bf16.msra.mxu0 %v1686
    %1750 = vmatprep.subr.bf16.mxu0 0
    %1751 = vmatpush2.bf16.msra.mxu0 0
    %1752 = vmatprep.subr.bf16.mxu0 0
    %1753 = vmatpush2.bf16.msra.mxu0 0
    %1754 = vmatprep.subr.bf16.mxu0 0
    %1755 = vmatpush2.bf16.msra.mxu0 0
    %1756 = vmatprep.subr.bf16.mxu0 0
    %1757 = vmatpush2.bf16.msra.mxu0 0
    %1758 = vmatprep.subr.bf16.mxu0 0
    %1759 = vmatpush2.bf16.msra.mxu0 0
    %1760 = vmatprep.subr.bf16.mxu0 0
    %1761 = vmatpush2.bf16.msra.mxu0 0
    %1762 = vmatprep.subr.bf16.mxu0 0
    %1763 = vmatpush2.bf16.msra.mxu0 0
    %1764 = vmatprep.subr.bf16.mxu0 0
    %1765 = vmatpush2.bf16.msra.mxu0 0
    %1766 = vmatprep.mubr.bf16.mxu0 0
    %1767 = vmatmul.mubr.bf16.gmra.mxu0 %v1598
    %v1768 = vpop.f32.mrf.mxu0
    %v1769 = vadd.f32 %v1570, %v1768
    %v1770 = vpop.f32.mrf.mxu0
    %v1771 = vadd.f32 %v1574, %v1770
    %v1772 = vpop.f32.mrf.mxu0
    %v1773 = vadd.f32 %v1570, %v1772
    %v1774 = vpop.f32.mrf.mxu0
    %v1775 = vadd.f32 %v1574, %v1774
    %1776 = vmatprep.mubr.bf16.mxu0 0
    %1777 = vmatmul.mubr.bf16.gmra.mxu0 %v1599
    %v1778 = vpop.f32.mrf.mxu0
    %v1779 = vadd.f32 %v1570, %v1778
    %v1780 = vpop.f32.mrf.mxu0
    %v1781 = vadd.f32 %v1574, %v1780
    %v1782 = vpop.f32.mrf.mxu0
    %v1783 = vadd.f32 %v1570, %v1782
    %v1784 = vpop.f32.mrf.mxu0
    %v1785 = vadd.f32 %v1574, %v1784
    %1786 = vmatprep.mubr.bf16.mxu0 0
    %1787 = vmatmul.mubr.bf16.gmra.mxu0 %v1600
    %v1788 = vpop.f32.mrf.mxu0
    %v1789 = vadd.f32 %v1570, %v1788
    %v1790 = vpop.f32.mrf.mxu0
    %v1791 = vadd.f32 %v1574, %v1790
    %v1792 = vpop.f32.mrf.mxu0
    %v1793 = vadd.f32 %v1570, %v1792
    %v1794 = vpop.f32.mrf.mxu0
    %v1795 = vadd.f32 %v1574, %v1794
    %1796 = vmatprep.mubr.bf16.mxu0 0
    %1797 = vmatmul.mubr.bf16.gmra.mxu0 %v1601
    %v1798 = vpop.f32.mrf.mxu0
    %v1799 = vadd.f32 %v1570, %v1798
    %v1800 = vpop.f32.mrf.mxu0
    %v1801 = vadd.f32 %v1574, %v1800
    %v1802 = vpop.f32.mrf.mxu0
    %v1803 = vadd.f32 %v1570, %v1802
    %v1804 = vpop.f32.mrf.mxu0
    %v1805 = vadd.f32 %v1574, %v1804
    %1806 = vdwg.mxu0
    %1807 = vmatprep.subr.bf16.mxu0 0
    %1808 = vmatpush1.bf16.msra.mxu0 %v1709
    %1809 = vmatprep.subr.bf16.mxu0 0
    %1810 = vmatpush1.bf16.msra.mxu0 %v1706
    %1811 = vmatprep.subr.bf16.mxu0 0
    %1812 = vmatpush1.bf16.msra.mxu0 %v1703
    %1813 = vmatprep.subr.bf16.mxu0 0
    %1814 = vmatpush1.bf16.msra.mxu0 %v1700
    %1815 = vmatprep.subr.bf16.mxu0 0
    %1816 = vmatpush1.bf16.msra.mxu0 %v1697
    %1817 = vmatprep.subr.bf16.mxu0 0
    %1818 = vmatpush1.bf16.msra.mxu0 %v1694
    %1819 = vmatprep.subr.bf16.mxu0 0
    %1820 = vmatpush1.bf16.msra.mxu0 %v1691
    %1821 = vmatprep.subr.bf16.mxu0 0
    %1822 = vmatpush1.bf16.msra.mxu0 %v1688
    %1823 = vmatprep.subr.bf16.mxu0 0
    %1824 = vmatpush2.bf16.msra.mxu0 0
    %1825 = vmatprep.subr.bf16.mxu0 0
    %1826 = vmatpush2.bf16.msra.mxu0 0
    %1827 = vmatprep.subr.bf16.mxu0 0
    %1828 = vmatpush2.bf16.msra.mxu0 0
    %1829 = vmatprep.subr.bf16.mxu0 0
    %1830 = vmatpush2.bf16.msra.mxu0 0
    %1831 = vmatprep.subr.bf16.mxu0 0
    %1832 = vmatpush2.bf16.msra.mxu0 0
    %1833 = vmatprep.subr.bf16.mxu0 0
    %1834 = vmatpush2.bf16.msra.mxu0 0
    %1835 = vmatprep.subr.bf16.mxu0 0
    %1836 = vmatpush2.bf16.msra.mxu0 0
    %1837 = vmatprep.subr.bf16.mxu0 0
    %1838 = vmatpush2.bf16.msra.mxu0 0
    %1839 = vmatprep.mubr.bf16.mxu0 0
    %1840 = vmatmul.mubr.bf16.gmra.mxu0 %v1598
    %v1841 = vpop.f32.mrf.mxu0
    %v1842 = vadd.f32 %v1578, %v1841
    %v1843 = vpop.f32.mrf.mxu0
    %v1844 = vpop.f32.mrf.mxu0
    %v1845 = vadd.f32 %v1578, %v1844
    %v1846 = vpop.f32.mrf.mxu0
    %1847 = vmatprep.mubr.bf16.mxu0 0
    %1848 = vmatmul.mubr.bf16.gmra.mxu0 %v1599
    %v1849 = vpop.f32.mrf.mxu0
    %v1850 = vadd.f32 %v1578, %v1849
    %v1851 = vpop.f32.mrf.mxu0
    %v1852 = vpop.f32.mrf.mxu0
    %v1853 = vadd.f32 %v1578, %v1852
    %v1854 = vpop.f32.mrf.mxu0
    %1855 = vmatprep.mubr.bf16.mxu0 0
    %1856 = vmatmul.mubr.bf16.gmra.mxu0 %v1600
    %v1857 = vpop.f32.mrf.mxu0
    %v1858 = vadd.f32 %v1578, %v1857
    %v1859 = vpop.f32.mrf.mxu0
    %v1860 = vpop.f32.mrf.mxu0
    %v1861 = vadd.f32 %v1578, %v1860
    %v1862 = vpop.f32.mrf.mxu0
    %1863 = vmatprep.mubr.bf16.mxu0 0
    %1864 = vmatmul.mubr.bf16.gmra.mxu0 %v1601
    %v1865 = vpop.f32.mrf.mxu0
    %v1866 = vadd.f32 %v1578, %v1865
    %v1867 = vpop.f32.mrf.mxu0
    %v1868 = vpop.f32.mrf.mxu0
    %v1869 = vadd.f32 %v1578, %v1868
    %v1870 = vpop.f32.mrf.mxu0
    %1871 = vdwg.mxu0
    %v1872 = vpack.c.bf16 %v1773, %v1769
    %v1873 = vpack.c.bf16 %v1775, %v1771
    %v1874 = vpack.c.bf16 %v1845, %v1842
    %v1875 = vpack.c.bf16 %v1783, %v1779
    %v1876 = vpack.c.bf16 %v1785, %v1781
    %v1877 = vpack.c.bf16 %v1853, %v1850
    %v1878 = vpack.c.bf16 %v1793, %v1789
    %v1879 = vpack.c.bf16 %v1795, %v1791
    %v1880 = vpack.c.bf16 %v1861, %v1858
    %v1881 = vpack.c.bf16 %v1803, %v1799
    %v1882 = vpack.c.bf16 %v1805, %v1801
    %v1883 = vpack.c.bf16 %v1869, %v1866
    %v1896 = vunpack.c.l.b16 %v1872
    %v1897 = vunpack.c.l.b16 %v1873
    %v1898 = vunpack.c.l.b16 %v1874
    %v1899 = vunpack.c.h.b16 %v1872
    %v1900 = vunpack.c.h.b16 %v1873
    %v1901 = vunpack.c.h.b16 %v1874
    %v1902 = vunpack.c.l.b16 %v1875
    %v1903 = vunpack.c.l.b16 %v1876
    %v1904 = vunpack.c.l.b16 %v1877
    %v1905 = vunpack.c.h.b16 %v1875
    %v1906 = vunpack.c.h.b16 %v1876
    %v1907 = vunpack.c.h.b16 %v1877
    %v1908 = vunpack.c.l.b16 %v1878
    %v1909 = vunpack.c.l.b16 %v1879
    %v1910 = vunpack.c.l.b16 %v1880
    %v1911 = vunpack.c.h.b16 %v1878
    %v1912 = vunpack.c.h.b16 %v1879
    %v1913 = vunpack.c.h.b16 %v1880
    %v1914 = vunpack.c.l.b16 %v1881
    %v1915 = vunpack.c.l.b16 %v1882
    %v1916 = vunpack.c.l.b16 %v1883
    %v1917 = vunpack.c.h.b16 %v1881
    %v1918 = vunpack.c.h.b16 %v1882
    %v1919 = vunpack.c.h.b16 %v1883
    %v1920 = vpack.c.b16 %v1897, %v1896
    %v1921 = vpack.c.b16 %v1898, %v1898
    %v1922 = vpack.c.b16 %v1900, %v1899
    %v1923 = vpack.c.b16 %v1901, %v1901
    %v1924 = vpack.c.b16 %v1903, %v1902
    %v1925 = vpack.c.b16 %v1904, %v1904
    %v1926 = vpack.c.b16 %v1906, %v1905
    %v1927 = vpack.c.b16 %v1907, %v1907
    %v1928 = vpack.c.b16 %v1909, %v1908
    %v1929 = vpack.c.b16 %v1910, %v1910
    %v1930 = vpack.c.b16 %v1912, %v1911
    %v1931 = vpack.c.b16 %v1913, %v1913
    %v1932 = vpack.c.b16 %v1915, %v1914
    %v1933 = vpack.c.b16 %v1916, %v1916
    %v1934 = vpack.c.b16 %v1918, %v1917
    %v1935 = vpack.c.b16 %v1919, %v1919
    %1952 = vst [vmem:[#allocation3] sm:$0xff] %v1920
    %1953 = vst [vmem:[#allocation3 + $0x8] sm:$0xf] %v1921
    %1954 = vst [vmem:[#allocation3 + $0xc] sm:$0xff] %v1922
    %1955 = vst [vmem:[#allocation3 + $0x14] sm:$0xf] %v1923
    %1956 = vst [vmem:[#allocation3 + $0x18] sm:$0xff] %v1924
    %1957 = vst [vmem:[#allocation3 + $0x20] sm:$0xf] %v1925
    %1958 = vst [vmem:[#allocation3 + $0x24] sm:$0xff] %v1926
    %1959 = vst [vmem:[#allocation3 + $0x2c] sm:$0xf] %v1927
    %1960 = vst [vmem:[#allocation3 + $0x30] sm:$0xff] %v1928
    %1961 = vst [vmem:[#allocation3 + $0x38] sm:$0xf] %v1929
    %1962 = vst [vmem:[#allocation3 + $0x3c] sm:$0xff] %v1930
    %1963 = vst [vmem:[#allocation3 + $0x44] sm:$0xf] %v1931
    %1964 = vst [vmem:[#allocation3 + $0x48] sm:$0xff] %v1932
    %1965 = vst [vmem:[#allocation3 + $0x50] sm:$0xf] %v1933
    %1966 = vst [vmem:[#allocation3 + $0x54] sm:$0xff] %v1934
    %1967 = vst [vmem:[#allocation3 + $0x5c] sm:$0xf] %v1935
    %v1968 = vld [vmem:[#allocation3] sm:$0xff]
    %v1969 = vld [vmem:[#allocation3 + $0x8] sm:$0xf]
    %v1970 = vunpack.c.l.bf16 %v1968
    %v1971 = vunpack.c.h.bf16 %v1968
    %v1972 = vunpack.c.l.bf16 %v1969
    %v1973 = vld [vmem:[#allocation9] sm:$0xff]
    %v1974 = vld [vmem:[#allocation9 + $0x8] sm:$0xf]
    %v1975 = vld [vmem:[#allocation9 + $0xc] sm:$0xff]
    %v1976 = vld [vmem:[#allocation9 + $0x14] sm:$0xf]
    %v1977 = vld [vmem:[#allocation9 + $0x18] sm:$0xff]
    %v1978 = vld [vmem:[#allocation9 + $0x20] sm:$0xf]
    %v1979 = vld [vmem:[#allocation9 + $0x24] sm:$0xff]
    %v1980 = vld [vmem:[#allocation9 + $0x2c] sm:$0xf]
    %v1981 = vld [vmem:[#allocation9 + $0x30] sm:$0xff]
    %v1982 = vld [vmem:[#allocation9 + $0x38] sm:$0xf]
    %v1983 = vld [vmem:[#allocation9 + $0x3c] sm:$0xff]
    %v1984 = vld [vmem:[#allocation9 + $0x44] sm:$0xf]
    %v1985 = vld [vmem:[#allocation9 + $0x48] sm:$0xff]
    %v1986 = vld [vmem:[#allocation9 + $0x50] sm:$0xf]
    %v1987 = vld [vmem:[#allocation9 + $0x54] sm:$0xff]
    %v1988 = vld [vmem:[#allocation9 + $0x5c] sm:$0xf]
    %v1989 = vld [vmem:[#allocation9 + $0x60] sm:$0xff]
    %v1990 = vld [vmem:[#allocation9 + $0x68] sm:$0xf]
    %v1991 = vld [vmem:[#allocation9 + $0x6c] sm:$0xff]
    %v1992 = vld [vmem:[#allocation9 + $0x74] sm:$0xf]
    %v1993 = vld [vmem:[#allocation9 + $0x78] sm:$0xff]
    %v1994 = vld [vmem:[#allocation9 + $0x80] sm:$0xf]
    %v1995 = vld [vmem:[#allocation9 + $0x84] sm:$0xff]
    %v1996 = vld [vmem:[#allocation9 + $0x8c] sm:$0xf]
    %v1997 = vld [vmem:[#allocation9 + $0x90] sm:$0xff]
    %v1998 = vld [vmem:[#allocation9 + $0x98] sm:$0xf]
    %v1999 = vld [vmem:[#allocation9 + $0x9c] sm:$0xff]
    %v2000 = vld [vmem:[#allocation9 + $0xa4] sm:$0xf]
    %v2001 = vld [vmem:[#allocation9 + $0xa8] sm:$0xff]
    %v2002 = vld [vmem:[#allocation9 + $0xb0] sm:$0xf]
    %v2003 = vld [vmem:[#allocation9 + $0xb4] sm:$0xff]
    %v2004 = vld [vmem:[#allocation9 + $0xbc] sm:$0xf]
    %v2005 = vld [vmem:[%s5] sm:$0x7]
    %v2007 = vlaneseq
    %v2008 = vshrl.u32 %v2007, 7
    %v2009 = vsub.s32 0, %v2008
    %v2010 = vrot.slane %v2005, %v2009
    %v2011 = vlaneseq
    %v2012 = vshrl.u32 %v2011, 7
    %v2013 = vsub.s32 1, %v2012
    %v2014 = vrot.slane %v2005, %v2013
    %v2015 = vlaneseq
    %v2016 = vshrl.u32 %v2015, 7
    %v2017 = vsub.s32 2, %v2016
    %v2018 = vrot.slane %v2005, %v2017
    %v2054 = vunpack.c.l.b16 %v1973
    %v2055 = vunpack.c.h.b16 %v1973
    %v2056 = vunpack.c.l.b16 %v1974
    %v2057 = vunpack.c.l.b16 %v1975
    %v2058 = vunpack.c.h.b16 %v1975
    %v2059 = vunpack.c.l.b16 %v1976
    %v2060 = vunpack.c.l.b16 %v1977
    %v2061 = vunpack.c.h.b16 %v1977
    %v2062 = vunpack.c.l.b16 %v1978
    %v2063 = vunpack.c.l.b16 %v1979
    %v2064 = vunpack.c.h.b16 %v1979
    %v2065 = vunpack.c.l.b16 %v1980
    %v2066 = vunpack.c.l.b16 %v1981
    %v2067 = vunpack.c.h.b16 %v1981
    %v2068 = vunpack.c.l.b16 %v1982
    %v2069 = vunpack.c.l.b16 %v1983
    %v2070 = vunpack.c.h.b16 %v1983
    %v2071 = vunpack.c.l.b16 %v1984
    %v2072 = vunpack.c.l.b16 %v1985
    %v2073 = vunpack.c.h.b16 %v1985
    %v2074 = vunpack.c.l.b16 %v1986
    %v2075 = vunpack.c.l.b16 %v1987
    %v2076 = vunpack.c.h.b16 %v1987
    %v2077 = vunpack.c.l.b16 %v1988
    %v2078 = vunpack.c.l.b16 %v1989
    %v2079 = vunpack.c.h.b16 %v1989
    %v2080 = vunpack.c.l.b16 %v1990
    %v2081 = vunpack.c.l.b16 %v1991
    %v2082 = vunpack.c.h.b16 %v1991
    %v2083 = vunpack.c.l.b16 %v1992
    %v2084 = vunpack.c.l.b16 %v1993
    %v2085 = vunpack.c.h.b16 %v1993
    %v2086 = vunpack.c.l.b16 %v1994
    %v2087 = vunpack.c.l.b16 %v1995
    %v2088 = vunpack.c.h.b16 %v1995
    %v2089 = vunpack.c.l.b16 %v1996
    %v2090 = vunpack.c.l.b16 %v1997
    %v2091 = vunpack.c.h.b16 %v1997
    %v2092 = vunpack.c.l.b16 %v1998
    %v2093 = vunpack.c.l.b16 %v1999
    %v2094 = vunpack.c.h.b16 %v1999
    %v2095 = vunpack.c.l.b16 %v2000
    %v2096 = vunpack.c.l.b16 %v2001
    %v2097 = vunpack.c.h.b16 %v2001
    %v2098 = vunpack.c.l.b16 %v2002
    %v2099 = vunpack.c.l.b16 %v2003
    %v2100 = vunpack.c.h.b16 %v2003
    %v2101 = vunpack.c.l.b16 %v2004
    %v2102 = vpack.c.b16 %v2057, %v2054
    %v2103 = vpack.c.b16 %v2058, %v2055
    %v2104 = vpack.c.b16 %v2059, %v2056
    %v2105 = vpack.c.b16 %v2063, %v2060
    %v2106 = vpack.c.b16 %v2064, %v2061
    %v2107 = vpack.c.b16 %v2065, %v2062
    %v2108 = vpack.c.b16 %v2069, %v2066
    %v2109 = vpack.c.b16 %v2070, %v2067
    %v2110 = vpack.c.b16 %v2071, %v2068
    %v2111 = vpack.c.b16 %v2075, %v2072
    %v2112 = vpack.c.b16 %v2076, %v2073
    %v2113 = vpack.c.b16 %v2077, %v2074
    %v2114 = vpack.c.b16 %v2081, %v2078
    %v2115 = vpack.c.b16 %v2082, %v2079
    %v2116 = vpack.c.b16 %v2083, %v2080
    %v2117 = vpack.c.b16 %v2087, %v2084
    %v2118 = vpack.c.b16 %v2088, %v2085
    %v2119 = vpack.c.b16 %v2089, %v2086
    %v2120 = vpack.c.b16 %v2093, %v2090
    %v2121 = vpack.c.b16 %v2094, %v2091
    %v2122 = vpack.c.b16 %v2095, %v2092
    %v2123 = vpack.c.b16 %v2099, %v2096
    %v2124 = vpack.c.b16 %v2100, %v2097
    %v2125 = vpack.c.b16 %v2101, %v2098
    %2150 = vmatprep.subr.bf16.mxu0 %v2124
    %2151 = vmatpush1.bf16.msra.mxu0 %v2123
    %2152 = vmatprep.subr.bf16.mxu0 %v2121
    %2153 = vmatpush1.bf16.msra.mxu0 %v2120
    %2154 = vmatprep.subr.bf16.mxu0 %v2118
    %2155 = vmatpush1.bf16.msra.mxu0 %v2117
    %2156 = vmatprep.subr.bf16.mxu0 %v2115
    %2157 = vmatpush1.bf16.msra.mxu0 %v2114
    %2158 = vmatprep.subr.bf16.mxu0 %v2112
    %2159 = vmatpush1.bf16.msra.mxu0 %v2111
    %2160 = vmatprep.subr.bf16.mxu0 %v2109
    %2161 = vmatpush1.bf16.msra.mxu0 %v2108
    %2162 = vmatprep.subr.bf16.mxu0 %v2106
    %2163 = vmatpush1.bf16.msra.mxu0 %v2105
    %2164 = vmatprep.subr.bf16.mxu0 %v2103
    %2165 = vmatpush1.bf16.msra.mxu0 %v2102
    %2166 = vmatprep.subr.bf16.mxu0 0
    %2167 = vmatpush2.bf16.msra.mxu0 0
    %2168 = vmatprep.subr.bf16.mxu0 0
    %2169 = vmatpush2.bf16.msra.mxu0 0
    %2170 = vmatprep.subr.bf16.mxu0 0
    %2171 = vmatpush2.bf16.msra.mxu0 0
    %2172 = vmatprep.subr.bf16.mxu0 0
    %2173 = vmatpush2.bf16.msra.mxu0 0
    %2174 = vmatprep.subr.bf16.mxu0 0
    %2175 = vmatpush2.bf16.msra.mxu0 0
    %2176 = vmatprep.subr.bf16.mxu0 0
    %2177 = vmatpush2.bf16.msra.mxu0 0
    %2178 = vmatprep.subr.bf16.mxu0 0
    %2179 = vmatpush2.bf16.msra.mxu0 0
    %2180 = vmatprep.subr.bf16.mxu0 0
    %2181 = vmatpush2.bf16.msra.mxu0 0
    %2182 = vmatprep.mubr.bf16.mxu0 0
    %2183 = vmatmul.mubr.bf16.gmra.mxu0 0
    %v2184 = vpop.f32.mrf.mxu0
    %v2185 = vadd.f32 %v2010, %v2184
    %v2186 = vpop.f32.mrf.mxu0
    %v2187 = vadd.f32 %v2014, %v2186
    %v2188 = vpop.f32.mrf.mxu0
    %v2189 = vpop.f32.mrf.mxu0
    %2190 = vdwg.mxu0
    %2191 = vmatprep.subr.bf16.mxu0 0
    %2192 = vmatpush1.bf16.msra.mxu0 %v2125
    %2193 = vmatprep.subr.bf16.mxu0 0
    %2194 = vmatpush1.bf16.msra.mxu0 %v2122
    %2195 = vmatprep.subr.bf16.mxu0 0
    %2196 = vmatpush1.bf16.msra.mxu0 %v2119
    %2197 = vmatprep.subr.bf16.mxu0 0
    %2198 = vmatpush1.bf16.msra.mxu0 %v2116
    %2199 = vmatprep.subr.bf16.mxu0 0
    %2200 = vmatpush1.bf16.msra.mxu0 %v2113
    %2201 = vmatprep.subr.bf16.mxu0 0
    %2202 = vmatpush1.bf16.msra.mxu0 %v2110
    %2203 = vmatprep.subr.bf16.mxu0 0
    %2204 = vmatpush1.bf16.msra.mxu0 %v2107
    %2205 = vmatprep.subr.bf16.mxu0 0
    %2206 = vmatpush1.bf16.msra.mxu0 %v2104
    %2207 = vmatprep.subr.bf16.mxu0 0
    %2208 = vmatpush2.bf16.msra.mxu0 0
    %2209 = vmatprep.subr.bf16.mxu0 0
    %2210 = vmatpush2.bf16.msra.mxu0 0
    %2211 = vmatprep.subr.bf16.mxu0 0
    %2212 = vmatpush2.bf16.msra.mxu0 0
    %2213 = vmatprep.subr.bf16.mxu0 0
    %2214 = vmatpush2.bf16.msra.mxu0 0
    %2215 = vmatprep.subr.bf16.mxu0 0
    %2216 = vmatpush2.bf16.msra.mxu0 0
    %2217 = vmatprep.subr.bf16.mxu0 0
    %2218 = vmatpush2.bf16.msra.mxu0 0
    %2219 = vmatprep.subr.bf16.mxu0 0
    %2220 = vmatpush2.bf16.msra.mxu0 0
    %2221 = vmatprep.subr.bf16.mxu0 0
    %2222 = vmatpush2.bf16.msra.mxu0 0
    %2223 = vmatprep.mubr.bf16.mxu0 0
    %2224 = vmatmul.mubr.bf16.gmra.mxu0 0
    %v2225 = vpop.f32.mrf.mxu0
    %v2226 = vadd.f32 %v2018, %v2225
    %v2227 = vpop.f32.mrf.mxu0
    %v2228 = vpop.f32.mrf.mxu0
    %v2229 = vpop.f32.mrf.mxu0
    %2230 = vdwg.mxu0
    %v2231 = vadd.f32 %v1970, %v2185
    %v2232 = vxor.u32 %v2231, 2147483648
    %v2233 = vmul.f32 %v2232, 1.442695
    %v2234 = vpow.pop %v2233
    %v2235 = vadd.f32 %v2234, 1.0
    %v2236 = vrcp.pop %v2235
    %v2237 = vmul.f32 1.0, %v2236
    %v2238 = vadd.f32 %v1971, %v2187
    %v2239 = vxor.u32 %v2238, 2147483648
    %v2240 = vmul.f32 %v2239, 1.442695
    %v2241 = vpow.pop %v2240
    %v2242 = vadd.f32 %v2241, 1.0
    %v2243 = vrcp.pop %v2242
    %v2244 = vmul.f32 1.0, %v2243
    %v2245 = vmul.f32 %v2237, %v2226
    %v2246 = vadd.f32 %v1972, %v2245
    %v2247 = vtanh.pop %v2246
    %v2248 = vsub.f32 0.0, %v2247
    %v2249 = vmul.f32 %v2244, %v2248
    %v2250 = vadd.f32 %v2247, %v2249
    %s2251 = scalar_lea.vmem [#allocation3], 12
    %v2252 = vld [vmem:[%s2251] sm:$0xff]
    %v2253 = vld [vmem:[%s2251 + $0x8] sm:$0xf]
    %v2254 = vunpack.c.l.bf16 %v2252
    %v2255 = vunpack.c.h.bf16 %v2252
    %v2256 = vunpack.c.l.bf16 %v2253
    %v2257 = vpack.c.bf16 %v2250, %v2250
    %2258 = vmatprep.subr.bf16.mxu0 %v2124
    %2259 = vmatpush1.bf16.msra.mxu0 %v2123
    %2260 = vmatprep.subr.bf16.mxu0 %v2121
    %2261 = vmatpush1.bf16.msra.mxu0 %v2120
    %2262 = vmatprep.subr.bf16.mxu0 %v2118
    %2263 = vmatpush1.bf16.msra.mxu0 %v2117
    %2264 = vmatprep.subr.bf16.mxu0 %v2115
    %2265 = vmatpush1.bf16.msra.mxu0 %v2114
    %2266 = vmatprep.subr.bf16.mxu0 %v2112
    %2267 = vmatpush1.bf16.msra.mxu0 %v2111
    %2268 = vmatprep.subr.bf16.mxu0 %v2109
    %2269 = vmatpush1.bf16.msra.mxu0 %v2108
    %2270 = vmatprep.subr.bf16.mxu0 %v2106
    %2271 = vmatpush1.bf16.msra.mxu0 %v2105
    %2272 = vmatprep.subr.bf16.mxu0 %v2103
    %2273 = vmatpush1.bf16.msra.mxu0 %v2102
    %2274 = vmatprep.subr.bf16.mxu0 0
    %2275 = vmatpush2.bf16.msra.mxu0 0
    %2276 = vmatprep.subr.bf16.mxu0 0
    %2277 = vmatpush2.bf16.msra.mxu0 0
    %2278 = vmatprep.subr.bf16.mxu0 0
    %2279 = vmatpush2.bf16.msra.mxu0 0
    %2280 = vmatprep.subr.bf16.mxu0 0
    %2281 = vmatpush2.bf16.msra.mxu0 0
    %2282 = vmatprep.subr.bf16.mxu0 0
    %2283 = vmatpush2.bf16.msra.mxu0 0
    %2284 = vmatprep.subr.bf16.mxu0 0
    %2285 = vmatpush2.bf16.msra.mxu0 0
    %2286 = vmatprep.subr.bf16.mxu0 0
    %2287 = vmatpush2.bf16.msra.mxu0 0
    %2288 = vmatprep.subr.bf16.mxu0 0
    %2289 = vmatpush2.bf16.msra.mxu0 0
    %2290 = vmatprep.mubr.bf16.mxu0 0
    %2291 = vmatmul.mubr.bf16.gmra.mxu0 %v2257
    %v2292 = vpop.f32.mrf.mxu0
    %v2293 = vadd.f32 %v2010, %v2292
    %v2294 = vpop.f32.mrf.mxu0
    %v2295 = vadd.f32 %v2014, %v2294
    %v2296 = vpop.f32.mrf.mxu0
    %v2297 = vpop.f32.mrf.mxu0
    %2298 = vdwg.mxu0
    %2299 = vmatprep.subr.bf16.mxu0 0
    %2300 = vmatpush1.bf16.msra.mxu0 %v2125
    %2301 = vmatprep.subr.bf16.mxu0 0
    %2302 = vmatpush1.bf16.msra.mxu0 %v2122
    %2303 = vmatprep.subr.bf16.mxu0 0
    %2304 = vmatpush1.bf16.msra.mxu0 %v2119
    %2305 = vmatprep.subr.bf16.mxu0 0
    %2306 = vmatpush1.bf16.msra.mxu0 %v2116
    %2307 = vmatprep.subr.bf16.mxu0 0
    %2308 = vmatpush1.bf16.msra.mxu0 %v2113
    %2309 = vmatprep.subr.bf16.mxu0 0
    %2310 = vmatpush1.bf16.msra.mxu0 %v2110
    %2311 = vmatprep.subr.bf16.mxu0 0
    %2312 = vmatpush1.bf16.msra.mxu0 %v2107
    %2313 = vmatprep.subr.bf16.mxu0 0
    %2314 = vmatpush1.bf16.msra.mxu0 %v2104
    %2315 = vmatprep.subr.bf16.mxu0 0
    %2316 = vmatpush2.bf16.msra.mxu0 0
    %2317 = vmatprep.subr.bf16.mxu0 0
    %2318 = vmatpush2.bf16.msra.mxu0 0
    %2319 = vmatprep.subr.bf16.mxu0 0
    %2320 = vmatpush2.bf16.msra.mxu0 0
    %2321 = vmatprep.subr.bf16.mxu0 0
    %2322 = vmatpush2.bf16.msra.mxu0 0
    %2323 = vmatprep.subr.bf16.mxu0 0
    %2324 = vmatpush2.bf16.msra.mxu0 0
    %2325 = vmatprep.subr.bf16.mxu0 0
    %2326 = vmatpush2.bf16.msra.mxu0 0
    %2327 = vmatprep.subr.bf16.mxu0 0
    %2328 = vmatpush2.bf16.msra.mxu0 0
    %2329 = vmatprep.subr.bf16.mxu0 0
    %2330 = vmatpush2.bf16.msra.mxu0 0
    %2331 = vmatprep.mubr.bf16.mxu0 0
    %2332 = vmatmul.mubr.bf16.gmra.mxu0 %v2257
    %v2333 = vpop.f32.mrf.mxu0
    %v2334 = vadd.f32 %v2018, %v2333
    %v2335 = vpop.f32.mrf.mxu0
    %v2336 = vpop.f32.mrf.mxu0
    %v2337 = vpop.f32.mrf.mxu0
    %2338 = vdwg.mxu0
    %v2339 = vadd.f32 %v2254, %v2293
    %v2340 = vxor.u32 %v2339, 2147483648
    %v2341 = vmul.f32 %v2340, 1.442695
    %v2342 = vpow.pop %v2341
    %v2343 = vadd.f32 %v2342, 1.0
    %v2344 = vrcp.pop %v2343
    %v2345 = vmul.f32 1.0, %v2344
    %v2346 = vadd.f32 %v2255, %v2295
    %v2347 = vxor.u32 %v2346, 2147483648
    %v2348 = vmul.f32 %v2347, 1.442695
    %v2349 = vpow.pop %v2348
    %v2350 = vadd.f32 %v2349, 1.0
    %v2351 = vrcp.pop %v2350
    %v2352 = vmul.f32 1.0, %v2351
    %v2353 = vmul.f32 %v2345, %v2334
    %v2354 = vadd.f32 %v2256, %v2353
    %v2355 = vtanh.pop %v2354
    %v2356 = vsub.f32 %v2250, %v2355
    %v2357 = vmul.f32 %v2352, %v2356
    %v2358 = vadd.f32 %v2355, %v2357
    %s2359 = scalar_lea.vmem [#allocation3], 24
    %v2360 = vld [vmem:[%s2359] sm:$0xff]
    %v2361 = vld [vmem:[%s2359 + $0x8] sm:$0xf]
    %v2362 = vunpack.c.l.bf16 %v2360
    %v2363 = vunpack.c.h.bf16 %v2360
    %v2364 = vunpack.c.l.bf16 %v2361
    %v2365 = vpack.c.bf16 %v2358, %v2358
    %2366 = vmatprep.subr.bf16.mxu0 %v2124
    %2367 = vmatpush1.bf16.msra.mxu0 %v2123
    %2368 = vmatprep.subr.bf16.mxu0 %v2121
    %2369 = vmatpush1.bf16.msra.mxu0 %v2120
    %2370 = vmatprep.subr.bf16.mxu0 %v2118
    %2371 = vmatpush1.bf16.msra.mxu0 %v2117
    %2372 = vmatprep.subr.bf16.mxu0 %v2115
    %2373 = vmatpush1.bf16.msra.mxu0 %v2114
    %2374 = vmatprep.subr.bf16.mxu0 %v2112
    %2375 = vmatpush1.bf16.msra.mxu0 %v2111
    %2376 = vmatprep.subr.bf16.mxu0 %v2109
    %2377 = vmatpush1.bf16.msra.mxu0 %v2108
    %2378 = vmatprep.subr.bf16.mxu0 %v2106
    %2379 = vmatpush1.bf16.msra.mxu0 %v2105
    %2380 = vmatprep.subr.bf16.mxu0 %v2103
    %2381 = vmatpush1.bf16.msra.mxu0 %v2102
    %2382 = vmatprep.subr.bf16.mxu0 0
    %2383 = vmatpush2.bf16.msra.mxu0 0
    %2384 = vmatprep.subr.bf16.mxu0 0
    %2385 = vmatpush2.bf16.msra.mxu0 0
    %2386 = vmatprep.subr.bf16.mxu0 0
    %2387 = vmatpush2.bf16.msra.mxu0 0
    %2388 = vmatprep.subr.bf16.mxu0 0
    %2389 = vmatpush2.bf16.msra.mxu0 0
    %2390 = vmatprep.subr.bf16.mxu0 0
    %2391 = vmatpush2.bf16.msra.mxu0 0
    %2392 = vmatprep.subr.bf16.mxu0 0
    %2393 = vmatpush2.bf16.msra.mxu0 0
    %2394 = vmatprep.subr.bf16.mxu0 0
    %2395 = vmatpush2.bf16.msra.mxu0 0
    %2396 = vmatprep.subr.bf16.mxu0 0
    %2397 = vmatpush2.bf16.msra.mxu0 0
    %2398 = vmatprep.mubr.bf16.mxu0 0
    %2399 = vmatmul.mubr.bf16.gmra.mxu0 %v2365
    %v2400 = vpop.f32.mrf.mxu0
    %v2401 = vadd.f32 %v2010, %v2400
    %v2402 = vpop.f32.mrf.mxu0
    %v2403 = vadd.f32 %v2014, %v2402
    %v2404 = vpop.f32.mrf.mxu0
    %v2405 = vpop.f32.mrf.mxu0
    %2406 = vdwg.mxu0
    %2407 = vmatprep.subr.bf16.mxu0 0
    %2408 = vmatpush1.bf16.msra.mxu0 %v2125
    %2409 = vmatprep.subr.bf16.mxu0 0
    %2410 = vmatpush1.bf16.msra.mxu0 %v2122
    %2411 = vmatprep.subr.bf16.mxu0 0
    %2412 = vmatpush1.bf16.msra.mxu0 %v2119
    %2413 = vmatprep.subr.bf16.mxu0 0
    %2414 = vmatpush1.bf16.msra.mxu0 %v2116
    %2415 = vmatprep.subr.bf16.mxu0 0
    %2416 = vmatpush1.bf16.msra.mxu0 %v2113
    %2417 = vmatprep.subr.bf16.mxu0 0
    %2418 = vmatpush1.bf16.msra.mxu0 %v2110
    %2419 = vmatprep.subr.bf16.mxu0 0
    %2420 = vmatpush1.bf16.msra.mxu0 %v2107
    %2421 = vmatprep.subr.bf16.mxu0 0
    %2422 = vmatpush1.bf16.msra.mxu0 %v2104
    %2423 = vmatprep.subr.bf16.mxu0 0
    %2424 = vmatpush2.bf16.msra.mxu0 0
    %2425 = vmatprep.subr.bf16.mxu0 0
    %2426 = vmatpush2.bf16.msra.mxu0 0
    %2427 = vmatprep.subr.bf16.mxu0 0
    %2428 = vmatpush2.bf16.msra.mxu0 0
    %2429 = vmatprep.subr.bf16.mxu0 0
    %2430 = vmatpush2.bf16.msra.mxu0 0
    %2431 = vmatprep.subr.bf16.mxu0 0
    %2432 = vmatpush2.bf16.msra.mxu0 0
    %2433 = vmatprep.subr.bf16.mxu0 0
    %2434 = vmatpush2.bf16.msra.mxu0 0
    %2435 = vmatprep.subr.bf16.mxu0 0
    %2436 = vmatpush2.bf16.msra.mxu0 0
    %2437 = vmatprep.subr.bf16.mxu0 0
    %2438 = vmatpush2.bf16.msra.mxu0 0
    %2439 = vmatprep.mubr.bf16.mxu0 0
    %2440 = vmatmul.mubr.bf16.gmra.mxu0 %v2365
    %v2441 = vpop.f32.mrf.mxu0
    %v2442 = vadd.f32 %v2018, %v2441
    %v2443 = vpop.f32.mrf.mxu0
    %v2444 = vpop.f32.mrf.mxu0
    %v2445 = vpop.f32.mrf.mxu0
    %2446 = vdwg.mxu0
    %v2447 = vadd.f32 %v2362, %v2401
    %v2448 = vxor.u32 %v2447, 2147483648
    %v2449 = vmul.f32 %v2448, 1.442695
    %v2450 = vpow.pop %v2449
    %v2451 = vadd.f32 %v2450, 1.0
    %v2452 = vrcp.pop %v2451
    %v2453 = vmul.f32 1.0, %v2452
    %v2454 = vadd.f32 %v2363, %v2403
    %v2455 = vxor.u32 %v2454, 2147483648
    %v2456 = vmul.f32 %v2455, 1.442695
    %v2457 = vpow.pop %v2456
    %v2458 = vadd.f32 %v2457, 1.0
    %v2459 = vrcp.pop %v2458
    %v2460 = vmul.f32 1.0, %v2459
    %v2461 = vmul.f32 %v2453, %v2442
    %v2462 = vadd.f32 %v2364, %v2461
    %v2463 = vtanh.pop %v2462
    %v2464 = vsub.f32 %v2358, %v2463
    %v2465 = vmul.f32 %v2460, %v2464
    %v2466 = vadd.f32 %v2463, %v2465
    %s2467 = scalar_lea.vmem [#allocation3], 36
    %v2468 = vld [vmem:[%s2467] sm:$0xff]
    %v2469 = vld [vmem:[%s2467 + $0x8] sm:$0xf]
    %v2470 = vunpack.c.l.bf16 %v2468
    %v2471 = vunpack.c.h.bf16 %v2468
    %v2472 = vunpack.c.l.bf16 %v2469
    %v2473 = vpack.c.bf16 %v2466, %v2466
    %2474 = vmatprep.subr.bf16.mxu0 %v2124
    %2475 = vmatpush1.bf16.msra.mxu0 %v2123
    %2476 = vmatprep.subr.bf16.mxu0 %v2121
    %2477 = vmatpush1.bf16.msra.mxu0 %v2120
    %2478 = vmatprep.subr.bf16.mxu0 %v2118
    %2479 = vmatpush1.bf16.msra.mxu0 %v2117
    %2480 = vmatprep.subr.bf16.mxu0 %v2115
    %2481 = vmatpush1.bf16.msra.mxu0 %v2114
    %2482 = vmatprep.subr.bf16.mxu0 %v2112
    %2483 = vmatpush1.bf16.msra.mxu0 %v2111
    %2484 = vmatprep.subr.bf16.mxu0 %v2109
    %2485 = vmatpush1.bf16.msra.mxu0 %v2108
    %2486 = vmatprep.subr.bf16.mxu0 %v2106
    %2487 = vmatpush1.bf16.msra.mxu0 %v2105
    %2488 = vmatprep.subr.bf16.mxu0 %v2103
    %2489 = vmatpush1.bf16.msra.mxu0 %v2102
    %2490 = vmatprep.subr.bf16.mxu0 0
    %2491 = vmatpush2.bf16.msra.mxu0 0
    %2492 = vmatprep.subr.bf16.mxu0 0
    %2493 = vmatpush2.bf16.msra.mxu0 0
    %2494 = vmatprep.subr.bf16.mxu0 0
    %2495 = vmatpush2.bf16.msra.mxu0 0
    %2496 = vmatprep.subr.bf16.mxu0 0
    %2497 = vmatpush2.bf16.msra.mxu0 0
    %2498 = vmatprep.subr.bf16.mxu0 0
    %2499 = vmatpush2.bf16.msra.mxu0 0
    %2500 = vmatprep.subr.bf16.mxu0 0
    %2501 = vmatpush2.bf16.msra.mxu0 0
    %2502 = vmatprep.subr.bf16.mxu0 0
    %2503 = vmatpush2.bf16.msra.mxu0 0
    %2504 = vmatprep.subr.bf16.mxu0 0
    %2505 = vmatpush2.bf16.msra.mxu0 0
    %2506 = vmatprep.mubr.bf16.mxu0 0
    %2507 = vmatmul.mubr.bf16.gmra.mxu0 %v2473
    %v2508 = vpop.f32.mrf.mxu0
    %v2509 = vadd.f32 %v2010, %v2508
    %v2510 = vpop.f32.mrf.mxu0
    %v2511 = vadd.f32 %v2014, %v2510
    %v2512 = vpop.f32.mrf.mxu0
    %v2513 = vpop.f32.mrf.mxu0
    %2514 = vdwg.mxu0
    %2515 = vmatprep.subr.bf16.mxu0 0
    %2516 = vmatpush1.bf16.msra.mxu0 %v2125
    %2517 = vmatprep.subr.bf16.mxu0 0
    %2518 = vmatpush1.bf16.msra.mxu0 %v2122
    %2519 = vmatprep.subr.bf16.mxu0 0
    %2520 = vmatpush1.bf16.msra.mxu0 %v2119
    %2521 = vmatprep.subr.bf16.mxu0 0
    %2522 = vmatpush1.bf16.msra.mxu0 %v2116
    %2523 = vmatprep.subr.bf16.mxu0 0
    %2524 = vmatpush1.bf16.msra.mxu0 %v2113
    %2525 = vmatprep.subr.bf16.mxu0 0
    %2526 = vmatpush1.bf16.msra.mxu0 %v2110
    %2527 = vmatprep.subr.bf16.mxu0 0
    %2528 = vmatpush1.bf16.msra.mxu0 %v2107
    %2529 = vmatprep.subr.bf16.mxu0 0
    %2530 = vmatpush1.bf16.msra.mxu0 %v2104
    %2531 = vmatprep.subr.bf16.mxu0 0
    %2532 = vmatpush2.bf16.msra.mxu0 0
    %2533 = vmatprep.subr.bf16.mxu0 0
    %2534 = vmatpush2.bf16.msra.mxu0 0
    %2535 = vmatprep.subr.bf16.mxu0 0
    %2536 = vmatpush2.bf16.msra.mxu0 0
    %2537 = vmatprep.subr.bf16.mxu0 0
    %2538 = vmatpush2.bf16.msra.mxu0 0
    %2539 = vmatprep.subr.bf16.mxu0 0
    %2540 = vmatpush2.bf16.msra.mxu0 0
    %2541 = vmatprep.subr.bf16.mxu0 0
    %2542 = vmatpush2.bf16.msra.mxu0 0
    %2543 = vmatprep.subr.bf16.mxu0 0
    %2544 = vmatpush2.bf16.msra.mxu0 0
    %2545 = vmatprep.subr.bf16.mxu0 0
    %2546 = vmatpush2.bf16.msra.mxu0 0
    %2547 = vmatprep.mubr.bf16.mxu0 0
    %2548 = vmatmul.mubr.bf16.gmra.mxu0 %v2473
    %v2549 = vpop.f32.mrf.mxu0
    %v2550 = vadd.f32 %v2018, %v2549
    %v2551 = vpop.f32.mrf.mxu0
    %v2552 = vpop.f32.mrf.mxu0
    %v2553 = vpop.f32.mrf.mxu0
    %2554 = vdwg.mxu0
    %v2555 = vadd.f32 %v2470, %v2509
    %v2556 = vxor.u32 %v2555, 2147483648
    %v2557 = vmul.f32 %v2556, 1.442695
    %v2558 = vpow.pop %v2557
    %v2559 = vadd.f32 %v2558, 1.0
    %v2560 = vrcp.pop %v2559
    %v2561 = vmul.f32 1.0, %v2560
    %v2562 = vadd.f32 %v2471, %v2511
    %v2563 = vxor.u32 %v2562, 2147483648
    %v2564 = vmul.f32 %v2563, 1.442695
    %v2565 = vpow.pop %v2564
    %v2566 = vadd.f32 %v2565, 1.0
    %v2567 = vrcp.pop %v2566
    %v2568 = vmul.f32 1.0, %v2567
    %v2569 = vmul.f32 %v2561, %v2550
    %v2570 = vadd.f32 %v2472, %v2569
    %v2571 = vtanh.pop %v2570
    %v2572 = vsub.f32 %v2466, %v2571
    %v2573 = vmul.f32 %v2568, %v2572
    %v2574 = vadd.f32 %v2571, %v2573
    %s2575 = scalar_lea.vmem [#allocation3], 48
    %v2576 = vld [vmem:[%s2575] sm:$0xff]
    %v2577 = vld [vmem:[%s2575 + $0x8] sm:$0xf]
    %v2578 = vunpack.c.l.bf16 %v2576
    %v2579 = vunpack.c.h.bf16 %v2576
    %v2580 = vunpack.c.l.bf16 %v2577
    %v2581 = vpack.c.bf16 %v2574, %v2574
    %2582 = vmatprep.subr.bf16.mxu0 %v2124
    %2583 = vmatpush1.bf16.msra.mxu0 %v2123
    %2584 = vmatprep.subr.bf16.mxu0 %v2121
    %2585 = vmatpush1.bf16.msra.mxu0 %v2120
    %2586 = vmatprep.subr.bf16.mxu0 %v2118
    %2587 = vmatpush1.bf16.msra.mxu0 %v2117
    %2588 = vmatprep.subr.bf16.mxu0 %v2115
    %2589 = vmatpush1.bf16.msra.mxu0 %v2114
    %2590 = vmatprep.subr.bf16.mxu0 %v2112
    %2591 = vmatpush1.bf16.msra.mxu0 %v2111
    %2592 = vmatprep.subr.bf16.mxu0 %v2109
    %2593 = vmatpush1.bf16.msra.mxu0 %v2108
    %2594 = vmatprep.subr.bf16.mxu0 %v2106
    %2595 = vmatpush1.bf16.msra.mxu0 %v2105
    %2596 = vmatprep.subr.bf16.mxu0 %v2103
    %2597 = vmatpush1.bf16.msra.mxu0 %v2102
    %2598 = vmatprep.subr.bf16.mxu0 0
    %2599 = vmatpush2.bf16.msra.mxu0 0
    %2600 = vmatprep.subr.bf16.mxu0 0
    %2601 = vmatpush2.bf16.msra.mxu0 0
    %2602 = vmatprep.subr.bf16.mxu0 0
    %2603 = vmatpush2.bf16.msra.mxu0 0
    %2604 = vmatprep.subr.bf16.mxu0 0
    %2605 = vmatpush2.bf16.msra.mxu0 0
    %2606 = vmatprep.subr.bf16.mxu0 0
    %2607 = vmatpush2.bf16.msra.mxu0 0
    %2608 = vmatprep.subr.bf16.mxu0 0
    %2609 = vmatpush2.bf16.msra.mxu0 0
    %2610 = vmatprep.subr.bf16.mxu0 0
    %2611 = vmatpush2.bf16.msra.mxu0 0
    %2612 = vmatprep.subr.bf16.mxu0 0
    %2613 = vmatpush2.bf16.msra.mxu0 0
    %2614 = vmatprep.mubr.bf16.mxu0 0
    %2615 = vmatmul.mubr.bf16.gmra.mxu0 %v2581
    %v2616 = vpop.f32.mrf.mxu0
    %v2617 = vadd.f32 %v2010, %v2616
    %v2618 = vpop.f32.mrf.mxu0
    %v2619 = vadd.f32 %v2014, %v2618
    %v2620 = vpop.f32.mrf.mxu0
    %v2621 = vpop.f32.mrf.mxu0
    %2622 = vdwg.mxu0
    %2623 = vmatprep.subr.bf16.mxu0 0
    %2624 = vmatpush1.bf16.msra.mxu0 %v2125
    %2625 = vmatprep.subr.bf16.mxu0 0
    %2626 = vmatpush1.bf16.msra.mxu0 %v2122
    %2627 = vmatprep.subr.bf16.mxu0 0
    %2628 = vmatpush1.bf16.msra.mxu0 %v2119
    %2629 = vmatprep.subr.bf16.mxu0 0
    %2630 = vmatpush1.bf16.msra.mxu0 %v2116
    %2631 = vmatprep.subr.bf16.mxu0 0
    %2632 = vmatpush1.bf16.msra.mxu0 %v2113
    %2633 = vmatprep.subr.bf16.mxu0 0
    %2634 = vmatpush1.bf16.msra.mxu0 %v2110
    %2635 = vmatprep.subr.bf16.mxu0 0
    %2636 = vmatpush1.bf16.msra.mxu0 %v2107
    %2637 = vmatprep.subr.bf16.mxu0 0
    %2638 = vmatpush1.bf16.msra.mxu0 %v2104
    %2639 = vmatprep.subr.bf16.mxu0 0
    %2640 = vmatpush2.bf16.msra.mxu0 0
    %2641 = vmatprep.subr.bf16.mxu0 0
    %2642 = vmatpush2.bf16.msra.mxu0 0
    %2643 = vmatprep.subr.bf16.mxu0 0
    %2644 = vmatpush2.bf16.msra.mxu0 0
    %2645 = vmatprep.subr.bf16.mxu0 0
    %2646 = vmatpush2.bf16.msra.mxu0 0
    %2647 = vmatprep.subr.bf16.mxu0 0
    %2648 = vmatpush2.bf16.msra.mxu0 0
    %2649 = vmatprep.subr.bf16.mxu0 0
    %2650 = vmatpush2.bf16.msra.mxu0 0
    %2651 = vmatprep.subr.bf16.mxu0 0
    %2652 = vmatpush2.bf16.msra.mxu0 0
    %2653 = vmatprep.subr.bf16.mxu0 0
    %2654 = vmatpush2.bf16.msra.mxu0 0
    %2655 = vmatprep.mubr.bf16.mxu0 0
    %2656 = vmatmul.mubr.bf16.gmra.mxu0 %v2581
    %v2657 = vpop.f32.mrf.mxu0
    %v2658 = vadd.f32 %v2018, %v2657
    %v2659 = vpop.f32.mrf.mxu0
    %v2660 = vpop.f32.mrf.mxu0
    %v2661 = vpop.f32.mrf.mxu0
    %2662 = vdwg.mxu0
    %v2663 = vadd.f32 %v2578, %v2617
    %v2664 = vxor.u32 %v2663, 2147483648
    %v2665 = vmul.f32 %v2664, 1.442695
    %v2666 = vpow.pop %v2665
    %v2667 = vadd.f32 %v2666, 1.0
    %v2668 = vrcp.pop %v2667
    %v2669 = vmul.f32 1.0, %v2668
    %v2670 = vadd.f32 %v2579, %v2619
    %v2671 = vxor.u32 %v2670, 2147483648
    %v2672 = vmul.f32 %v2671, 1.442695
    %v2673 = vpow.pop %v2672
    %v2674 = vadd.f32 %v2673, 1.0
    %v2675 = vrcp.pop %v2674
    %v2676 = vmul.f32 1.0, %v2675
    %v2677 = vmul.f32 %v2669, %v2658
    %v2678 = vadd.f32 %v2580, %v2677
    %v2679 = vtanh.pop %v2678
    %v2680 = vsub.f32 %v2574, %v2679
    %v2681 = vmul.f32 %v2676, %v2680
    %v2682 = vadd.f32 %v2679, %v2681
    %s2683 = scalar_lea.vmem [#allocation3], 60
    %v2684 = vld [vmem:[%s2683] sm:$0xff]
    %v2685 = vld [vmem:[%s2683 + $0x8] sm:$0xf]
    %v2686 = vunpack.c.l.bf16 %v2684
    %v2687 = vunpack.c.h.bf16 %v2684
    %v2688 = vunpack.c.l.bf16 %v2685
    %v2689 = vpack.c.bf16 %v2682, %v2682
    %2690 = vmatprep.subr.bf16.mxu0 %v2124
    %2691 = vmatpush1.bf16.msra.mxu0 %v2123
    %2692 = vmatprep.subr.bf16.mxu0 %v2121
    %2693 = vmatpush1.bf16.msra.mxu0 %v2120
    %2694 = vmatprep.subr.bf16.mxu0 %v2118
    %2695 = vmatpush1.bf16.msra.mxu0 %v2117
    %2696 = vmatprep.subr.bf16.mxu0 %v2115
    %2697 = vmatpush1.bf16.msra.mxu0 %v2114
    %2698 = vmatprep.subr.bf16.mxu0 %v2112
    %2699 = vmatpush1.bf16.msra.mxu0 %v2111
    %2700 = vmatprep.subr.bf16.mxu0 %v2109
    %2701 = vmatpush1.bf16.msra.mxu0 %v2108
    %2702 = vmatprep.subr.bf16.mxu0 %v2106
    %2703 = vmatpush1.bf16.msra.mxu0 %v2105
    %2704 = vmatprep.subr.bf16.mxu0 %v2103
    %2705 = vmatpush1.bf16.msra.mxu0 %v2102
    %2706 = vmatprep.subr.bf16.mxu0 0
    %2707 = vmatpush2.bf16.msra.mxu0 0
    %2708 = vmatprep.subr.bf16.mxu0 0
    %2709 = vmatpush2.bf16.msra.mxu0 0
    %2710 = vmatprep.subr.bf16.mxu0 0
    %2711 = vmatpush2.bf16.msra.mxu0 0
    %2712 = vmatprep.subr.bf16.mxu0 0
    %2713 = vmatpush2.bf16.msra.mxu0 0
    %2714 = vmatprep.subr.bf16.mxu0 0
    %2715 = vmatpush2.bf16.msra.mxu0 0
    %2716 = vmatprep.subr.bf16.mxu0 0
    %2717 = vmatpush2.bf16.msra.mxu0 0
    %2718 = vmatprep.subr.bf16.mxu0 0
    %2719 = vmatpush2.bf16.msra.mxu0 0
    %2720 = vmatprep.subr.bf16.mxu0 0
    %2721 = vmatpush2.bf16.msra.mxu0 0
    %2722 = vmatprep.mubr.bf16.mxu0 0
    %2723 = vmatmul.mubr.bf16.gmra.mxu0 %v2689
    %v2724 = vpop.f32.mrf.mxu0
    %v2725 = vadd.f32 %v2010, %v2724
    %v2726 = vpop.f32.mrf.mxu0
    %v2727 = vadd.f32 %v2014, %v2726
    %v2728 = vpop.f32.mrf.mxu0
    %v2729 = vpop.f32.mrf.mxu0
    %2730 = vdwg.mxu0
    %2731 = vmatprep.subr.bf16.mxu0 0
    %2732 = vmatpush1.bf16.msra.mxu0 %v2125
    %2733 = vmatprep.subr.bf16.mxu0 0
    %2734 = vmatpush1.bf16.msra.mxu0 %v2122
    %2735 = vmatprep.subr.bf16.mxu0 0
    %2736 = vmatpush1.bf16.msra.mxu0 %v2119
    %2737 = vmatprep.subr.bf16.mxu0 0
    %2738 = vmatpush1.bf16.msra.mxu0 %v2116
    %2739 = vmatprep.subr.bf16.mxu0 0
    %2740 = vmatpush1.bf16.msra.mxu0 %v2113
    %2741 = vmatprep.subr.bf16.mxu0 0
    %2742 = vmatpush1.bf16.msra.mxu0 %v2110
    %2743 = vmatprep.subr.bf16.mxu0 0
    %2744 = vmatpush1.bf16.msra.mxu0 %v2107
    %2745 = vmatprep.subr.bf16.mxu0 0
    %2746 = vmatpush1.bf16.msra.mxu0 %v2104
    %2747 = vmatprep.subr.bf16.mxu0 0
    %2748 = vmatpush2.bf16.msra.mxu0 0
    %2749 = vmatprep.subr.bf16.mxu0 0
    %2750 = vmatpush2.bf16.msra.mxu0 0
    %2751 = vmatprep.subr.bf16.mxu0 0
    %2752 = vmatpush2.bf16.msra.mxu0 0
    %2753 = vmatprep.subr.bf16.mxu0 0
    %2754 = vmatpush2.bf16.msra.mxu0 0
    %2755 = vmatprep.subr.bf16.mxu0 0
    %2756 = vmatpush2.bf16.msra.mxu0 0
    %2757 = vmatprep.subr.bf16.mxu0 0
    %2758 = vmatpush2.bf16.msra.mxu0 0
    %2759 = vmatprep.subr.bf16.mxu0 0
    %2760 = vmatpush2.bf16.msra.mxu0 0
    %2761 = vmatprep.subr.bf16.mxu0 0
    %2762 = vmatpush2.bf16.msra.mxu0 0
    %2763 = vmatprep.mubr.bf16.mxu0 0
    %2764 = vmatmul.mubr.bf16.gmra.mxu0 %v2689
    %v2765 = vpop.f32.mrf.mxu0
    %v2766 = vadd.f32 %v2018, %v2765
    %v2767 = vpop.f32.mrf.mxu0
    %v2768 = vpop.f32.mrf.mxu0
    %v2769 = vpop.f32.mrf.mxu0
    %2770 = vdwg.mxu0
    %v2771 = vadd.f32 %v2686, %v2725
    %v2772 = vxor.u32 %v2771, 2147483648
    %v2773 = vmul.f32 %v2772, 1.442695
    %v2774 = vpow.pop %v2773
    %v2775 = vadd.f32 %v2774, 1.0
    %v2776 = vrcp.pop %v2775
    %v2777 = vmul.f32 1.0, %v2776
    %v2778 = vadd.f32 %v2687, %v2727
    %v2779 = vxor.u32 %v2778, 2147483648
    %v2780 = vmul.f32 %v2779, 1.442695
    %v2781 = vpow.pop %v2780
    %v2782 = vadd.f32 %v2781, 1.0
    %v2783 = vrcp.pop %v2782
    %v2784 = vmul.f32 1.0, %v2783
    %v2785 = vmul.f32 %v2777, %v2766
    %v2786 = vadd.f32 %v2688, %v2785
    %v2787 = vtanh.pop %v2786
    %v2788 = vsub.f32 %v2682, %v2787
    %v2789 = vmul.f32 %v2784, %v2788
    %v2790 = vadd.f32 %v2787, %v2789
    %s2791 = scalar_lea.vmem [#allocation3], 72
    %v2792 = vld [vmem:[%s2791] sm:$0xff]
    %v2793 = vld [vmem:[%s2791 + $0x8] sm:$0xf]
    %v2794 = vunpack.c.l.bf16 %v2792
    %v2795 = vunpack.c.h.bf16 %v2792
    %v2796 = vunpack.c.l.bf16 %v2793
    %v2797 = vpack.c.bf16 %v2790, %v2790
    %2798 = vmatprep.subr.bf16.mxu0 %v2124
    %2799 = vmatpush1.bf16.msra.mxu0 %v2123
    %2800 = vmatprep.subr.bf16.mxu0 %v2121
    %2801 = vmatpush1.bf16.msra.mxu0 %v2120
    %2802 = vmatprep.subr.bf16.mxu0 %v2118
    %2803 = vmatpush1.bf16.msra.mxu0 %v2117
    %2804 = vmatprep.subr.bf16.mxu0 %v2115
    %2805 = vmatpush1.bf16.msra.mxu0 %v2114
    %2806 = vmatprep.subr.bf16.mxu0 %v2112
    %2807 = vmatpush1.bf16.msra.mxu0 %v2111
    %2808 = vmatprep.subr.bf16.mxu0 %v2109
    %2809 = vmatpush1.bf16.msra.mxu0 %v2108
    %2810 = vmatprep.subr.bf16.mxu0 %v2106
    %2811 = vmatpush1.bf16.msra.mxu0 %v2105
    %2812 = vmatprep.subr.bf16.mxu0 %v2103
    %2813 = vmatpush1.bf16.msra.mxu0 %v2102
    %2814 = vmatprep.subr.bf16.mxu0 0
    %2815 = vmatpush2.bf16.msra.mxu0 0
    %2816 = vmatprep.subr.bf16.mxu0 0
    %2817 = vmatpush2.bf16.msra.mxu0 0
    %2818 = vmatprep.subr.bf16.mxu0 0
    %2819 = vmatpush2.bf16.msra.mxu0 0
    %2820 = vmatprep.subr.bf16.mxu0 0
    %2821 = vmatpush2.bf16.msra.mxu0 0
    %2822 = vmatprep.subr.bf16.mxu0 0
    %2823 = vmatpush2.bf16.msra.mxu0 0
    %2824 = vmatprep.subr.bf16.mxu0 0
    %2825 = vmatpush2.bf16.msra.mxu0 0
    %2826 = vmatprep.subr.bf16.mxu0 0
    %2827 = vmatpush2.bf16.msra.mxu0 0
    %2828 = vmatprep.subr.bf16.mxu0 0
    %2829 = vmatpush2.bf16.msra.mxu0 0
    %2830 = vmatprep.mubr.bf16.mxu0 0
    %2831 = vmatmul.mubr.bf16.gmra.mxu0 %v2797
    %v2832 = vpop.f32.mrf.mxu0
    %v2833 = vadd.f32 %v2010, %v2832
    %v2834 = vpop.f32.mrf.mxu0
    %v2835 = vadd.f32 %v2014, %v2834
    %v2836 = vpop.f32.mrf.mxu0
    %v2837 = vpop.f32.mrf.mxu0
    %2838 = vdwg.mxu0
    %2839 = vmatprep.subr.bf16.mxu0 0
    %2840 = vmatpush1.bf16.msra.mxu0 %v2125
    %2841 = vmatprep.subr.bf16.mxu0 0
    %2842 = vmatpush1.bf16.msra.mxu0 %v2122
    %2843 = vmatprep.subr.bf16.mxu0 0
    %2844 = vmatpush1.bf16.msra.mxu0 %v2119
    %2845 = vmatprep.subr.bf16.mxu0 0
    %2846 = vmatpush1.bf16.msra.mxu0 %v2116
    %2847 = vmatprep.subr.bf16.mxu0 0
    %2848 = vmatpush1.bf16.msra.mxu0 %v2113
    %2849 = vmatprep.subr.bf16.mxu0 0
    %2850 = vmatpush1.bf16.msra.mxu0 %v2110
    %2851 = vmatprep.subr.bf16.mxu0 0
    %2852 = vmatpush1.bf16.msra.mxu0 %v2107
    %2853 = vmatprep.subr.bf16.mxu0 0
    %2854 = vmatpush1.bf16.msra.mxu0 %v2104
    %2855 = vmatprep.subr.bf16.mxu0 0
    %2856 = vmatpush2.bf16.msra.mxu0 0
    %2857 = vmatprep.subr.bf16.mxu0 0
    %2858 = vmatpush2.bf16.msra.mxu0 0
    %2859 = vmatprep.subr.bf16.mxu0 0
    %2860 = vmatpush2.bf16.msra.mxu0 0
    %2861 = vmatprep.subr.bf16.mxu0 0
    %2862 = vmatpush2.bf16.msra.mxu0 0
    %2863 = vmatprep.subr.bf16.mxu0 0
    %2864 = vmatpush2.bf16.msra.mxu0 0
    %2865 = vmatprep.subr.bf16.mxu0 0
    %2866 = vmatpush2.bf16.msra.mxu0 0
    %2867 = vmatprep.subr.bf16.mxu0 0
    %2868 = vmatpush2.bf16.msra.mxu0 0
    %2869 = vmatprep.subr.bf16.mxu0 0
    %2870 = vmatpush2.bf16.msra.mxu0 0
    %2871 = vmatprep.mubr.bf16.mxu0 0
    %2872 = vmatmul.mubr.bf16.gmra.mxu0 %v2797
    %v2873 = vpop.f32.mrf.mxu0
    %v2874 = vadd.f32 %v2018, %v2873
    %v2875 = vpop.f32.mrf.mxu0
    %v2876 = vpop.f32.mrf.mxu0
    %v2877 = vpop.f32.mrf.mxu0
    %2878 = vdwg.mxu0
    %v2879 = vadd.f32 %v2794, %v2833
    %v2880 = vxor.u32 %v2879, 2147483648
    %v2881 = vmul.f32 %v2880, 1.442695
    %v2882 = vpow.pop %v2881
    %v2883 = vadd.f32 %v2882, 1.0
    %v2884 = vrcp.pop %v2883
    %v2885 = vmul.f32 1.0, %v2884
    %v2886 = vadd.f32 %v2795, %v2835
    %v2887 = vxor.u32 %v2886, 2147483648
    %v2888 = vmul.f32 %v2887, 1.442695
    %v2889 = vpow.pop %v2888
    %v2890 = vadd.f32 %v2889, 1.0
    %v2891 = vrcp.pop %v2890
    %v2892 = vmul.f32 1.0, %v2891
    %v2893 = vmul.f32 %v2885, %v2874
    %v2894 = vadd.f32 %v2796, %v2893
    %v2895 = vtanh.pop %v2894
    %v2896 = vsub.f32 %v2790, %v2895
    %v2897 = vmul.f32 %v2892, %v2896
    %v2898 = vadd.f32 %v2895, %v2897
    %s2899 = scalar_lea.vmem [#allocation3], 84
    %v2900 = vld [vmem:[%s2899] sm:$0xff]
    %v2901 = vld [vmem:[%s2899 + $0x8] sm:$0xf]
    %v2902 = vunpack.c.l.bf16 %v2900
    %v2903 = vunpack.c.h.bf16 %v2900
    %v2904 = vunpack.c.l.bf16 %v2901
    %v2905 = vpack.c.bf16 %v2898, %v2898
    %2906 = vmatprep.subr.bf16.mxu0 %v2124
    %2907 = vmatpush1.bf16.msra.mxu0 %v2123
    %2908 = vmatprep.subr.bf16.mxu0 %v2121
    %2909 = vmatpush1.bf16.msra.mxu0 %v2120
    %2910 = vmatprep.subr.bf16.mxu0 %v2118
    %2911 = vmatpush1.bf16.msra.mxu0 %v2117
    %2912 = vmatprep.subr.bf16.mxu0 %v2115
    %2913 = vmatpush1.bf16.msra.mxu0 %v2114
    %2914 = vmatprep.subr.bf16.mxu0 %v2112
    %2915 = vmatpush1.bf16.msra.mxu0 %v2111
    %2916 = vmatprep.subr.bf16.mxu0 %v2109
    %2917 = vmatpush1.bf16.msra.mxu0 %v2108
    %2918 = vmatprep.subr.bf16.mxu0 %v2106
    %2919 = vmatpush1.bf16.msra.mxu0 %v2105
    %2920 = vmatprep.subr.bf16.mxu0 %v2103
    %2921 = vmatpush1.bf16.msra.mxu0 %v2102
    %2922 = vmatprep.subr.bf16.mxu0 0
    %2923 = vmatpush2.bf16.msra.mxu0 0
    %2924 = vmatprep.subr.bf16.mxu0 0
    %2925 = vmatpush2.bf16.msra.mxu0 0
    %2926 = vmatprep.subr.bf16.mxu0 0
    %2927 = vmatpush2.bf16.msra.mxu0 0
    %2928 = vmatprep.subr.bf16.mxu0 0
    %2929 = vmatpush2.bf16.msra.mxu0 0
    %2930 = vmatprep.subr.bf16.mxu0 0
    %2931 = vmatpush2.bf16.msra.mxu0 0
    %2932 = vmatprep.subr.bf16.mxu0 0
    %2933 = vmatpush2.bf16.msra.mxu0 0
    %2934 = vmatprep.subr.bf16.mxu0 0
    %2935 = vmatpush2.bf16.msra.mxu0 0
    %2936 = vmatprep.subr.bf16.mxu0 0
    %2937 = vmatpush2.bf16.msra.mxu0 0
    %2938 = vmatprep.mubr.bf16.mxu0 0
    %2939 = vmatmul.mubr.bf16.gmra.mxu0 %v2905
    %v2940 = vpop.f32.mrf.mxu0
    %v2941 = vadd.f32 %v2010, %v2940
    %v2942 = vpop.f32.mrf.mxu0
    %v2943 = vadd.f32 %v2014, %v2942
    %v2944 = vpop.f32.mrf.mxu0
    %v2945 = vpop.f32.mrf.mxu0
    %2946 = vdwg.mxu0
    %2947 = vmatprep.subr.bf16.mxu0 0
    %2948 = vmatpush1.bf16.msra.mxu0 %v2125
    %2949 = vmatprep.subr.bf16.mxu0 0
    %2950 = vmatpush1.bf16.msra.mxu0 %v2122
    %2951 = vmatprep.subr.bf16.mxu0 0
    %2952 = vmatpush1.bf16.msra.mxu0 %v2119
    %2953 = vmatprep.subr.bf16.mxu0 0
    %2954 = vmatpush1.bf16.msra.mxu0 %v2116
    %2955 = vmatprep.subr.bf16.mxu0 0
    %2956 = vmatpush1.bf16.msra.mxu0 %v2113
    %2957 = vmatprep.subr.bf16.mxu0 0
    %2958 = vmatpush1.bf16.msra.mxu0 %v2110
    %2959 = vmatprep.subr.bf16.mxu0 0
    %2960 = vmatpush1.bf16.msra.mxu0 %v2107
    %2961 = vmatprep.subr.bf16.mxu0 0
    %2962 = vmatpush1.bf16.msra.mxu0 %v2104
    %2963 = vmatprep.subr.bf16.mxu0 0
    %2964 = vmatpush2.bf16.msra.mxu0 0
    %2965 = vmatprep.subr.bf16.mxu0 0
    %2966 = vmatpush2.bf16.msra.mxu0 0
    %2967 = vmatprep.subr.bf16.mxu0 0
    %2968 = vmatpush2.bf16.msra.mxu0 0
    %2969 = vmatprep.subr.bf16.mxu0 0
    %2970 = vmatpush2.bf16.msra.mxu0 0
    %2971 = vmatprep.subr.bf16.mxu0 0
    %2972 = vmatpush2.bf16.msra.mxu0 0
    %2973 = vmatprep.subr.bf16.mxu0 0
    %2974 = vmatpush2.bf16.msra.mxu0 0
    %2975 = vmatprep.subr.bf16.mxu0 0
    %2976 = vmatpush2.bf16.msra.mxu0 0
    %2977 = vmatprep.subr.bf16.mxu0 0
    %2978 = vmatpush2.bf16.msra.mxu0 0
    %2979 = vmatprep.mubr.bf16.mxu0 0
    %2980 = vmatmul.mubr.bf16.gmra.mxu0 %v2905
    %v2981 = vpop.f32.mrf.mxu0
    %v2982 = vadd.f32 %v2018, %v2981
    %v2983 = vpop.f32.mrf.mxu0
    %v2984 = vpop.f32.mrf.mxu0
    %v2985 = vpop.f32.mrf.mxu0
    %2986 = vdwg.mxu0
    %v2987 = vadd.f32 %v2902, %v2941
    %v2988 = vxor.u32 %v2987, 2147483648
    %v2989 = vmul.f32 %v2988, 1.442695
    %v2990 = vpow.pop %v2989
    %v2991 = vadd.f32 %v2990, 1.0
    %v2992 = vrcp.pop %v2991
    %v2993 = vmul.f32 1.0, %v2992
    %v2994 = vadd.f32 %v2903, %v2943
    %v2995 = vxor.u32 %v2994, 2147483648
    %v2996 = vmul.f32 %v2995, 1.442695
    %v2997 = vpow.pop %v2996
    %v2998 = vadd.f32 %v2997, 1.0
    %v2999 = vrcp.pop %v2998
    %v3000 = vmul.f32 1.0, %v2999
    %v3001 = vmul.f32 %v2993, %v2982
    %v3002 = vadd.f32 %v2904, %v3001
    %v3003 = vtanh.pop %v3002
    %v3004 = vsub.f32 %v2898, %v3003
    %v3005 = vmul.f32 %v3000, %v3004
    %v3006 = vadd.f32 %v3003, %v3005
    %v3007 = vld [vmem:[%s6] sm:$0x1]
    %v3009 = vlaneseq
    %v3010 = vshrl.u32 %v3009, 7
    %v3011 = vsub.s32 0, %v3010
    %v3012 = vrot.slane %v3007, %v3011
    %v3014 = vmul.f32 %v3006, %v3012
    %3015 = vadd.xlane.f32.xlu0 %v3014
    %v3016 = vpop.xlane.xlu0 %3015
    %v3017 = vld [vmem:[#allocation4] sm:$0x1]
    %v3019 = vlaneseq
    %v3020 = vshrl.u32 %v3019, 7
    %v3021 = vsub.s32 0, %v3020
    %v3022 = vrot.slane %v3017, %v3021
    %v3024 = vadd.f32 %v3016, %v3022
    %3026 = vset.pattern.permute.xlu0 0
    %3027 = vperm.xlu0 %3026, %v3024
    %v3028 = vpop.permute.xlu0 %3027
    %3030 = vst [vmem:[%s8] sm:$0xff] %v3028
    // Predicated region
    $region46: #{net_forward.1} parent=1 // pred_check
      _
    $region47: #{net_forward.1} parent=1 // pred_check_branch
      %3032 = sbr.rel (0) target = $region49
    $region48: #{net_forward.1} parent=1 // pred_region
      _
    $region49: #{net_forward.1} parent=1 // pred_fallthru
      _
    // Predicated region
    $region50: #{net_forward.1} parent=1 // pred_check
      _
    $region51: #{net_forward.1} parent=1 // pred_check_branch
      %3034 = sbr.rel (0) target = $region53
    $region52: #{net_forward.1} parent=1 // pred_region
      _
    $region53: #{net_forward.1} parent=1 // pred_fallthru
      _
    %3035 = vsyncpa [#allocation6], 1
    %3036 = vsyncpa [#allocation10], 1
    %3037 = vsyncpa [#allocation7], 1

</llo_original>
